<compile_context>
chip_gen: v6e
topology: v6e:2x2x1
jax: 0.10.0
libtpu: 0.0.40
codegen_flags: <defaults>
</compile_context>

<pallas_src>
import functools

import jax
import jax.numpy as jnp
from jax.experimental import pallas as pl
from jax.experimental.pallas import tpu as pltpu

LANE = 128  # TPU lane width; hidden/gate/head blocks are padded to this.


def _round_up(x, m):
    return (x + m - 1) // m * m


def _sigmoid(x):
    # tanh-form sigmoid: single EUP transcendental instead of exp + divide.
    return 0.5 * jnp.tanh(0.5 * x) + 0.5


def _make_kernel(T, G, Hp, P1, P2):
    """Build the fused LSTM+MDN kernel for static sizes.

    Ref layout (all float32, lane-padded):
      x_ref       (T, Dp)           inputs, lanes [D_in:Dp] zero
      h0/c0_ref   (G, Hp)           initial state, lanes [H:Hp] zero
      w_in0_ref   (Dp, 4*Hp)        layer-0 input weights, gate k at lanes [k*Hp, k*Hp+H)
      w_rec0_ref  (Hp, 4*Hp)        layer-0 recurrent weights
      w_cell_ref  (max(G-1,1), 2*Hp, 4*Hp)  layers>=1: [W_ih ; W_hh] stacked
      b_gate_ref  (G, 4*Hp)         b_ih + b_hh, gate-scattered, zero padding
      w_heads_ref (Hp, P1+2*P2)     [w_pi | w_mu | w_sigma], each head lane-padded
      b_heads_ref (1,  P1+2*P2)     biases; padded pi lanes carry -1e30 (softmax mask)
    Outputs:
      heads_ref   (T, P1+2*P2)      [softmax(pi) | mu | softplus(sigma)]  (lane-dense slab)
      hT_ref/cT_ref (G, Hp)
    Scratch:
      lstm_out_ref (T, Hp)          final-layer h per timestep (head-matmul input)
    """

    def kernel(x_ref, h0_ref, c0_ref,
               w_in0_ref, w_rec0_ref, w_cell_ref, b_gate_ref,
               w_heads_ref, b_heads_ref,
               heads_ref, hT_ref, cT_ref,
               lstm_out_ref):
        # ---- hoisted layer-0 input projection + bias: one (T,Dp)@(Dp,4Hp) matmul ----
        xg0 = (jnp.dot(x_ref[...], w_in0_ref[...],
                       preferred_element_type=jnp.float32)
               + b_gate_ref[0:1, :])                                # (T, 4Hp)

        # per-layer combined biases (layers >= 1), loaded once outside the time loop
        biases = [None] + [b_gate_ref[l:l + 1, :] for l in range(1, G)]  # (1, 4Hp)

        hs = [h0_ref[l:l + 1, :] for l in range(G)]                 # (1, Hp) each
        cs = [c0_ref[l:l + 1, :] for l in range(G)]

        # T (= batch) and G are tiny & static -> fully unrolled so the LLO
        # scheduler sees the whole serial chain.
        # TODO(synk): for large T, switch to lax.fori_loop carrying (G,Hp) state.
        for t in range(T):
            for l in range(G):
                if l == 0:
                    # layer 0: input projection + bias already hoisted ->
                    # one matmul + one add on the serial chain.
                    gates = (xg0[t:t + 1, :]
                             + jnp.dot(hs[0], w_rec0_ref[...],
                                       preferred_element_type=jnp.float32))
                else:
                    # layers > 0: single fused matmul [h_{l-1} | h_l] @ [W_ih ; W_hh]
                    hcat = jnp.concatenate([hs[l - 1], hs[l]], axis=1)   # (1, 2Hp)
                    gates = (jnp.dot(hcat, w_cell_ref[l - 1],
                                     preferred_element_type=jnp.float32)
                             + biases[l])                           # (1, 4Hp)
                # PyTorch gate order i, f, g, o — each in its own 128-lane block,
                # so every slice below is a full, aligned vreg.
                i_g = _sigmoid(gates[:, 0 * Hp:1 * Hp])
                f_g = _sigmoid(gates[:, 1 * Hp:2 * Hp])
                g_g = jnp.tanh(gates[:, 2 * Hp:3 * Hp])
                o_g = _sigmoid(gates[:, 3 * Hp:4 * Hp])
                cs[l] = f_g * cs[l] + i_g * g_g
                hs[l] = o_g * jnp.tanh(cs[l])
            # final-layer output for this timestep -> one row of the head input
            lstm_out_ref[t:t + 1, :] = hs[G - 1]

        # ---- fused MDN heads: ONE lane-dense matmul, three aligned slice stores ----
        heads = (jnp.dot(lstm_out_ref[...], w_heads_ref[...],
                         preferred_element_type=jnp.float32)
                 + b_heads_ref[...])                                # (T, P1+2*P2)

        pi_logits = heads[:, 0:P1]          # padded lanes carry -1e30 bias -> exp()==0
        pi_logits = pi_logits - jnp.max(pi_logits, axis=1, keepdims=True)
        e = jnp.exp(pi_logits)
        heads_ref[:, 0:P1] = e / jnp.sum(e, axis=1, keepdims=True)

        heads_ref[:, P1:P1 + P2] = heads[:, P1:P1 + P2]             # mu (identity)

        z = heads[:, P1 + P2:P1 + 2 * P2]
        heads_ref[:, P1 + P2:P1 + 2 * P2] = (
            jnp.maximum(z, 0.0) + jnp.log1p(jnp.exp(-jnp.abs(z))))  # stable softplus

        # ---- final hidden state: direct row stores (no sublane concat) ----
        for l in range(G):
            hT_ref[l:l + 1, :] = hs[l]
            cT_ref[l:l + 1, :] = cs[l]

    return kernel


def make_params(key, latent_dim, action_dim, hidden_dim, num_gaussians):
    """Raw parameters in PyTorch nn.LSTM / nn.Linear layout."""
    D_in = latent_dim + action_dim
    H, G, L = hidden_dim, num_gaussians, latent_dim
    scale = 1.0 / jnp.sqrt(jnp.float32(H))

    def uni(k, shape):
        return jax.random.uniform(k, shape, jnp.float32, -scale, scale)

    keys = jax.random.split(key, 4 * G + 6)
    ki = iter(range(len(keys)))
    layers = []
    for l in range(G):
        in_l = D_in if l == 0 else H
        layers.append(dict(
            w_ih=uni(keys[next(ki)], (4 * H, in_l)),
            w_hh=uni(keys[next(ki)], (4 * H, H)),
            b_ih=uni(keys[next(ki)], (4 * H,)),
            b_hh=uni(keys[next(ki)], (4 * H,)),
        ))
    return dict(
        layers=layers,
        w_pi=uni(keys[next(ki)], (G, H)), b_pi=uni(keys[next(ki)], (G,)),
        w_mu=uni(keys[next(ki)], (G * L, H)), b_mu=uni(keys[next(ki)], (G * L,)),
        w_sg=uni(keys[next(ki)], (G * L, H)), b_sg=uni(keys[next(ki)], (G * L,)),
    )


def pack_params(raw, latent_dim, action_dim, hidden_dim, num_gaussians):
    """Repack raw PyTorch-layout params into the padded / fused kernel layout."""
    D_in = latent_dim + action_dim
    H, G, L = hidden_dim, num_gaussians, latent_dim
    Hp = _round_up(H, LANE)
    Dp = _round_up(D_in, LANE)
    Gp = 4 * Hp
    P1 = _round_up(G, LANE)
    P2 = _round_up(G * L, LANE)

    def scatter_gates(wT, rows):
        # wT: (rows_in, 4H) -> (rows, 4Hp); gate k occupies lanes [k*Hp, k*Hp+H)
        out = jnp.zeros((rows, Gp), jnp.float32)
        r = wT.shape[0]
        for k in range(4):
            out = out.at[:r, k * Hp:k * Hp + H].set(wT[:, k * H:(k + 1) * H])
        return out

    l0 = raw["layers"][0]
    w_in0 = scatter_gates(l0["w_ih"].T, Dp)       # (Dp, 4Hp)   hoisted input proj
    w_rec0 = scatter_gates(l0["w_hh"].T, Hp)      # (Hp, 4Hp)

    cells = []
    for l in range(1, G):
        ly = raw["layers"][l]
        wc = jnp.zeros((2 * Hp, Gp), jnp.float32)
        wc = wc.at[:Hp, :].set(scatter_gates(ly["w_ih"].T, Hp))
        wc = wc.at[Hp:, :].set(scatter_gates(ly["w_hh"].T, Hp))
        cells.append(wc)
    if not cells:                                  # G == 1: dummy (never read)
        cells.append(jnp.zeros((2 * Hp, Gp), jnp.float32))
    w_cell = jnp.stack(cells)                      # (max(G-1,1), 2Hp, 4Hp)

    b_rows = []
    for l in range(G):
        ly = raw["layers"][l]
        b = (ly["b_ih"] + ly["b_hh"]).reshape(1, 4 * H)
        b_rows.append(scatter_gates(b, 1))
    b_gate = jnp.concatenate(b_rows, axis=0)       # (G, 4Hp)

    w_heads = jnp.zeros((Hp, P1 + 2 * P2), jnp.float32)
    w_heads = w_heads.at[:H, 0:G].set(raw["w_pi"].T)
    w_heads = w_heads.at[:H, P1:P1 + G * L].set(raw["w_mu"].T)
    w_heads = w_heads.at[:H, P1 + P2:P1 + P2 + G * L].set(raw["w_sg"].T)

    b_heads = jnp.zeros((1, P1 + 2 * P2), jnp.float32)
    b_heads = b_heads.at[0, 0:P1].set(-1e30)       # mask padded pi lanes for softmax
    b_heads = b_heads.at[0, 0:G].set(raw["b_pi"])
    b_heads = b_heads.at[0, P1:P1 + G * L].set(raw["b_mu"])
    b_heads = b_heads.at[0, P1 + P2:P1 + P2 + G * L].set(raw["b_sg"])

    return dict(w_in0=w_in0, w_rec0=w_rec0, w_cell=w_cell, b_gate=b_gate,
                w_heads=w_heads, b_heads=b_heads)


@functools.partial(jax.jit,
                   static_argnames=("latent_dim", "hidden_dim", "num_gaussians"))
def lstm_mdn_forward(latent_vector, action, hidden_state, kparams,
                     *, latent_dim, hidden_dim, num_gaussians):
    """Mirrors LSTM_MDN_Model.forward. Returns (pi, mu, sigma, (h, c))."""
    h0, c0 = hidden_state                          # each (G, 1, H)
    G, H, L = num_gaussians, hidden_dim, latent_dim
    Hp = _round_up(H, LANE)
    P1 = _round_up(G, LANE)
    P2 = _round_up(G * L, LANE)

    x = jnp.concatenate([latent_vector, action], axis=-1).astype(jnp.float32)
    T, D_in = x.shape
    Dp = _round_up(D_in, LANE)

    # Layout plumbing only (lane-pad to 128) so every in-kernel op is vreg-aligned.
    x_pad = jnp.zeros((T, Dp), jnp.float32).at[:, :D_in].set(x)
    h0p = jnp.zeros((G, Hp), jnp.float32).at[:, :H].set(h0[:, 0, :])
    c0p = jnp.zeros((G, Hp), jnp.float32).at[:, :H].set(c0[:, 0, :])

    vmem = pl.BlockSpec(memory_space=pltpu.MemorySpace.VMEM)
    out_shapes = (
        jax.ShapeDtypeStruct((T, P1 + 2 * P2), jnp.float32),  # [pi | mu | sigma]
        jax.ShapeDtypeStruct((G, Hp), jnp.float32),           # hT (lane-padded)
        jax.ShapeDtypeStruct((G, Hp), jnp.float32),           # cT (lane-padded)
    )

    heads, hTp, cTp = pl.pallas_call(
        _make_kernel(T, G, Hp, P1, P2),
        out_shape=out_shapes,
        in_specs=[vmem] * 9,
        out_specs=(vmem,) * 3,
        scratch_shapes=[pltpu.VMEM((T, Hp), jnp.float32)],
    )(x_pad, h0p, c0p,
      kparams["w_in0"], kparams["w_rec0"], kparams["w_cell"], kparams["b_gate"],
      kparams["w_heads"], kparams["b_heads"])

    pi = heads[:, :G]
    mu = heads[:, P1:P1 + G * L].reshape(T, G, L)
    sigma = heads[:, P1 + P2:P1 + P2 + G * L].reshape(T, G, L)
    new_hidden = (hTp[:, :H][:, None, :], cTp[:, :H][:, None, :])
    return pi, mu, sigma, new_hidden


def reference_forward(latent_vector, action, hidden_state, raw,
                      latent_dim, num_gaussians, hidden_dim):
    """Pure-JAX reference with identical PyTorch semantics (for validation)."""
    h0, c0 = hidden_state
    G, H = num_gaussians, hidden_dim
    x = jnp.concatenate([latent_vector, action], axis=-1)
    T = x.shape[0]
    hs = [h0[l, 0:1, :] for l in range(G)]
    cs = [c0[l, 0:1, :] for l in range(G)]
    outs = []
    for t in range(T):
        inp = x[t:t + 1, :]
        for l in range(G):
            ly = raw["layers"][l]
            gates = (inp @ ly["w_ih"].T + hs[l] @ ly["w_hh"].T
                     + ly["b_ih"][None, :] + ly["b_hh"][None, :])
            i_g = jax.nn.sigmoid(gates[:, 0:H])
            f_g = jax.nn.sigmoid(gates[:, H:2 * H])
            g_g = jnp.tanh(gates[:, 2 * H:3 * H])
            o_g = jax.nn.sigmoid(gates[:, 3 * H:4 * H])
            cs[l] = f_g * cs[l] + i_g * g_g
            hs[l] = o_g * jnp.tanh(cs[l])
            inp = hs[l]
        outs.append(hs[G - 1])
    lstm_out = jnp.concatenate(outs, axis=0)
    pi = jax.nn.softmax(lstm_out @ raw["w_pi"].T + raw["b_pi"][None, :], axis=1)
    mu = (lstm_out @ raw["w_mu"].T + raw["b_mu"][None, :]).reshape(
        -1, G, latent_dim)
    sigma = jax.nn.softplus(lstm_out @ raw["w_sg"].T + raw["b_sg"][None, :]).reshape(
        -1, G, latent_dim)
    return pi, mu, sigma, (jnp.stack([h[0] for h in hs])[:, None, :],
                           jnp.stack([c[0] for c in cs])[:, None, :])


if __name__ == "__main__":
    latent_dim = 16
    action_dim = 4
    hidden_dim = 32
    num_gaussians = 4   # also the LSTM num_layers, per the original module
    batch = 2           # becomes the LSTM "sequence" length

    key = jax.random.PRNGKey(0)
    k_lat, k_act, k_h, k_c, k_par = jax.random.split(key, 5)

    latent = jax.random.normal(k_lat, (batch, latent_dim), jnp.float32)
    action = jax.random.normal(k_act, (batch, action_dim), jnp.float32)
    h0 = jax.random.normal(k_h, (num_gaussians, 1, hidden_dim), jnp.float32)
    c0 = jax.random.normal(k_c, (num_gaussians, 1, hidden_dim), jnp.float32)

    raw = make_params(k_par, latent_dim, action_dim, hidden_dim, num_gaussians)
    kparams = pack_params(raw, latent_dim, action_dim, hidden_dim, num_gaussians)

    pi, mu, sigma, (hT, cT) = lstm_mdn_forward(
        latent, action, (h0, c0), kparams,
        latent_dim=latent_dim, hidden_dim=hidden_dim,
        num_gaussians=num_gaussians)
    jax.block_until_ready((pi, mu, sigma, hT, cT))

    # validate against a pure-JAX reference
    rpi, rmu, rsg, (rh, rc) = reference_forward(
        latent, action, (h0, c0), raw, latent_dim, num_gaussians, hidden_dim)

    assert pi.shape == (batch, num_gaussians)
    assert mu.shape == (batch, num_gaussians, latent_dim)
    assert sigma.shape == (batch, num_gaussians, latent_dim)
    assert hT.shape == (num_gaussians, 1, hidden_dim)
    assert cT.shape == (num_gaussians, 1, hidden_dim)
    assert bool(jnp.allclose(pi, rpi, atol=1e-4))
    assert bool(jnp.allclose(mu, rmu, atol=1e-4))
    assert bool(jnp.allclose(sigma, rsg, atol=1e-4))
    assert bool(jnp.allclose(hT, rh, atol=1e-4))
    assert bool(jnp.allclose(cT, rc, atol=1e-4))

    print("KERNEL_OK")
</pallas_src>

<mosaic_0001>
module attributes {stable_mosaic.version = 11 : i64} {
  func.func @kernel(%arg0: memref<2x128xf32, #tpu.memory_space<vmem>>, %arg1: memref<4x128xf32, #tpu.memory_space<vmem>>, %arg2: memref<4x128xf32, #tpu.memory_space<vmem>>, %arg3: memref<128x512xf32, #tpu.memory_space<vmem>>, %arg4: memref<128x512xf32, #tpu.memory_space<vmem>>, %arg5: memref<3x256x512xf32, #tpu.memory_space<vmem>>, %arg6: memref<4x512xf32, #tpu.memory_space<vmem>>, %arg7: memref<128x384xf32, #tpu.memory_space<vmem>>, %arg8: memref<1x384xf32, #tpu.memory_space<vmem>>, %arg9: memref<2x384xf32, #tpu.memory_space<vmem>>, %arg10: memref<4x128xf32, #tpu.memory_space<vmem>>, %arg11: memref<4x128xf32, #tpu.memory_space<vmem>>, %arg12: memref<2x128xf32, #tpu.memory_space<vmem>>) attributes {dimension_semantics = [], scalar_prefetch = 0 : i64, scratch_operands = 1 : i64, tpu.core_type = #tpu.core_type<tc>} {
    %c0 = arith.constant 0 : index
    %c0_0 = arith.constant 0 : index
    %0 = vector.load %arg0[%c0, %c0_0] : memref<2x128xf32, #tpu.memory_space<vmem>>, vector<2x128xf32>
    %c0_1 = arith.constant 0 : index
    %c0_2 = arith.constant 0 : index
    %1 = vector.load %arg3[%c0_1, %c0_2] : memref<128x512xf32, #tpu.memory_space<vmem>>, vector<128x512xf32>
    %cst = arith.constant dense<0.000000e+00> : vector<2x512xf32>
    %2 = tpu.matmul %0, %1, %cst {dimension_numbers = #tpu.dot_dimension_numbers<[1], [0], [0], [1], [0, 0, 1, 1], [], []>} : vector<2x128xf32>, vector<128x512xf32>, vector<2x512xf32> -> vector<2x512xf32>
    %c0_3 = arith.constant 0 : index
    %c0_4 = arith.constant 0 : index
    %3 = vector.load %arg6[%c0_3, %c0_4] : memref<4x512xf32, #tpu.memory_space<vmem>>, vector<1x512xf32>
    %4 = vector.broadcast %3 : vector<1x512xf32> to vector<2x512xf32>
    %5 = arith.addf %2, %4 : vector<2x512xf32>
    %c1 = arith.constant 1 : index
    %c0_5 = arith.constant 0 : index
    %6 = vector.load %arg6[%c1, %c0_5] : memref<4x512xf32, #tpu.memory_space<vmem>>, vector<1x512xf32>
    %c2 = arith.constant 2 : index
    %c0_6 = arith.constant 0 : index
    %7 = vector.load %arg6[%c2, %c0_6] : memref<4x512xf32, #tpu.memory_space<vmem>>, vector<1x512xf32>
    %c3 = arith.constant 3 : index
    %c0_7 = arith.constant 0 : index
    %8 = vector.load %arg6[%c3, %c0_7] : memref<4x512xf32, #tpu.memory_space<vmem>>, vector<1x512xf32>
    %c0_8 = arith.constant 0 : index
    %c0_9 = arith.constant 0 : index
    %9 = vector.load %arg1[%c0_8, %c0_9] : memref<4x128xf32, #tpu.memory_space<vmem>>, vector<1x128xf32>
    %c1_10 = arith.constant 1 : index
    %c0_11 = arith.constant 0 : index
    %10 = vector.load %arg1[%c1_10, %c0_11] : memref<4x128xf32, #tpu.memory_space<vmem>>, vector<1x128xf32>
    %c2_12 = arith.constant 2 : index
    %c0_13 = arith.constant 0 : index
    %11 = vector.load %arg1[%c2_12, %c0_13] : memref<4x128xf32, #tpu.memory_space<vmem>>, vector<1x128xf32>
    %c3_14 = arith.constant 3 : index
    %c0_15 = arith.constant 0 : index
    %12 = vector.load %arg1[%c3_14, %c0_15] : memref<4x128xf32, #tpu.memory_space<vmem>>, vector<1x128xf32>
    %c0_16 = arith.constant 0 : index
    %c0_17 = arith.constant 0 : index
    %13 = vector.load %arg2[%c0_16, %c0_17] : memref<4x128xf32, #tpu.memory_space<vmem>>, vector<1x128xf32>
    %c1_18 = arith.constant 1 : index
    %c0_19 = arith.constant 0 : index
    %14 = vector.load %arg2[%c1_18, %c0_19] : memref<4x128xf32, #tpu.memory_space<vmem>>, vector<1x128xf32>
    %c2_20 = arith.constant 2 : index
    %c0_21 = arith.constant 0 : index
    %15 = vector.load %arg2[%c2_20, %c0_21] : memref<4x128xf32, #tpu.memory_space<vmem>>, vector<1x128xf32>
    %c3_22 = arith.constant 3 : index
    %c0_23 = arith.constant 0 : index
    %16 = vector.load %arg2[%c3_22, %c0_23] : memref<4x128xf32, #tpu.memory_space<vmem>>, vector<1x128xf32>
    %17 = vector.extract_strided_slice %5 {offsets = [0, 0], sizes = [1, 512], strides = [1, 1]} : vector<2x512xf32> to vector<1x512xf32>
    %c0_24 = arith.constant 0 : index
    %c0_25 = arith.constant 0 : index
    %18 = vector.load %arg4[%c0_24, %c0_25] : memref<128x512xf32, #tpu.memory_space<vmem>>, vector<128x512xf32>
    %cst_26 = arith.constant dense<0.000000e+00> : vector<1x512xf32>
    %19 = tpu.matmul %9, %18, %cst_26 {dimension_numbers = #tpu.dot_dimension_numbers<[1], [0], [0], [1], [0, 0, 1, 1], [], []>} : vector<1x128xf32>, vector<128x512xf32>, vector<1x512xf32> -> vector<1x512xf32>
    %20 = arith.addf %17, %19 : vector<1x512xf32>
    %21 = vector.extract_strided_slice %20 {offsets = [0, 0], sizes = [1, 128], strides = [1, 1]} : vector<1x512xf32> to vector<1x128xf32>
    %cst_27 = arith.constant 5.000000e-01 : f32
    %22 = vector.broadcast %cst_27 : f32 to vector<1x128xf32>
    %23 = arith.mulf %22, %21 : vector<1x128xf32>
    %24 = math.tanh %23 : vector<1x128xf32>
    %cst_28 = arith.constant 5.000000e-01 : f32
    %25 = vector.broadcast %cst_28 : f32 to vector<1x128xf32>
    %26 = arith.mulf %25, %24 : vector<1x128xf32>
    %cst_29 = arith.constant 5.000000e-01 : f32
    %27 = vector.broadcast %cst_29 : f32 to vector<1x128xf32>
    %28 = arith.addf %26, %27 : vector<1x128xf32>
    %29 = vector.extract_strided_slice %20 {offsets = [0, 128], sizes = [1, 128], strides = [1, 1]} : vector<1x512xf32> to vector<1x128xf32>
    %cst_30 = arith.constant 5.000000e-01 : f32
    %30 = vector.broadcast %cst_30 : f32 to vector<1x128xf32>
    %31 = arith.mulf %30, %29 : vector<1x128xf32>
    %32 = math.tanh %31 : vector<1x128xf32>
    %cst_31 = arith.constant 5.000000e-01 : f32
    %33 = vector.broadcast %cst_31 : f32 to vector<1x128xf32>
    %34 = arith.mulf %33, %32 : vector<1x128xf32>
    %cst_32 = arith.constant 5.000000e-01 : f32
    %35 = vector.broadcast %cst_32 : f32 to vector<1x128xf32>
    %36 = arith.addf %34, %35 : vector<1x128xf32>
    %37 = vector.extract_strided_slice %20 {offsets = [0, 256], sizes = [1, 128], strides = [1, 1]} : vector<1x512xf32> to vector<1x128xf32>
    %38 = math.tanh %37 : vector<1x128xf32>
    %39 = vector.extract_strided_slice %20 {offsets = [0, 384], sizes = [1, 128], strides = [1, 1]} : vector<1x512xf32> to vector<1x128xf32>
    %cst_33 = arith.constant 5.000000e-01 : f32
    %40 = vector.broadcast %cst_33 : f32 to vector<1x128xf32>
    %41 = arith.mulf %40, %39 : vector<1x128xf32>
    %42 = math.tanh %41 : vector<1x128xf32>
    %cst_34 = arith.constant 5.000000e-01 : f32
    %43 = vector.broadcast %cst_34 : f32 to vector<1x128xf32>
    %44 = arith.mulf %43, %42 : vector<1x128xf32>
    %cst_35 = arith.constant 5.000000e-01 : f32
    %45 = vector.broadcast %cst_35 : f32 to vector<1x128xf32>
    %46 = arith.addf %44, %45 : vector<1x128xf32>
    %47 = arith.mulf %36, %13 : vector<1x128xf32>
    %48 = arith.mulf %28, %38 : vector<1x128xf32>
    %49 = arith.addf %47, %48 : vector<1x128xf32>
    %50 = math.tanh %49 : vector<1x128xf32>
    %51 = arith.mulf %46, %50 : vector<1x128xf32>
    %52 = tpu.concatenate %51, %10 in 1 : vector<1x128xf32>, vector<1x128xf32> -> vector<1x256xf32>
    %c0_36 = arith.constant 0 : index
    %c0_37 = arith.constant 0 : index
    %c0_38 = arith.constant 0 : index
    %53 = vector.load %arg5[%c0_36, %c0_37, %c0_38] : memref<3x256x512xf32, #tpu.memory_space<vmem>>, vector<1x256x512xf32>
    %54 = vector.shape_cast %53 : vector<1x256x512xf32> to vector<256x512xf32>
    %cst_39 = arith.constant dense<0.000000e+00> : vector<1x512xf32>
    %55 = tpu.matmul %52, %54, %cst_39 {dimension_numbers = #tpu.dot_dimension_numbers<[1], [0], [0], [1], [0, 0, 1, 1], [], []>} : vector<1x256xf32>, vector<256x512xf32>, vector<1x512xf32> -> vector<1x512xf32>
    %56 = arith.addf %55, %6 : vector<1x512xf32>
    %57 = vector.extract_strided_slice %56 {offsets = [0, 0], sizes = [1, 128], strides = [1, 1]} : vector<1x512xf32> to vector<1x128xf32>
    %cst_40 = arith.constant 5.000000e-01 : f32
    %58 = vector.broadcast %cst_40 : f32 to vector<1x128xf32>
    %59 = arith.mulf %58, %57 : vector<1x128xf32>
    %60 = math.tanh %59 : vector<1x128xf32>
    %cst_41 = arith.constant 5.000000e-01 : f32
    %61 = vector.broadcast %cst_41 : f32 to vector<1x128xf32>
    %62 = arith.mulf %61, %60 : vector<1x128xf32>
    %cst_42 = arith.constant 5.000000e-01 : f32
    %63 = vector.broadcast %cst_42 : f32 to vector<1x128xf32>
    %64 = arith.addf %62, %63 : vector<1x128xf32>
    %65 = vector.extract_strided_slice %56 {offsets = [0, 128], sizes = [1, 128], strides = [1, 1]} : vector<1x512xf32> to vector<1x128xf32>
    %cst_43 = arith.constant 5.000000e-01 : f32
    %66 = vector.broadcast %cst_43 : f32 to vector<1x128xf32>
    %67 = arith.mulf %66, %65 : vector<1x128xf32>
    %68 = math.tanh %67 : vector<1x128xf32>
    %cst_44 = arith.constant 5.000000e-01 : f32
    %69 = vector.broadcast %cst_44 : f32 to vector<1x128xf32>
    %70 = arith.mulf %69, %68 : vector<1x128xf32>
    %cst_45 = arith.constant 5.000000e-01 : f32
    %71 = vector.broadcast %cst_45 : f32 to vector<1x128xf32>
    %72 = arith.addf %70, %71 : vector<1x128xf32>
    %73 = vector.extract_strided_slice %56 {offsets = [0, 256], sizes = [1, 128], strides = [1, 1]} : vector<1x512xf32> to vector<1x128xf32>
    %74 = math.tanh %73 : vector<1x128xf32>
    %75 = vector.extract_strided_slice %56 {offsets = [0, 384], sizes = [1, 128], strides = [1, 1]} : vector<1x512xf32> to vector<1x128xf32>
    %cst_46 = arith.constant 5.000000e-01 : f32
    %76 = vector.broadcast %cst_46 : f32 to vector<1x128xf32>
    %77 = arith.mulf %76, %75 : vector<1x128xf32>
    %78 = math.tanh %77 : vector<1x128xf32>
    %cst_47 = arith.constant 5.000000e-01 : f32
    %79 = vector.broadcast %cst_47 : f32 to vector<1x128xf32>
    %80 = arith.mulf %79, %78 : vector<1x128xf32>
    %cst_48 = arith.constant 5.000000e-01 : f32
    %81 = vector.broadcast %cst_48 : f32 to vector<1x128xf32>
    %82 = arith.addf %80, %81 : vector<1x128xf32>
    %83 = arith.mulf %72, %14 : vector<1x128xf32>
    %84 = arith.mulf %64, %74 : vector<1x128xf32>
    %85 = arith.addf %83, %84 : vector<1x128xf32>
    %86 = math.tanh %85 : vector<1x128xf32>
    %87 = arith.mulf %82, %86 : vector<1x128xf32>
    %88 = tpu.concatenate %87, %11 in 1 : vector<1x128xf32>, vector<1x128xf32> -> vector<1x256xf32>
    %c1_49 = arith.constant 1 : index
    %c0_50 = arith.constant 0 : index
    %c0_51 = arith.constant 0 : index
    %89 = vector.load %arg5[%c1_49, %c0_50, %c0_51] : memref<3x256x512xf32, #tpu.memory_space<vmem>>, vector<1x256x512xf32>
    %90 = vector.shape_cast %89 : vector<1x256x512xf32> to vector<256x512xf32>
    %cst_52 = arith.constant dense<0.000000e+00> : vector<1x512xf32>
    %91 = tpu.matmul %88, %90, %cst_52 {dimension_numbers = #tpu.dot_dimension_numbers<[1], [0], [0], [1], [0, 0, 1, 1], [], []>} : vector<1x256xf32>, vector<256x512xf32>, vector<1x512xf32> -> vector<1x512xf32>
    %92 = arith.addf %91, %7 : vector<1x512xf32>
    %93 = vector.extract_strided_slice %92 {offsets = [0, 0], sizes = [1, 128], strides = [1, 1]} : vector<1x512xf32> to vector<1x128xf32>
    %cst_53 = arith.constant 5.000000e-01 : f32
    %94 = vector.broadcast %cst_53 : f32 to vector<1x128xf32>
    %95 = arith.mulf %94, %93 : vector<1x128xf32>
    %96 = math.tanh %95 : vector<1x128xf32>
    %cst_54 = arith.constant 5.000000e-01 : f32
    %97 = vector.broadcast %cst_54 : f32 to vector<1x128xf32>
    %98 = arith.mulf %97, %96 : vector<1x128xf32>
    %cst_55 = arith.constant 5.000000e-01 : f32
    %99 = vector.broadcast %cst_55 : f32 to vector<1x128xf32>
    %100 = arith.addf %98, %99 : vector<1x128xf32>
    %101 = vector.extract_strided_slice %92 {offsets = [0, 128], sizes = [1, 128], strides = [1, 1]} : vector<1x512xf32> to vector<1x128xf32>
    %cst_56 = arith.constant 5.000000e-01 : f32
    %102 = vector.broadcast %cst_56 : f32 to vector<1x128xf32>
    %103 = arith.mulf %102, %101 : vector<1x128xf32>
    %104 = math.tanh %103 : vector<1x128xf32>
    %cst_57 = arith.constant 5.000000e-01 : f32
    %105 = vector.broadcast %cst_57 : f32 to vector<1x128xf32>
    %106 = arith.mulf %105, %104 : vector<1x128xf32>
    %cst_58 = arith.constant 5.000000e-01 : f32
    %107 = vector.broadcast %cst_58 : f32 to vector<1x128xf32>
    %108 = arith.addf %106, %107 : vector<1x128xf32>
    %109 = vector.extract_strided_slice %92 {offsets = [0, 256], sizes = [1, 128], strides = [1, 1]} : vector<1x512xf32> to vector<1x128xf32>
    %110 = math.tanh %109 : vector<1x128xf32>
    %111 = vector.extract_strided_slice %92 {offsets = [0, 384], sizes = [1, 128], strides = [1, 1]} : vector<1x512xf32> to vector<1x128xf32>
    %cst_59 = arith.constant 5.000000e-01 : f32
    %112 = vector.broadcast %cst_59 : f32 to vector<1x128xf32>
    %113 = arith.mulf %112, %111 : vector<1x128xf32>
    %114 = math.tanh %113 : vector<1x128xf32>
    %cst_60 = arith.constant 5.000000e-01 : f32
    %115 = vector.broadcast %cst_60 : f32 to vector<1x128xf32>
    %116 = arith.mulf %115, %114 : vector<1x128xf32>
    %cst_61 = arith.constant 5.000000e-01 : f32
    %117 = vector.broadcast %cst_61 : f32 to vector<1x128xf32>
    %118 = arith.addf %116, %117 : vector<1x128xf32>
    %119 = arith.mulf %108, %15 : vector<1x128xf32>
    %120 = arith.mulf %100, %110 : vector<1x128xf32>
    %121 = arith.addf %119, %120 : vector<1x128xf32>
    %122 = math.tanh %121 : vector<1x128xf32>
    %123 = arith.mulf %118, %122 : vector<1x128xf32>
    %124 = tpu.concatenate %123, %12 in 1 : vector<1x128xf32>, vector<1x128xf32> -> vector<1x256xf32>
    %c2_62 = arith.constant 2 : index
    %c0_63 = arith.constant 0 : index
    %c0_64 = arith.constant 0 : index
    %125 = vector.load %arg5[%c2_62, %c0_63, %c0_64] : memref<3x256x512xf32, #tpu.memory_space<vmem>>, vector<1x256x512xf32>
    %126 = vector.shape_cast %125 : vector<1x256x512xf32> to vector<256x512xf32>
    %cst_65 = arith.constant dense<0.000000e+00> : vector<1x512xf32>
    %127 = tpu.matmul %124, %126, %cst_65 {dimension_numbers = #tpu.dot_dimension_numbers<[1], [0], [0], [1], [0, 0, 1, 1], [], []>} : vector<1x256xf32>, vector<256x512xf32>, vector<1x512xf32> -> vector<1x512xf32>
    %128 = arith.addf %127, %8 : vector<1x512xf32>
    %129 = vector.extract_strided_slice %128 {offsets = [0, 0], sizes = [1, 128], strides = [1, 1]} : vector<1x512xf32> to vector<1x128xf32>
    %cst_66 = arith.constant 5.000000e-01 : f32
    %130 = vector.broadcast %cst_66 : f32 to vector<1x128xf32>
    %131 = arith.mulf %130, %129 : vector<1x128xf32>
    %132 = math.tanh %131 : vector<1x128xf32>
    %cst_67 = arith.constant 5.000000e-01 : f32
    %133 = vector.broadcast %cst_67 : f32 to vector<1x128xf32>
    %134 = arith.mulf %133, %132 : vector<1x128xf32>
    %cst_68 = arith.constant 5.000000e-01 : f32
    %135 = vector.broadcast %cst_68 : f32 to vector<1x128xf32>
    %136 = arith.addf %134, %135 : vector<1x128xf32>
    %137 = vector.extract_strided_slice %128 {offsets = [0, 128], sizes = [1, 128], strides = [1, 1]} : vector<1x512xf32> to vector<1x128xf32>
    %cst_69 = arith.constant 5.000000e-01 : f32
    %138 = vector.broadcast %cst_69 : f32 to vector<1x128xf32>
    %139 = arith.mulf %138, %137 : vector<1x128xf32>
    %140 = math.tanh %139 : vector<1x128xf32>
    %cst_70 = arith.constant 5.000000e-01 : f32
    %141 = vector.broadcast %cst_70 : f32 to vector<1x128xf32>
    %142 = arith.mulf %141, %140 : vector<1x128xf32>
    %cst_71 = arith.constant 5.000000e-01 : f32
    %143 = vector.broadcast %cst_71 : f32 to vector<1x128xf32>
    %144 = arith.addf %142, %143 : vector<1x128xf32>
    %145 = vector.extract_strided_slice %128 {offsets = [0, 256], sizes = [1, 128], strides = [1, 1]} : vector<1x512xf32> to vector<1x128xf32>
    %146 = math.tanh %145 : vector<1x128xf32>
    %147 = vector.extract_strided_slice %128 {offsets = [0, 384], sizes = [1, 128], strides = [1, 1]} : vector<1x512xf32> to vector<1x128xf32>
    %cst_72 = arith.constant 5.000000e-01 : f32
    %148 = vector.broadcast %cst_72 : f32 to vector<1x128xf32>
    %149 = arith.mulf %148, %147 : vector<1x128xf32>
    %150 = math.tanh %149 : vector<1x128xf32>
    %cst_73 = arith.constant 5.000000e-01 : f32
    %151 = vector.broadcast %cst_73 : f32 to vector<1x128xf32>
    %152 = arith.mulf %151, %150 : vector<1x128xf32>
    %cst_74 = arith.constant 5.000000e-01 : f32
    %153 = vector.broadcast %cst_74 : f32 to vector<1x128xf32>
    %154 = arith.addf %152, %153 : vector<1x128xf32>
    %155 = arith.mulf %144, %16 : vector<1x128xf32>
    %156 = arith.mulf %136, %146 : vector<1x128xf32>
    %157 = arith.addf %155, %156 : vector<1x128xf32>
    %158 = math.tanh %157 : vector<1x128xf32>
    %159 = arith.mulf %154, %158 : vector<1x128xf32>
    %c0_75 = arith.constant 0 : index
    %c0_76 = arith.constant 0 : index
    %160 = vector.load %arg12[%c0_75, %c0_76] : memref<2x128xf32, #tpu.memory_space<vmem>>, vector<1x128xf32>
    tpu.vector_store %arg12[%c0_75, %c0_76], %159 {strides = array<i32>} : memref<2x128xf32, #tpu.memory_space<vmem>>, vector<1x128xf32>,
    %161 = vector.extract_strided_slice %5 {offsets = [1, 0], sizes = [1, 512], strides = [1, 1]} : vector<2x512xf32> to vector<1x512xf32>
    %c0_77 = arith.constant 0 : index
    %c0_78 = arith.constant 0 : index
    %162 = vector.load %arg4[%c0_77, %c0_78] : memref<128x512xf32, #tpu.memory_space<vmem>>, vector<128x512xf32>
    %cst_79 = arith.constant dense<0.000000e+00> : vector<1x512xf32>
    %163 = tpu.matmul %51, %162, %cst_79 {dimension_numbers = #tpu.dot_dimension_numbers<[1], [0], [0], [1], [0, 0, 1, 1], [], []>} : vector<1x128xf32>, vector<128x512xf32>, vector<1x512xf32> -> vector<1x512xf32>
    %164 = arith.addf %161, %163 : vector<1x512xf32>
    %165 = vector.extract_strided_slice %164 {offsets = [0, 0], sizes = [1, 128], strides = [1, 1]} : vector<1x512xf32> to vector<1x128xf32>
    %cst_80 = arith.constant 5.000000e-01 : f32
    %166 = vector.broadcast %cst_80 : f32 to vector<1x128xf32>
    %167 = arith.mulf %166, %165 : vector<1x128xf32>
    %168 = math.tanh %167 : vector<1x128xf32>
    %cst_81 = arith.constant 5.000000e-01 : f32
    %169 = vector.broadcast %cst_81 : f32 to vector<1x128xf32>
    %170 = arith.mulf %169, %168 : vector<1x128xf32>
    %cst_82 = arith.constant 5.000000e-01 : f32
    %171 = vector.broadcast %cst_82 : f32 to vector<1x128xf32>
    %172 = arith.addf %170, %171 : vector<1x128xf32>
    %173 = vector.extract_strided_slice %164 {offsets = [0, 128], sizes = [1, 128], strides = [1, 1]} : vector<1x512xf32> to vector<1x128xf32>
    %cst_83 = arith.constant 5.000000e-01 : f32
    %174 = vector.broadcast %cst_83 : f32 to vector<1x128xf32>
    %175 = arith.mulf %174, %173 : vector<1x128xf32>
    %176 = math.tanh %175 : vector<1x128xf32>
    %cst_84 = arith.constant 5.000000e-01 : f32
    %177 = vector.broadcast %cst_84 : f32 to vector<1x128xf32>
    %178 = arith.mulf %177, %176 : vector<1x128xf32>
    %cst_85 = arith.constant 5.000000e-01 : f32
    %179 = vector.broadcast %cst_85 : f32 to vector<1x128xf32>
    %180 = arith.addf %178, %179 : vector<1x128xf32>
    %181 = vector.extract_strided_slice %164 {offsets = [0, 256], sizes = [1, 128], strides = [1, 1]} : vector<1x512xf32> to vector<1x128xf32>
    %182 = math.tanh %181 : vector<1x128xf32>
    %183 = vector.extract_strided_slice %164 {offsets = [0, 384], sizes = [1, 128], strides = [1, 1]} : vector<1x512xf32> to vector<1x128xf32>
    %cst_86 = arith.constant 5.000000e-01 : f32
    %184 = vector.broadcast %cst_86 : f32 to vector<1x128xf32>
    %185 = arith.mulf %184, %183 : vector<1x128xf32>
    %186 = math.tanh %185 : vector<1x128xf32>
    %cst_87 = arith.constant 5.000000e-01 : f32
    %187 = vector.broadcast %cst_87 : f32 to vector<1x128xf32>
    %188 = arith.mulf %187, %186 : vector<1x128xf32>
    %cst_88 = arith.constant 5.000000e-01 : f32
    %189 = vector.broadcast %cst_88 : f32 to vector<1x128xf32>
    %190 = arith.addf %188, %189 : vector<1x128xf32>
    %191 = arith.mulf %180, %49 : vector<1x128xf32>
    %192 = arith.mulf %172, %182 : vector<1x128xf32>
    %193 = arith.addf %191, %192 : vector<1x128xf32>
    %194 = math.tanh %193 : vector<1x128xf32>
    %195 = arith.mulf %190, %194 : vector<1x128xf32>
    %196 = tpu.concatenate %195, %87 in 1 : vector<1x128xf32>, vector<1x128xf32> -> vector<1x256xf32>
    %c0_89 = arith.constant 0 : index
    %c0_90 = arith.constant 0 : index
    %c0_91 = arith.constant 0 : index
    %197 = vector.load %arg5[%c0_89, %c0_90, %c0_91] : memref<3x256x512xf32, #tpu.memory_space<vmem>>, vector<1x256x512xf32>
    %198 = vector.shape_cast %197 : vector<1x256x512xf32> to vector<256x512xf32>
    %cst_92 = arith.constant dense<0.000000e+00> : vector<1x512xf32>
    %199 = tpu.matmul %196, %198, %cst_92 {dimension_numbers = #tpu.dot_dimension_numbers<[1], [0], [0], [1], [0, 0, 1, 1], [], []>} : vector<1x256xf32>, vector<256x512xf32>, vector<1x512xf32> -> vector<1x512xf32>
    %200 = arith.addf %199, %6 : vector<1x512xf32>
    %201 = vector.extract_strided_slice %200 {offsets = [0, 0], sizes = [1, 128], strides = [1, 1]} : vector<1x512xf32> to vector<1x128xf32>
    %cst_93 = arith.constant 5.000000e-01 : f32
    %202 = vector.broadcast %cst_93 : f32 to vector<1x128xf32>
    %203 = arith.mulf %202, %201 : vector<1x128xf32>
    %204 = math.tanh %203 : vector<1x128xf32>
    %cst_94 = arith.constant 5.000000e-01 : f32
    %205 = vector.broadcast %cst_94 : f32 to vector<1x128xf32>
    %206 = arith.mulf %205, %204 : vector<1x128xf32>
    %cst_95 = arith.constant 5.000000e-01 : f32
    %207 = vector.broadcast %cst_95 : f32 to vector<1x128xf32>
    %208 = arith.addf %206, %207 : vector<1x128xf32>
    %209 = vector.extract_strided_slice %200 {offsets = [0, 128], sizes = [1, 128], strides = [1, 1]} : vector<1x512xf32> to vector<1x128xf32>
    %cst_96 = arith.constant 5.000000e-01 : f32
    %210 = vector.broadcast %cst_96 : f32 to vector<1x128xf32>
    %211 = arith.mulf %210, %209 : vector<1x128xf32>
    %212 = math.tanh %211 : vector<1x128xf32>
    %cst_97 = arith.constant 5.000000e-01 : f32
    %213 = vector.broadcast %cst_97 : f32 to vector<1x128xf32>
    %214 = arith.mulf %213, %212 : vector<1x128xf32>
    %cst_98 = arith.constant 5.000000e-01 : f32
    %215 = vector.broadcast %cst_98 : f32 to vector<1x128xf32>
    %216 = arith.addf %214, %215 : vector<1x128xf32>
    %217 = vector.extract_strided_slice %200 {offsets = [0, 256], sizes = [1, 128], strides = [1, 1]} : vector<1x512xf32> to vector<1x128xf32>
    %218 = math.tanh %217 : vector<1x128xf32>
    %219 = vector.extract_strided_slice %200 {offsets = [0, 384], sizes = [1, 128], strides = [1, 1]} : vector<1x512xf32> to vector<1x128xf32>
    %cst_99 = arith.constant 5.000000e-01 : f32
    %220 = vector.broadcast %cst_99 : f32 to vector<1x128xf32>
    %221 = arith.mulf %220, %219 : vector<1x128xf32>
    %222 = math.tanh %221 : vector<1x128xf32>
    %cst_100 = arith.constant 5.000000e-01 : f32
    %223 = vector.broadcast %cst_100 : f32 to vector<1x128xf32>
    %224 = arith.mulf %223, %222 : vector<1x128xf32>
    %cst_101 = arith.constant 5.000000e-01 : f32
    %225 = vector.broadcast %cst_101 : f32 to vector<1x128xf32>
    %226 = arith.addf %224, %225 : vector<1x128xf32>
    %227 = arith.mulf %216, %85 : vector<1x128xf32>
    %228 = arith.mulf %208, %218 : vector<1x128xf32>
    %229 = arith.addf %227, %228 : vector<1x128xf32>
    %230 = math.tanh %229 : vector<1x128xf32>
    %231 = arith.mulf %226, %230 : vector<1x128xf32>
    %232 = tpu.concatenate %231, %123 in 1 : vector<1x128xf32>, vector<1x128xf32> -> vector<1x256xf32>
    %c1_102 = arith.constant 1 : index
    %c0_103 = arith.constant 0 : index
    %c0_104 = arith.constant 0 : index
    %233 = vector.load %arg5[%c1_102, %c0_103, %c0_104] : memref<3x256x512xf32, #tpu.memory_space<vmem>>, vector<1x256x512xf32>
    %234 = vector.shape_cast %233 : vector<1x256x512xf32> to vector<256x512xf32>
    %cst_105 = arith.constant dense<0.000000e+00> : vector<1x512xf32>
    %235 = tpu.matmul %232, %234, %cst_105 {dimension_numbers = #tpu.dot_dimension_numbers<[1], [0], [0], [1], [0, 0, 1, 1], [], []>} : vector<1x256xf32>, vector<256x512xf32>, vector<1x512xf32> -> vector<1x512xf32>
    %236 = arith.addf %235, %7 : vector<1x512xf32>
    %237 = vector.extract_strided_slice %236 {offsets = [0, 0], sizes = [1, 128], strides = [1, 1]} : vector<1x512xf32> to vector<1x128xf32>
    %cst_106 = arith.constant 5.000000e-01 : f32
    %238 = vector.broadcast %cst_106 : f32 to vector<1x128xf32>
    %239 = arith.mulf %238, %237 : vector<1x128xf32>
    %240 = math.tanh %239 : vector<1x128xf32>
    %cst_107 = arith.constant 5.000000e-01 : f32
    %241 = vector.broadcast %cst_107 : f32 to vector<1x128xf32>
    %242 = arith.mulf %241, %240 : vector<1x128xf32>
    %cst_108 = arith.constant 5.000000e-01 : f32
    %243 = vector.broadcast %cst_108 : f32 to vector<1x128xf32>
    %244 = arith.addf %242, %243 : vector<1x128xf32>
    %245 = vector.extract_strided_slice %236 {offsets = [0, 128], sizes = [1, 128], strides = [1, 1]} : vector<1x512xf32> to vector<1x128xf32>
    %cst_109 = arith.constant 5.000000e-01 : f32
    %246 = vector.broadcast %cst_109 : f32 to vector<1x128xf32>
    %247 = arith.mulf %246, %245 : vector<1x128xf32>
    %248 = math.tanh %247 : vector<1x128xf32>
    %cst_110 = arith.constant 5.000000e-01 : f32
    %249 = vector.broadcast %cst_110 : f32 to vector<1x128xf32>
    %250 = arith.mulf %249, %248 : vector<1x128xf32>
    %cst_111 = arith.constant 5.000000e-01 : f32
    %251 = vector.broadcast %cst_111 : f32 to vector<1x128xf32>
    %252 = arith.addf %250, %251 : vector<1x128xf32>
    %253 = vector.extract_strided_slice %236 {offsets = [0, 256], sizes = [1, 128], strides = [1, 1]} : vector<1x512xf32> to vector<1x128xf32>
    %254 = math.tanh %253 : vector<1x128xf32>
    %255 = vector.extract_strided_slice %236 {offsets = [0, 384], sizes = [1, 128], strides = [1, 1]} : vector<1x512xf32> to vector<1x128xf32>
    %cst_112 = arith.constant 5.000000e-01 : f32
    %256 = vector.broadcast %cst_112 : f32 to vector<1x128xf32>
    %257 = arith.mulf %256, %255 : vector<1x128xf32>
    %258 = math.tanh %257 : vector<1x128xf32>
    %cst_113 = arith.constant 5.000000e-01 : f32
    %259 = vector.broadcast %cst_113 : f32 to vector<1x128xf32>
    %260 = arith.mulf %259, %258 : vector<1x128xf32>
    %cst_114 = arith.constant 5.000000e-01 : f32
    %261 = vector.broadcast %cst_114 : f32 to vector<1x128xf32>
    %262 = arith.addf %260, %261 : vector<1x128xf32>
    %263 = arith.mulf %252, %121 : vector<1x128xf32>
    %264 = arith.mulf %244, %254 : vector<1x128xf32>
    %265 = arith.addf %263, %264 : vector<1x128xf32>
    %266 = math.tanh %265 : vector<1x128xf32>
    %267 = arith.mulf %262, %266 : vector<1x128xf32>
    %268 = tpu.concatenate %267, %159 in 1 : vector<1x128xf32>, vector<1x128xf32> -> vector<1x256xf32>
    %c2_115 = arith.constant 2 : index
    %c0_116 = arith.constant 0 : index
    %c0_117 = arith.constant 0 : index
    %269 = vector.load %arg5[%c2_115, %c0_116, %c0_117] : memref<3x256x512xf32, #tpu.memory_space<vmem>>, vector<1x256x512xf32>
    %270 = vector.shape_cast %269 : vector<1x256x512xf32> to vector<256x512xf32>
    %cst_118 = arith.constant dense<0.000000e+00> : vector<1x512xf32>
    %271 = tpu.matmul %268, %270, %cst_118 {dimension_numbers = #tpu.dot_dimension_numbers<[1], [0], [0], [1], [0, 0, 1, 1], [], []>} : vector<1x256xf32>, vector<256x512xf32>, vector<1x512xf32> -> vector<1x512xf32>
    %272 = arith.addf %271, %8 : vector<1x512xf32>
    %273 = vector.extract_strided_slice %272 {offsets = [0, 0], sizes = [1, 128], strides = [1, 1]} : vector<1x512xf32> to vector<1x128xf32>
    %cst_119 = arith.constant 5.000000e-01 : f32
    %274 = vector.broadcast %cst_119 : f32 to vector<1x128xf32>
    %275 = arith.mulf %274, %273 : vector<1x128xf32>
    %276 = math.tanh %275 : vector<1x128xf32>
    %cst_120 = arith.constant 5.000000e-01 : f32
    %277 = vector.broadcast %cst_120 : f32 to vector<1x128xf32>
    %278 = arith.mulf %277, %276 : vector<1x128xf32>
    %cst_121 = arith.constant 5.000000e-01 : f32
    %279 = vector.broadcast %cst_121 : f32 to vector<1x128xf32>
    %280 = arith.addf %278, %279 : vector<1x128xf32>
    %281 = vector.extract_strided_slice %272 {offsets = [0, 128], sizes = [1, 128], strides = [1, 1]} : vector<1x512xf32> to vector<1x128xf32>
    %cst_122 = arith.constant 5.000000e-01 : f32
    %282 = vector.broadcast %cst_122 : f32 to vector<1x128xf32>
    %283 = arith.mulf %282, %281 : vector<1x128xf32>
    %284 = math.tanh %283 : vector<1x128xf32>
    %cst_123 = arith.constant 5.000000e-01 : f32
    %285 = vector.broadcast %cst_123 : f32 to vector<1x128xf32>
    %286 = arith.mulf %285, %284 : vector<1x128xf32>
    %cst_124 = arith.constant 5.000000e-01 : f32
    %287 = vector.broadcast %cst_124 : f32 to vector<1x128xf32>
    %288 = arith.addf %286, %287 : vector<1x128xf32>
    %289 = vector.extract_strided_slice %272 {offsets = [0, 256], sizes = [1, 128], strides = [1, 1]} : vector<1x512xf32> to vector<1x128xf32>
    %290 = math.tanh %289 : vector<1x128xf32>
    %291 = vector.extract_strided_slice %272 {offsets = [0, 384], sizes = [1, 128], strides = [1, 1]} : vector<1x512xf32> to vector<1x128xf32>
    %cst_125 = arith.constant 5.000000e-01 : f32
    %292 = vector.broadcast %cst_125 : f32 to vector<1x128xf32>
    %293 = arith.mulf %292, %291 : vector<1x128xf32>
    %294 = math.tanh %293 : vector<1x128xf32>
    %cst_126 = arith.constant 5.000000e-01 : f32
    %295 = vector.broadcast %cst_126 : f32 to vector<1x128xf32>
    %296 = arith.mulf %295, %294 : vector<1x128xf32>
    %cst_127 = arith.constant 5.000000e-01 : f32
    %297 = vector.broadcast %cst_127 : f32 to vector<1x128xf32>
    %298 = arith.addf %296, %297 : vector<1x128xf32>
    %299 = arith.mulf %288, %157 : vector<1x128xf32>
    %300 = arith.mulf %280, %290 : vector<1x128xf32>
    %301 = arith.addf %299, %300 : vector<1x128xf32>
    %302 = math.tanh %301 : vector<1x128xf32>
    %303 = arith.mulf %298, %302 : vector<1x128xf32>
    %c1_128 = arith.constant 1 : index
    %c0_129 = arith.constant 0 : index
    %304 = vector.load %arg12[%c1_128, %c0_129] : memref<2x128xf32, #tpu.memory_space<vmem>>, vector<1x128xf32>
    tpu.vector_store %arg12[%c1_128, %c0_129], %303 {strides = array<i32>} : memref<2x128xf32, #tpu.memory_space<vmem>>, vector<1x128xf32>,
    %c0_130 = arith.constant 0 : index
    %c0_131 = arith.constant 0 : index
    %305 = vector.load %arg12[%c0_130, %c0_131] : memref<2x128xf32, #tpu.memory_space<vmem>>, vector<2x128xf32>
    %c0_132 = arith.constant 0 : index
    %c0_133 = arith.constant 0 : index
    %306 = vector.load %arg7[%c0_132, %c0_133] : memref<128x384xf32, #tpu.memory_space<vmem>>, vector<128x384xf32>
    %cst_134 = arith.constant dense<0.000000e+00> : vector<2x384xf32>
    %307 = tpu.matmul %305, %306, %cst_134 {dimension_numbers = #tpu.dot_dimension_numbers<[1], [0], [0], [1], [0, 0, 1, 1], [], []>} : vector<2x128xf32>, vector<128x384xf32>, vector<2x384xf32> -> vector<2x384xf32>
    %c0_135 = arith.constant 0 : index
    %c0_136 = arith.constant 0 : index
    %308 = vector.load %arg8[%c0_135, %c0_136] : memref<1x384xf32, #tpu.memory_space<vmem>>, vector<1x384xf32>
    %309 = vector.broadcast %308 : vector<1x384xf32> to vector<2x384xf32>
    %310 = arith.addf %307, %309 : vector<2x384xf32>
    %311 = vector.extract_strided_slice %310 {offsets = [0, 0], sizes = [2, 128], strides = [1, 1]} : vector<2x384xf32> to vector<2x128xf32>
    %cst_137 = arith.constant dense<0xFF800000> : vector<2xf32>
    %312 = vector.multi_reduction <maximumf>, %311, %cst_137 [1] : vector<2x128xf32> to vector<2xf32>
    %313 = vector.shape_cast %312 : vector<2xf32> to vector<2x1xf32>
    %314 = vector.broadcast %313 : vector<2x1xf32> to vector<2x128xf32>
    %315 = arith.subf %311, %314 : vector<2x128xf32>
    %316 = math.exp %315 : vector<2x128xf32>
    %cst_138 = arith.constant dense<0.000000e+00> : vector<2xf32>
    %317 = vector.multi_reduction <add>, %316, %cst_138 [1] : vector<2x128xf32> to vector<2xf32>
    %318 = vector.shape_cast %317 : vector<2xf32> to vector<2x1xf32>
    %319 = vector.broadcast %318 : vector<2x1xf32> to vector<2x128xf32>
    %320 = arith.divf %316, %319 : vector<2x128xf32>
    %c0_139 = arith.constant 0 : index
    %c0_140 = arith.constant 0 : index
    %321 = vector.load %arg9[%c0_139, %c0_140] : memref<2x384xf32, #tpu.memory_space<vmem>>, vector<2x128xf32>
    tpu.vector_store %arg9[%c0_139, %c0_140], %320 {strides = array<i32>} : memref<2x384xf32, #tpu.memory_space<vmem>>, vector<2x128xf32>,
    %322 = vector.extract_strided_slice %310 {offsets = [0, 128], sizes = [2, 128], strides = [1, 1]} : vector<2x384xf32> to vector<2x128xf32>
    %c0_141 = arith.constant 0 : index
    %c128 = arith.constant 128 : index
    %323 = vector.load %arg9[%c0_141, %c128] : memref<2x384xf32, #tpu.memory_space<vmem>>, vector<2x128xf32>
    tpu.vector_store %arg9[%c0_141, %c128], %322 {strides = array<i32>} : memref<2x384xf32, #tpu.memory_space<vmem>>, vector<2x128xf32>,
    %324 = vector.extract_strided_slice %310 {offsets = [0, 256], sizes = [2, 128], strides = [1, 1]} : vector<2x384xf32> to vector<2x128xf32>
    %cst_142 = arith.constant 0.000000e+00 : f32
    %325 = vector.broadcast %cst_142 : f32 to vector<2x128xf32>
    %326 = arith.maximumf %324, %325 : vector<2x128xf32>
    %327 = math.absf %324 : vector<2x128xf32>
    %cst_143 = arith.constant 0.000000e+00 : f32
    %328 = vector.broadcast %cst_143 : f32 to vector<2x128xf32>
    %329 = arith.subf %328, %327 : vector<2x128xf32>
    %330 = math.exp %329 : vector<2x128xf32>
    %331 = math.log1p %330 : vector<2x128xf32>
    %332 = arith.addf %326, %331 : vector<2x128xf32>
    %c0_144 = arith.constant 0 : index
    %c256 = arith.constant 256 : index
    %333 = vector.load %arg9[%c0_144, %c256] : memref<2x384xf32, #tpu.memory_space<vmem>>, vector<2x128xf32>
    tpu.vector_store %arg9[%c0_144, %c256], %332 {strides = array<i32>} : memref<2x384xf32, #tpu.memory_space<vmem>>, vector<2x128xf32>,
    %c0_145 = arith.constant 0 : index
    %c0_146 = arith.constant 0 : index
    %334 = vector.load %arg10[%c0_145, %c0_146] : memref<4x128xf32, #tpu.memory_space<vmem>>, vector<1x128xf32>
    tpu.vector_store %arg10[%c0_145, %c0_146], %195 {strides = array<i32>} : memref<4x128xf32, #tpu.memory_space<vmem>>, vector<1x128xf32>,
    %c0_147 = arith.constant 0 : index
    %c0_148 = arith.constant 0 : index
    %335 = vector.load %arg11[%c0_147, %c0_148] : memref<4x128xf32, #tpu.memory_space<vmem>>, vector<1x128xf32>
    tpu.vector_store %arg11[%c0_147, %c0_148], %193 {strides = array<i32>} : memref<4x128xf32, #tpu.memory_space<vmem>>, vector<1x128xf32>,
    %c1_149 = arith.constant 1 : index
    %c0_150 = arith.constant 0 : index
    %336 = vector.load %arg10[%c1_149, %c0_150] : memref<4x128xf32, #tpu.memory_space<vmem>>, vector<1x128xf32>
    tpu.vector_store %arg10[%c1_149, %c0_150], %231 {strides = array<i32>} : memref<4x128xf32, #tpu.memory_space<vmem>>, vector<1x128xf32>,
    %c1_151 = arith.constant 1 : index
    %c0_152 = arith.constant 0 : index
    %337 = vector.load %arg11[%c1_151, %c0_152] : memref<4x128xf32, #tpu.memory_space<vmem>>, vector<1x128xf32>
    tpu.vector_store %arg11[%c1_151, %c0_152], %229 {strides = array<i32>} : memref<4x128xf32, #tpu.memory_space<vmem>>, vector<1x128xf32>,
    %c2_153 = arith.constant 2 : index
    %c0_154 = arith.constant 0 : index
    %338 = vector.load %arg10[%c2_153, %c0_154] : memref<4x128xf32, #tpu.memory_space<vmem>>, vector<1x128xf32>
    tpu.vector_store %arg10[%c2_153, %c0_154], %267 {strides = array<i32>} : memref<4x128xf32, #tpu.memory_space<vmem>>, vector<1x128xf32>,
    %c2_155 = arith.constant 2 : index
    %c0_156 = arith.constant 0 : index
    %339 = vector.load %arg11[%c2_155, %c0_156] : memref<4x128xf32, #tpu.memory_space<vmem>>, vector<1x128xf32>
    tpu.vector_store %arg11[%c2_155, %c0_156], %265 {strides = array<i32>} : memref<4x128xf32, #tpu.memory_space<vmem>>, vector<1x128xf32>,
    %c3_157 = arith.constant 3 : index
    %c0_158 = arith.constant 0 : index
    %340 = vector.load %arg10[%c3_157, %c0_158] : memref<4x128xf32, #tpu.memory_space<vmem>>, vector<1x128xf32>
    tpu.vector_store %arg10[%c3_157, %c0_158], %303 {strides = array<i32>} : memref<4x128xf32, #tpu.memory_space<vmem>>, vector<1x128xf32>,
    %c3_159 = arith.constant 3 : index
    %c0_160 = arith.constant 0 : index
    %341 = vector.load %arg11[%c3_159, %c0_160] : memref<4x128xf32, #tpu.memory_space<vmem>>, vector<1x128xf32>
    tpu.vector_store %arg11[%c3_159, %c0_160], %301 {strides = array<i32>} : memref<4x128xf32, #tpu.memory_space<vmem>>, vector<1x128xf32>,
    return
  }
}

</mosaic_0001>

<llo_original>
// kernel: lstm_mdn_forward.1
$region0: #{lstm_mdn_forward.1}
  #allocation0 [shape = 'u32[]', space=smem, size = 0x4, offset = 0x4, fixed_abs, tag = 'smem constant byte address 0x4 - core index']
  #allocation1 [shape = 'u32[144,128]{1,0:T(1,128)}', space=vmem, size = 0x12000, scoped, tag = 'internal scratch']
  #allocation2 [shape = 'f32[2,128]{1,0:T(2,128)}', space=vmem, size = 0x400, scoped, tag = 'scratch operand']
  %s0 = inlined_call_operand.vmem [shape: f32[2,128], index: 0, kind: input, shape index: {}]
  %s1 = inlined_call_operand.vmem [shape: f32[4,128], index: 1, kind: input, shape index: {}]
  %s2 = inlined_call_operand.vmem [shape: f32[4,128], index: 2, kind: input, shape index: {}]
  %s3 = inlined_call_operand.hbm [shape: f32[128,512], index: 3, kind: input, shape index: {}]
  %s4 = inlined_call_operand.hbm [shape: f32[128,512], index: 4, kind: input, shape index: {}]
  %s5 = inlined_call_operand.hbm [shape: f32[3,256,512], index: 5, kind: input, shape index: {}]
  %s6 = inlined_call_operand.hbm [shape: f32[4,512], index: 6, kind: input, shape index: {}]
  %s7 = inlined_call_operand.hbm [shape: f32[128,384], index: 7, kind: input, shape index: {}]
  %s8 = inlined_call_operand.hbm [shape: f32[1,384], index: 8, kind: input, shape index: {}]
  %s9 = inlined_call_operand.vmem [shape: f32[2,384], index: 9, kind: output, shape index: {0}]
  %s10 = inlined_call_operand.hbm [shape: f32[4,128], index: 10, kind: output, shape index: {1}]
  %s11 = inlined_call_operand.hbm [shape: f32[4,128], index: 11, kind: output, shape index: {2}]
  %12 = xla_tuple %s9, %s10, %s11
  %s13 = sld [smem:[#allocation0]]
  $region86: #{lstm_mdn_forward.1} parent=0
    _
  %s15 = ssub.s32 1, %s13
  %s16 = scalar_select 0, %s15, %s13
  $region1: #{lstm_mdn_forward.1} parent=0
    #allocation3 [shape = 'u8[262144]{0}', space=vmem, size = 0x40000, scoped, tag = 'input window, operand 3, single buffered']
    #allocation4 [shape = 's32[1]{0}', space=sflag, size = 0x4, scoped, tag = 'scoped memory for lstm_mdn_forward.1']
    #allocation5 [shape = 's32[1]{0}', space=sflag, size = 0x4, scoped, tag = 'scoped memory for lstm_mdn_forward.1']
    #allocation6 [shape = 'u8[262144]{0}', space=vmem, size = 0x40000, scoped, tag = 'input window, operand 4, single buffered']
    #allocation7 [shape = 's32[1]{0}', space=sflag, size = 0x4, scoped, tag = 'scoped memory for lstm_mdn_forward.1']
    #allocation8 [shape = 'u8[1572864]{0}', space=vmem, size = 0x180000, scoped, tag = 'input window, operand 5, single buffered']
    #allocation9 [shape = 'u8[8192]{0}', space=vmem, size = 0x2000, scoped, tag = 'input window, operand 6, single buffered']
    #allocation10 [shape = 's32[1]{0}', space=sflag, size = 0x4, scoped, tag = 'scoped memory for lstm_mdn_forward.1']
    #allocation11 [shape = 'u8[196608]{0}', space=vmem, size = 0x30000, scoped, tag = 'input window, operand 7, single buffered']
    #allocation12 [shape = 'u8[1536]{0}', space=vmem, size = 0x800, scoped, tag = 'input window, operand 8, single buffered']
    #allocation13 [shape = 's32[1]{0}', space=sflag, size = 0x4, scoped, tag = 'scoped memory for lstm_mdn_forward.1']
    #allocation14 [shape = 'u8[2048]{0}', space=vmem, size = 0x800, scoped, tag = 'output window, operand 1, single buffered']
    #allocation15 [shape = 'u8[2048]{0}', space=vmem, size = 0x800, scoped, tag = 'output window, operand 2, single buffered']
    #allocation16 [shape = 's32[1]{0}', space=sflag, size = 0x4, scoped, tag = 'scoped memory for lstm_mdn_forward.1']
    %17 = vsyncpa [#allocation4], 0
    %18 = vsyncpa [#allocation7], 0
    %19 = vsyncpa [#allocation10], 0
    %20 = vsyncpa [#allocation13], 0
    %21 = vsyncpa [#allocation5], 0
    %22 = vsyncpa [#allocation16], 0
    // Predicated region
    $region2: #{lstm_mdn_forward.1} parent=1 // pred_check
      _
    $region3: #{lstm_mdn_forward.1} parent=1 // pred_check_branch
      %24 = sbr.rel (0) target = $region5
    $region4: #{lstm_mdn_forward.1} parent=1 // pred_region
      _
    $region5: #{lstm_mdn_forward.1} parent=1 // pred_fallthru
      _
    // Predicated region
    $region6: #{lstm_mdn_forward.1} parent=1 // pred_check
      _
    $region7: #{lstm_mdn_forward.1} parent=1 // pred_check_branch
      %26 = sbr.rel (0) target = $region9
    $region8: #{lstm_mdn_forward.1} parent=1 // pred_region
      _
    $region9: #{lstm_mdn_forward.1} parent=1 // pred_fallthru
      _
    // Predicated region
    $region10: #{lstm_mdn_forward.1} parent=1 // pred_check
      _
    $region11: #{lstm_mdn_forward.1} parent=1 // pred_check_branch
      %28 = sbr.rel (0) target = $region13
    $region12: #{lstm_mdn_forward.1} parent=1 // pred_region
      _
    $region13: #{lstm_mdn_forward.1} parent=1 // pred_fallthru
      _
    // Predicated region
    $region14: #{lstm_mdn_forward.1} parent=1 // pred_check
      _
    $region15: #{lstm_mdn_forward.1} parent=1 // pred_check_branch
      %30 = sbr.rel (0) target = $region17
    $region16: #{lstm_mdn_forward.1} parent=1 // pred_region
      %s32 = ssub.s32 8192, 8192
      %33 = vsyncadd [#allocation4], %s32
      %s34 = sshll.u32 [#allocation3], 4
      %s35 = int_to_ptr.vmem [resolvable:$true] %s34
      %40 = dma.hbm_to_vmem [thread:$0]  %s3, 8192, %s35, [#allocation4], 512, 512, 32
    $region17: #{lstm_mdn_forward.1} parent=1 // pred_fallthru
      _
    // Predicated region
    $region18: #{lstm_mdn_forward.1} parent=1 // pred_check
      _
    $region19: #{lstm_mdn_forward.1} parent=1 // pred_check_branch
      %42 = sbr.rel (0) target = $region21
    $region20: #{lstm_mdn_forward.1} parent=1 // pred_region
      %s44 = ssub.s32 8192, 8192
      %45 = vsyncadd [#allocation7], %s44
      %s46 = sshll.u32 [#allocation6], 4
      %s47 = int_to_ptr.vmem [resolvable:$true] %s46
      %52 = dma.hbm_to_vmem [thread:$0]  %s4, 8192, %s47, [#allocation7], 512, 512, 32
    $region21: #{lstm_mdn_forward.1} parent=1 // pred_fallthru
      _
    // Predicated region
    $region22: #{lstm_mdn_forward.1} parent=1 // pred_check
      _
    $region23: #{lstm_mdn_forward.1} parent=1 // pred_check_branch
      %54 = sbr.rel (0) target = $region25
    $region24: #{lstm_mdn_forward.1} parent=1 // pred_region
      %s56 = ssub.s32 49152, 49152
      %57 = vsyncadd [#allocation7], %s56
      %s58 = sshll.u32 [#allocation8], 4
      %s59 = int_to_ptr.vmem [resolvable:$true] %s58
      %64 = dma.hbm_to_vmem [thread:$0]  %s5, 49152, %s59, [#allocation7], 512, 512, 32
    $region25: #{lstm_mdn_forward.1} parent=1 // pred_fallthru
      _
    // Predicated region
    $region26: #{lstm_mdn_forward.1} parent=1 // pred_check
      _
    $region27: #{lstm_mdn_forward.1} parent=1 // pred_check_branch
      %66 = sbr.rel (0) target = $region29
    $region28: #{lstm_mdn_forward.1} parent=1 // pred_region
      %s68 = ssub.s32 256, 256
      %69 = vsyncadd [#allocation10], %s68
      %s71 = sshll.u32 [#allocation9], 4
      %s72 = int_to_ptr.vmem [resolvable:$true] %s71
      %74 = dma.hbm_to_vmem [thread:$0]  %s6, 256, %s72, [#allocation10]
    $region29: #{lstm_mdn_forward.1} parent=1 // pred_fallthru
      _
    // Predicated region
    $region30: #{lstm_mdn_forward.1} parent=1 // pred_check
      _
    $region31: #{lstm_mdn_forward.1} parent=1 // pred_check_branch
      %76 = sbr.rel (0) target = $region33
    $region32: #{lstm_mdn_forward.1} parent=1 // pred_region
      %s78 = ssub.s32 6144, 6144
      %79 = vsyncadd [#allocation10], %s78
      %s80 = sshll.u32 [#allocation11], 4
      %s81 = int_to_ptr.vmem [resolvable:$true] %s80
      %86 = dma.hbm_to_vmem [thread:$0]  %s7, 6144, %s81, [#allocation10], 384, 384, 24
    $region33: #{lstm_mdn_forward.1} parent=1 // pred_fallthru
      _
    // Predicated region
    $region34: #{lstm_mdn_forward.1} parent=1 // pred_check
      _
    $region35: #{lstm_mdn_forward.1} parent=1 // pred_check_branch
      %88 = sbr.rel (0) target = $region37
    $region36: #{lstm_mdn_forward.1} parent=1 // pred_region
      %s90 = ssub.s32 48, 48
      %91 = vsyncadd [#allocation13], %s90
      %s93 = sshll.u32 [#allocation12], 4
      %s94 = int_to_ptr.vmem [resolvable:$true] %s93
      %96 = dma.hbm_to_vmem [thread:$0]  %s8, 48, %s94, [#allocation13]
    $region37: #{lstm_mdn_forward.1} parent=1 // pred_fallthru
      _
    // Predicated region
    $region38: #{lstm_mdn_forward.1} parent=1 // pred_check
      _
    $region39: #{lstm_mdn_forward.1} parent=1 // pred_check_branch
      %98 = sbr.rel (0) target = $region41
    $region40: #{lstm_mdn_forward.1} parent=1 // pred_region
      %99 = dma.done [#allocation4], 8192
    $region41: #{lstm_mdn_forward.1} parent=1 // pred_fallthru
      _
    // Predicated region
    $region42: #{lstm_mdn_forward.1} parent=1 // pred_check
      _
    $region43: #{lstm_mdn_forward.1} parent=1 // pred_check_branch
      %101 = sbr.rel (0) target = $region45
    $region44: #{lstm_mdn_forward.1} parent=1 // pred_region
      %102 = dma.done [#allocation7], 8192
    $region45: #{lstm_mdn_forward.1} parent=1 // pred_fallthru
      _
    // Predicated region
    $region46: #{lstm_mdn_forward.1} parent=1 // pred_check
      _
    $region47: #{lstm_mdn_forward.1} parent=1 // pred_check_branch
      %104 = sbr.rel (0) target = $region49
    $region48: #{lstm_mdn_forward.1} parent=1 // pred_region
      %105 = dma.done [#allocation7], 49152
    $region49: #{lstm_mdn_forward.1} parent=1 // pred_fallthru
      _
    // Predicated region
    $region50: #{lstm_mdn_forward.1} parent=1 // pred_check
      _
    $region51: #{lstm_mdn_forward.1} parent=1 // pred_check_branch
      %107 = sbr.rel (0) target = $region53
    $region52: #{lstm_mdn_forward.1} parent=1 // pred_region
      %108 = dma.done [#allocation10], 256
    $region53: #{lstm_mdn_forward.1} parent=1 // pred_fallthru
      _
    // Predicated region
    $region54: #{lstm_mdn_forward.1} parent=1 // pred_check
      _
    $region55: #{lstm_mdn_forward.1} parent=1 // pred_check_branch
      %110 = sbr.rel (0) target = $region57
    $region56: #{lstm_mdn_forward.1} parent=1 // pred_region
      %111 = dma.done [#allocation10], 6144
    $region57: #{lstm_mdn_forward.1} parent=1 // pred_fallthru
      _
    // Predicated region
    $region58: #{lstm_mdn_forward.1} parent=1 // pred_check
      _
    $region59: #{lstm_mdn_forward.1} parent=1 // pred_check_branch
      %113 = sbr.rel (0) target = $region61
    $region60: #{lstm_mdn_forward.1} parent=1 // pred_region
      %114 = dma.done [#allocation13], 48
    $region61: #{lstm_mdn_forward.1} parent=1 // pred_fallthru
      _
    %v115 = vld [vmem:[%s0] sm:$0x3]
    %v116 = vld [vmem:[#allocation3] sm:$0xff]
    %v117 = vld [vmem:[#allocation3 + $0x8] sm:$0xff]
    %v118 = vld [vmem:[#allocation3 + $0x10] sm:$0xff]
    %v119 = vld [vmem:[#allocation3 + $0x18] sm:$0xff]
    %v120 = vld [vmem:[#allocation3 + $0x20] sm:$0xff]
    %v121 = vld [vmem:[#allocation3 + $0x28] sm:$0xff]
    %v122 = vld [vmem:[#allocation3 + $0x30] sm:$0xff]
    %v123 = vld [vmem:[#allocation3 + $0x38] sm:$0xff]
    %v124 = vld [vmem:[#allocation3 + $0x40] sm:$0xff]
    %v125 = vld [vmem:[#allocation3 + $0x48] sm:$0xff]
    %v126 = vld [vmem:[#allocation3 + $0x50] sm:$0xff]
    %v127 = vld [vmem:[#allocation3 + $0x58] sm:$0xff]
    %v128 = vld [vmem:[#allocation3 + $0x60] sm:$0xff]
    %v129 = vld [vmem:[#allocation3 + $0x68] sm:$0xff]
    %v130 = vld [vmem:[#allocation3 + $0x70] sm:$0xff]
    %v131 = vld [vmem:[#allocation3 + $0x78] sm:$0xff]
    %v132 = vld [vmem:[#allocation3 + $0x80] sm:$0xff]
    %v133 = vld [vmem:[#allocation3 + $0x88] sm:$0xff]
    %v134 = vld [vmem:[#allocation3 + $0x90] sm:$0xff]
    %v135 = vld [vmem:[#allocation3 + $0x98] sm:$0xff]
    %v136 = vld [vmem:[#allocation3 + $0xa0] sm:$0xff]
    %v137 = vld [vmem:[#allocation3 + $0xa8] sm:$0xff]
    %v138 = vld [vmem:[#allocation3 + $0xb0] sm:$0xff]
    %v139 = vld [vmem:[#allocation3 + $0xb8] sm:$0xff]
    %v140 = vld [vmem:[#allocation3 + $0xc0] sm:$0xff]
    %v141 = vld [vmem:[#allocation3 + $0xc8] sm:$0xff]
    %v142 = vld [vmem:[#allocation3 + $0xd0] sm:$0xff]
    %v143 = vld [vmem:[#allocation3 + $0xd8] sm:$0xff]
    %v144 = vld [vmem:[#allocation3 + $0xe0] sm:$0xff]
    %v145 = vld [vmem:[#allocation3 + $0xe8] sm:$0xff]
    %v146 = vld [vmem:[#allocation3 + $0xf0] sm:$0xff]
    %v147 = vld [vmem:[#allocation3 + $0xf8] sm:$0xff]
    %v148 = vld [vmem:[#allocation3 + $0x100] sm:$0xff]
    %v149 = vld [vmem:[#allocation3 + $0x108] sm:$0xff]
    %v150 = vld [vmem:[#allocation3 + $0x110] sm:$0xff]
    %v151 = vld [vmem:[#allocation3 + $0x118] sm:$0xff]
    %v152 = vld [vmem:[#allocation3 + $0x120] sm:$0xff]
    %v153 = vld [vmem:[#allocation3 + $0x128] sm:$0xff]
    %v154 = vld [vmem:[#allocation3 + $0x130] sm:$0xff]
    %v155 = vld [vmem:[#allocation3 + $0x138] sm:$0xff]
    %v156 = vld [vmem:[#allocation3 + $0x140] sm:$0xff]
    %v157 = vld [vmem:[#allocation3 + $0x148] sm:$0xff]
    %v158 = vld [vmem:[#allocation3 + $0x150] sm:$0xff]
    %v159 = vld [vmem:[#allocation3 + $0x158] sm:$0xff]
    %v160 = vld [vmem:[#allocation3 + $0x160] sm:$0xff]
    %v161 = vld [vmem:[#allocation3 + $0x168] sm:$0xff]
    %v162 = vld [vmem:[#allocation3 + $0x170] sm:$0xff]
    %v163 = vld [vmem:[#allocation3 + $0x178] sm:$0xff]
    %v164 = vld [vmem:[#allocation3 + $0x180] sm:$0xff]
    %v165 = vld [vmem:[#allocation3 + $0x188] sm:$0xff]
    %v166 = vld [vmem:[#allocation3 + $0x190] sm:$0xff]
    %v167 = vld [vmem:[#allocation3 + $0x198] sm:$0xff]
    %v168 = vld [vmem:[#allocation3 + $0x1a0] sm:$0xff]
    %v169 = vld [vmem:[#allocation3 + $0x1a8] sm:$0xff]
    %v170 = vld [vmem:[#allocation3 + $0x1b0] sm:$0xff]
    %v171 = vld [vmem:[#allocation3 + $0x1b8] sm:$0xff]
    %v172 = vld [vmem:[#allocation3 + $0x1c0] sm:$0xff]
    %v173 = vld [vmem:[#allocation3 + $0x1c8] sm:$0xff]
    %v174 = vld [vmem:[#allocation3 + $0x1d0] sm:$0xff]
    %v175 = vld [vmem:[#allocation3 + $0x1d8] sm:$0xff]
    %v176 = vld [vmem:[#allocation3 + $0x1e0] sm:$0xff]
    %v177 = vld [vmem:[#allocation3 + $0x1e8] sm:$0xff]
    %v178 = vld [vmem:[#allocation3 + $0x1f0] sm:$0xff]
    %v179 = vld [vmem:[#allocation3 + $0x1f8] sm:$0xff]
    %v180 = vld [vmem:[#allocation9] ss:$4 sm:$0xf]
    %v182 = vlaneseq
    %v183 = vshrl.u32 %v182, 7
    %v184 = vsub.s32 0, %v183
    %v185 = vrot.slane %v180, %v184
    %v186 = vlaneseq
    %v187 = vshrl.u32 %v186, 7
    %v188 = vsub.s32 1, %v187
    %v189 = vrot.slane %v180, %v188
    %v190 = vlaneseq
    %v191 = vshrl.u32 %v190, 7
    %v192 = vsub.s32 2, %v191
    %v193 = vrot.slane %v180, %v192
    %v194 = vlaneseq
    %v195 = vshrl.u32 %v194, 7
    %v196 = vsub.s32 3, %v195
    %v197 = vrot.slane %v180, %v196
    %202 = vmatprep.subr.mxu0 %v177
    %203 = vmatpush1.msra.mxu0 %v176
    %204 = vmatprep.subr.mxu0 %v173
    %205 = vmatpush1.msra.mxu0 %v172
    %206 = vmatprep.subr.mxu0 %v169
    %207 = vmatpush1.msra.mxu0 %v168
    %208 = vmatprep.subr.mxu0 %v165
    %209 = vmatpush1.msra.mxu0 %v164
    %210 = vmatprep.subr.mxu0 %v161
    %211 = vmatpush1.msra.mxu0 %v160
    %212 = vmatprep.subr.mxu0 %v157
    %213 = vmatpush1.msra.mxu0 %v156
    %214 = vmatprep.subr.mxu0 %v153
    %215 = vmatpush1.msra.mxu0 %v152
    %216 = vmatprep.subr.mxu0 %v149
    %217 = vmatpush1.msra.mxu0 %v148
    %218 = vmatprep.subr.mxu0 %v145
    %219 = vmatpush1.msra.mxu0 %v144
    %220 = vmatprep.subr.mxu0 %v141
    %221 = vmatpush1.msra.mxu0 %v140
    %222 = vmatprep.subr.mxu0 %v137
    %223 = vmatpush1.msra.mxu0 %v136
    %224 = vmatprep.subr.mxu0 %v133
    %225 = vmatpush1.msra.mxu0 %v132
    %226 = vmatprep.subr.mxu0 %v129
    %227 = vmatpush1.msra.mxu0 %v128
    %228 = vmatprep.subr.mxu0 %v125
    %229 = vmatpush1.msra.mxu0 %v124
    %230 = vmatprep.subr.mxu0 %v121
    %231 = vmatpush1.msra.mxu0 %v120
    %232 = vmatprep.subr.mxu0 %v117
    %233 = vmatpush1.msra.mxu0 %v116
    %234 = vmatprep.subr.mxu0 0.0
    %235 = vmatpush2.msra.mxu0 0.0
    %236 = vmatprep.subr.mxu0 0.0
    %237 = vmatpush2.msra.mxu0 0.0
    %238 = vmatprep.subr.mxu0 0.0
    %239 = vmatpush2.msra.mxu0 0.0
    %240 = vmatprep.subr.mxu0 0.0
    %241 = vmatpush2.msra.mxu0 0.0
    %242 = vmatprep.subr.mxu0 0.0
    %243 = vmatpush2.msra.mxu0 0.0
    %244 = vmatprep.subr.mxu0 0.0
    %245 = vmatpush2.msra.mxu0 0.0
    %246 = vmatprep.subr.mxu0 0.0
    %247 = vmatpush2.msra.mxu0 0.0
    %248 = vmatprep.subr.mxu0 0.0
    %249 = vmatpush2.msra.mxu0 0.0
    %250 = vmatprep.subr.mxu0 0.0
    %251 = vmatpush2.msra.mxu0 0.0
    %252 = vmatprep.subr.mxu0 0.0
    %253 = vmatpush2.msra.mxu0 0.0
    %254 = vmatprep.subr.mxu0 0.0
    %255 = vmatpush2.msra.mxu0 0.0
    %256 = vmatprep.subr.mxu0 0.0
    %257 = vmatpush2.msra.mxu0 0.0
    %258 = vmatprep.subr.mxu0 0.0
    %259 = vmatpush2.msra.mxu0 0.0
    %260 = vmatprep.subr.mxu0 0.0
    %261 = vmatpush2.msra.mxu0 0.0
    %262 = vmatprep.subr.mxu0 0.0
    %263 = vmatpush2.msra.mxu0 0.0
    %264 = vmatprep.subr.mxu0 0.0
    %265 = vmatpush2.msra.mxu0 0.0
    %266 = vmatprep.mubr.f32.mxu0 0.0
    %267 = vmatmul.mubr.f32.gmra.mxu0 %v115
    %v268 = vpop.f32.mrf.mxu0
    %v269 = vadd.f32 %v185, %v268
    %v270 = vpop.f32.mrf.mxu0
    %v271 = vadd.f32 %v189, %v270
    %272 = vdwg.mxu0
    %273 = vmatprep.subr.mxu0 %v179
    %274 = vmatpush1.msra.mxu0 %v178
    %275 = vmatprep.subr.mxu0 %v175
    %276 = vmatpush1.msra.mxu0 %v174
    %277 = vmatprep.subr.mxu0 %v171
    %278 = vmatpush1.msra.mxu0 %v170
    %279 = vmatprep.subr.mxu0 %v167
    %280 = vmatpush1.msra.mxu0 %v166
    %281 = vmatprep.subr.mxu0 %v163
    %282 = vmatpush1.msra.mxu0 %v162
    %283 = vmatprep.subr.mxu0 %v159
    %284 = vmatpush1.msra.mxu0 %v158
    %285 = vmatprep.subr.mxu0 %v155
    %286 = vmatpush1.msra.mxu0 %v154
    %287 = vmatprep.subr.mxu0 %v151
    %288 = vmatpush1.msra.mxu0 %v150
    %289 = vmatprep.subr.mxu0 %v147
    %290 = vmatpush1.msra.mxu0 %v146
    %291 = vmatprep.subr.mxu0 %v143
    %292 = vmatpush1.msra.mxu0 %v142
    %293 = vmatprep.subr.mxu0 %v139
    %294 = vmatpush1.msra.mxu0 %v138
    %295 = vmatprep.subr.mxu0 %v135
    %296 = vmatpush1.msra.mxu0 %v134
    %297 = vmatprep.subr.mxu0 %v131
    %298 = vmatpush1.msra.mxu0 %v130
    %299 = vmatprep.subr.mxu0 %v127
    %300 = vmatpush1.msra.mxu0 %v126
    %301 = vmatprep.subr.mxu0 %v123
    %302 = vmatpush1.msra.mxu0 %v122
    %303 = vmatprep.subr.mxu0 %v119
    %304 = vmatpush1.msra.mxu0 %v118
    %305 = vmatprep.subr.mxu0 0.0
    %306 = vmatpush2.msra.mxu0 0.0
    %307 = vmatprep.subr.mxu0 0.0
    %308 = vmatpush2.msra.mxu0 0.0
    %309 = vmatprep.subr.mxu0 0.0
    %310 = vmatpush2.msra.mxu0 0.0
    %311 = vmatprep.subr.mxu0 0.0
    %312 = vmatpush2.msra.mxu0 0.0
    %313 = vmatprep.subr.mxu0 0.0
    %314 = vmatpush2.msra.mxu0 0.0
    %315 = vmatprep.subr.mxu0 0.0
    %316 = vmatpush2.msra.mxu0 0.0
    %317 = vmatprep.subr.mxu0 0.0
    %318 = vmatpush2.msra.mxu0 0.0
    %319 = vmatprep.subr.mxu0 0.0
    %320 = vmatpush2.msra.mxu0 0.0
    %321 = vmatprep.subr.mxu0 0.0
    %322 = vmatpush2.msra.mxu0 0.0
    %323 = vmatprep.subr.mxu0 0.0
    %324 = vmatpush2.msra.mxu0 0.0
    %325 = vmatprep.subr.mxu0 0.0
    %326 = vmatpush2.msra.mxu0 0.0
    %327 = vmatprep.subr.mxu0 0.0
    %328 = vmatpush2.msra.mxu0 0.0
    %329 = vmatprep.subr.mxu0 0.0
    %330 = vmatpush2.msra.mxu0 0.0
    %331 = vmatprep.subr.mxu0 0.0
    %332 = vmatpush2.msra.mxu0 0.0
    %333 = vmatprep.subr.mxu0 0.0
    %334 = vmatpush2.msra.mxu0 0.0
    %335 = vmatprep.subr.mxu0 0.0
    %336 = vmatpush2.msra.mxu0 0.0
    %337 = vmatprep.mubr.f32.mxu0 0.0
    %338 = vmatmul.mubr.f32.gmra.mxu0 %v115
    %v339 = vpop.f32.mrf.mxu0
    %v340 = vadd.f32 %v193, %v339
    %v341 = vpop.f32.mrf.mxu0
    %v342 = vadd.f32 %v197, %v341
    %343 = vdwg.mxu0
    %s344 = scalar_lea.vmem [#allocation9], 1
    %v345 = vld [vmem:[%s344] ss:$4 sm:$0xf]
    %s346 = scalar_lea.vmem [#allocation9], 2
    %v347 = vld [vmem:[%s346] ss:$4 sm:$0xf]
    %s348 = scalar_lea.vmem [#allocation9], 3
    %v349 = vld [vmem:[%s348] ss:$4 sm:$0xf]
    %v350 = vld [vmem:[%s1] sm:$0x1]
    %v351 = vld [vmem:[%s1 + $0x1] sm:$0x1]
    %v352 = vld [vmem:[%s1 + $0x2] sm:$0x1]
    %v353 = vld [vmem:[%s1 + $0x3] sm:$0x1]
    %v354 = vld [vmem:[%s2] sm:$0x1]
    %v355 = vld [vmem:[%s2 + $0x1] sm:$0x1]
    %v356 = vld [vmem:[%s2 + $0x2] sm:$0x1]
    %v357 = vld [vmem:[%s2 + $0x3] sm:$0x1]
    %v358 = vld [vmem:[#allocation6] sm:$0xff]
    %v359 = vld [vmem:[#allocation6 + $0x8] sm:$0xff]
    %v360 = vld [vmem:[#allocation6 + $0x10] sm:$0xff]
    %v361 = vld [vmem:[#allocation6 + $0x18] sm:$0xff]
    %v362 = vld [vmem:[#allocation6 + $0x20] sm:$0xff]
    %v363 = vld [vmem:[#allocation6 + $0x28] sm:$0xff]
    %v364 = vld [vmem:[#allocation6 + $0x30] sm:$0xff]
    %v365 = vld [vmem:[#allocation6 + $0x38] sm:$0xff]
    %v366 = vld [vmem:[#allocation6 + $0x40] sm:$0xff]
    %v367 = vld [vmem:[#allocation6 + $0x48] sm:$0xff]
    %v368 = vld [vmem:[#allocation6 + $0x50] sm:$0xff]
    %v369 = vld [vmem:[#allocation6 + $0x58] sm:$0xff]
    %v370 = vld [vmem:[#allocation6 + $0x60] sm:$0xff]
    %v371 = vld [vmem:[#allocation6 + $0x68] sm:$0xff]
    %v372 = vld [vmem:[#allocation6 + $0x70] sm:$0xff]
    %v373 = vld [vmem:[#allocation6 + $0x78] sm:$0xff]
    %v374 = vld [vmem:[#allocation6 + $0x80] sm:$0xff]
    %v375 = vld [vmem:[#allocation6 + $0x88] sm:$0xff]
    %v376 = vld [vmem:[#allocation6 + $0x90] sm:$0xff]
    %v377 = vld [vmem:[#allocation6 + $0x98] sm:$0xff]
    %v378 = vld [vmem:[#allocation6 + $0xa0] sm:$0xff]
    %v379 = vld [vmem:[#allocation6 + $0xa8] sm:$0xff]
    %v380 = vld [vmem:[#allocation6 + $0xb0] sm:$0xff]
    %v381 = vld [vmem:[#allocation6 + $0xb8] sm:$0xff]
    %v382 = vld [vmem:[#allocation6 + $0xc0] sm:$0xff]
    %v383 = vld [vmem:[#allocation6 + $0xc8] sm:$0xff]
    %v384 = vld [vmem:[#allocation6 + $0xd0] sm:$0xff]
    %v385 = vld [vmem:[#allocation6 + $0xd8] sm:$0xff]
    %v386 = vld [vmem:[#allocation6 + $0xe0] sm:$0xff]
    %v387 = vld [vmem:[#allocation6 + $0xe8] sm:$0xff]
    %v388 = vld [vmem:[#allocation6 + $0xf0] sm:$0xff]
    %v389 = vld [vmem:[#allocation6 + $0xf8] sm:$0xff]
    %v390 = vld [vmem:[#allocation6 + $0x100] sm:$0xff]
    %v391 = vld [vmem:[#allocation6 + $0x108] sm:$0xff]
    %v392 = vld [vmem:[#allocation6 + $0x110] sm:$0xff]
    %v393 = vld [vmem:[#allocation6 + $0x118] sm:$0xff]
    %v394 = vld [vmem:[#allocation6 + $0x120] sm:$0xff]
    %v395 = vld [vmem:[#allocation6 + $0x128] sm:$0xff]
    %v396 = vld [vmem:[#allocation6 + $0x130] sm:$0xff]
    %v397 = vld [vmem:[#allocation6 + $0x138] sm:$0xff]
    %v398 = vld [vmem:[#allocation6 + $0x140] sm:$0xff]
    %v399 = vld [vmem:[#allocation6 + $0x148] sm:$0xff]
    %v400 = vld [vmem:[#allocation6 + $0x150] sm:$0xff]
    %v401 = vld [vmem:[#allocation6 + $0x158] sm:$0xff]
    %v402 = vld [vmem:[#allocation6 + $0x160] sm:$0xff]
    %v403 = vld [vmem:[#allocation6 + $0x168] sm:$0xff]
    %v404 = vld [vmem:[#allocation6 + $0x170] sm:$0xff]
    %v405 = vld [vmem:[#allocation6 + $0x178] sm:$0xff]
    %v406 = vld [vmem:[#allocation6 + $0x180] sm:$0xff]
    %v407 = vld [vmem:[#allocation6 + $0x188] sm:$0xff]
    %v408 = vld [vmem:[#allocation6 + $0x190] sm:$0xff]
    %v409 = vld [vmem:[#allocation6 + $0x198] sm:$0xff]
    %v410 = vld [vmem:[#allocation6 + $0x1a0] sm:$0xff]
    %v411 = vld [vmem:[#allocation6 + $0x1a8] sm:$0xff]
    %v412 = vld [vmem:[#allocation6 + $0x1b0] sm:$0xff]
    %v413 = vld [vmem:[#allocation6 + $0x1b8] sm:$0xff]
    %v414 = vld [vmem:[#allocation6 + $0x1c0] sm:$0xff]
    %v415 = vld [vmem:[#allocation6 + $0x1c8] sm:$0xff]
    %v416 = vld [vmem:[#allocation6 + $0x1d0] sm:$0xff]
    %v417 = vld [vmem:[#allocation6 + $0x1d8] sm:$0xff]
    %v418 = vld [vmem:[#allocation6 + $0x1e0] sm:$0xff]
    %v419 = vld [vmem:[#allocation6 + $0x1e8] sm:$0xff]
    %v420 = vld [vmem:[#allocation6 + $0x1f0] sm:$0xff]
    %v421 = vld [vmem:[#allocation6 + $0x1f8] sm:$0xff]
    %422 = vmatprep.subr.mxu0 %v419
    %423 = vmatpush1.msra.mxu0 %v418
    %424 = vmatprep.subr.mxu0 %v415
    %425 = vmatpush1.msra.mxu0 %v414
    %426 = vmatprep.subr.mxu0 %v411
    %427 = vmatpush1.msra.mxu0 %v410
    %428 = vmatprep.subr.mxu0 %v407
    %429 = vmatpush1.msra.mxu0 %v406
    %430 = vmatprep.subr.mxu0 %v403
    %431 = vmatpush1.msra.mxu0 %v402
    %432 = vmatprep.subr.mxu0 %v399
    %433 = vmatpush1.msra.mxu0 %v398
    %434 = vmatprep.subr.mxu0 %v395
    %435 = vmatpush1.msra.mxu0 %v394
    %436 = vmatprep.subr.mxu0 %v391
    %437 = vmatpush1.msra.mxu0 %v390
    %438 = vmatprep.subr.mxu0 %v387
    %439 = vmatpush1.msra.mxu0 %v386
    %440 = vmatprep.subr.mxu0 %v383
    %441 = vmatpush1.msra.mxu0 %v382
    %442 = vmatprep.subr.mxu0 %v379
    %443 = vmatpush1.msra.mxu0 %v378
    %444 = vmatprep.subr.mxu0 %v375
    %445 = vmatpush1.msra.mxu0 %v374
    %446 = vmatprep.subr.mxu0 %v371
    %447 = vmatpush1.msra.mxu0 %v370
    %448 = vmatprep.subr.mxu0 %v367
    %449 = vmatpush1.msra.mxu0 %v366
    %450 = vmatprep.subr.mxu0 %v363
    %451 = vmatpush1.msra.mxu0 %v362
    %452 = vmatprep.subr.mxu0 %v359
    %453 = vmatpush1.msra.mxu0 %v358
    %454 = vmatprep.subr.mxu0 0.0
    %455 = vmatpush2.msra.mxu0 0.0
    %456 = vmatprep.subr.mxu0 0.0
    %457 = vmatpush2.msra.mxu0 0.0
    %458 = vmatprep.subr.mxu0 0.0
    %459 = vmatpush2.msra.mxu0 0.0
    %460 = vmatprep.subr.mxu0 0.0
    %461 = vmatpush2.msra.mxu0 0.0
    %462 = vmatprep.subr.mxu0 0.0
    %463 = vmatpush2.msra.mxu0 0.0
    %464 = vmatprep.subr.mxu0 0.0
    %465 = vmatpush2.msra.mxu0 0.0
    %466 = vmatprep.subr.mxu0 0.0
    %467 = vmatpush2.msra.mxu0 0.0
    %468 = vmatprep.subr.mxu0 0.0
    %469 = vmatpush2.msra.mxu0 0.0
    %470 = vmatprep.subr.mxu0 0.0
    %471 = vmatpush2.msra.mxu0 0.0
    %472 = vmatprep.subr.mxu0 0.0
    %473 = vmatpush2.msra.mxu0 0.0
    %474 = vmatprep.subr.mxu0 0.0
    %475 = vmatpush2.msra.mxu0 0.0
    %476 = vmatprep.subr.mxu0 0.0
    %477 = vmatpush2.msra.mxu0 0.0
    %478 = vmatprep.subr.mxu0 0.0
    %479 = vmatpush2.msra.mxu0 0.0
    %480 = vmatprep.subr.mxu0 0.0
    %481 = vmatpush2.msra.mxu0 0.0
    %482 = vmatprep.subr.mxu0 0.0
    %483 = vmatpush2.msra.mxu0 0.0
    %484 = vmatprep.subr.mxu0 0.0
    %485 = vmatpush2.msra.mxu0 0.0
    %486 = vmatprep.mubr.f32.mxu0 0.0
    %487 = vmatmul.mubr.f32.gmra.mxu0 %v350
    %v488 = vpop.f32.mrf.mxu0
    %v489 = vadd.f32 0.0, %v488
    %v490 = vpop.f32.mrf.mxu0
    %v491 = vadd.f32 0.0, %v490
    %492 = vdwg.mxu0
    %493 = vmatprep.subr.mxu0 %v421
    %494 = vmatpush1.msra.mxu0 %v420
    %495 = vmatprep.subr.mxu0 %v417
    %496 = vmatpush1.msra.mxu0 %v416
    %497 = vmatprep.subr.mxu0 %v413
    %498 = vmatpush1.msra.mxu0 %v412
    %499 = vmatprep.subr.mxu0 %v409
    %500 = vmatpush1.msra.mxu0 %v408
    %501 = vmatprep.subr.mxu0 %v405
    %502 = vmatpush1.msra.mxu0 %v404
    %503 = vmatprep.subr.mxu0 %v401
    %504 = vmatpush1.msra.mxu0 %v400
    %505 = vmatprep.subr.mxu0 %v397
    %506 = vmatpush1.msra.mxu0 %v396
    %507 = vmatprep.subr.mxu0 %v393
    %508 = vmatpush1.msra.mxu0 %v392
    %509 = vmatprep.subr.mxu0 %v389
    %510 = vmatpush1.msra.mxu0 %v388
    %511 = vmatprep.subr.mxu0 %v385
    %512 = vmatpush1.msra.mxu0 %v384
    %513 = vmatprep.subr.mxu0 %v381
    %514 = vmatpush1.msra.mxu0 %v380
    %515 = vmatprep.subr.mxu0 %v377
    %516 = vmatpush1.msra.mxu0 %v376
    %517 = vmatprep.subr.mxu0 %v373
    %518 = vmatpush1.msra.mxu0 %v372
    %519 = vmatprep.subr.mxu0 %v369
    %520 = vmatpush1.msra.mxu0 %v368
    %521 = vmatprep.subr.mxu0 %v365
    %522 = vmatpush1.msra.mxu0 %v364
    %523 = vmatprep.subr.mxu0 %v361
    %524 = vmatpush1.msra.mxu0 %v360
    %525 = vmatprep.subr.mxu0 0.0
    %526 = vmatpush2.msra.mxu0 0.0
    %527 = vmatprep.subr.mxu0 0.0
    %528 = vmatpush2.msra.mxu0 0.0
    %529 = vmatprep.subr.mxu0 0.0
    %530 = vmatpush2.msra.mxu0 0.0
    %531 = vmatprep.subr.mxu0 0.0
    %532 = vmatpush2.msra.mxu0 0.0
    %533 = vmatprep.subr.mxu0 0.0
    %534 = vmatpush2.msra.mxu0 0.0
    %535 = vmatprep.subr.mxu0 0.0
    %536 = vmatpush2.msra.mxu0 0.0
    %537 = vmatprep.subr.mxu0 0.0
    %538 = vmatpush2.msra.mxu0 0.0
    %539 = vmatprep.subr.mxu0 0.0
    %540 = vmatpush2.msra.mxu0 0.0
    %541 = vmatprep.subr.mxu0 0.0
    %542 = vmatpush2.msra.mxu0 0.0
    %543 = vmatprep.subr.mxu0 0.0
    %544 = vmatpush2.msra.mxu0 0.0
    %545 = vmatprep.subr.mxu0 0.0
    %546 = vmatpush2.msra.mxu0 0.0
    %547 = vmatprep.subr.mxu0 0.0
    %548 = vmatpush2.msra.mxu0 0.0
    %549 = vmatprep.subr.mxu0 0.0
    %550 = vmatpush2.msra.mxu0 0.0
    %551 = vmatprep.subr.mxu0 0.0
    %552 = vmatpush2.msra.mxu0 0.0
    %553 = vmatprep.subr.mxu0 0.0
    %554 = vmatpush2.msra.mxu0 0.0
    %555 = vmatprep.subr.mxu0 0.0
    %556 = vmatpush2.msra.mxu0 0.0
    %557 = vmatprep.mubr.f32.mxu0 0.0
    %558 = vmatmul.mubr.f32.gmra.mxu0 %v350
    %v559 = vpop.f32.mrf.mxu0
    %v560 = vadd.f32 0.0, %v559
    %v561 = vpop.f32.mrf.mxu0
    %v562 = vadd.f32 0.0, %v561
    %563 = vdwg.mxu0
    %v564 = vadd.f32 %v269, %v489
    %v565 = vadd.f32 %v271, %v491
    %v566 = vadd.f32 %v340, %v560
    %v567 = vadd.f32 %v342, %v562
    %v568 = vmul.f32 %v564, 0.5
    %v569 = vtanh.pop %v568
    %v570 = vmul.f32 %v569, 0.5
    %v571 = vadd.f32 %v570, 0.5
    %v572 = vmul.f32 %v565, 0.5
    %v573 = vtanh.pop %v572
    %v574 = vmul.f32 %v573, 0.5
    %v575 = vadd.f32 %v574, 0.5
    %v576 = vtanh.pop %v566
    %v577 = vmul.f32 %v567, 0.5
    %v578 = vtanh.pop %v577
    %v579 = vmul.f32 %v578, 0.5
    %v580 = vadd.f32 %v579, 0.5
    %v581 = vmul.f32 %v575, %v354
    %v582 = vmul.f32 %v571, %v576
    %v583 = vadd.f32 %v581, %v582
    %v584 = vtanh.pop %v583
    %v585 = vmul.f32 %v580, %v584
    %v586 = vld [vmem:[#allocation8] sm:$0xff]
    %v587 = vld [vmem:[#allocation8 + $0x8] sm:$0xff]
    %v588 = vld [vmem:[#allocation8 + $0x10] sm:$0xff]
    %v589 = vld [vmem:[#allocation8 + $0x18] sm:$0xff]
    %v590 = vld [vmem:[#allocation8 + $0x20] sm:$0xff]
    %v591 = vld [vmem:[#allocation8 + $0x28] sm:$0xff]
    %v592 = vld [vmem:[#allocation8 + $0x30] sm:$0xff]
    %v593 = vld [vmem:[#allocation8 + $0x38] sm:$0xff]
    %v594 = vld [vmem:[#allocation8 + $0x40] sm:$0xff]
    %v595 = vld [vmem:[#allocation8 + $0x48] sm:$0xff]
    %v596 = vld [vmem:[#allocation8 + $0x50] sm:$0xff]
    %v597 = vld [vmem:[#allocation8 + $0x58] sm:$0xff]
    %v598 = vld [vmem:[#allocation8 + $0x60] sm:$0xff]
    %v599 = vld [vmem:[#allocation8 + $0x68] sm:$0xff]
    %v600 = vld [vmem:[#allocation8 + $0x70] sm:$0xff]
    %v601 = vld [vmem:[#allocation8 + $0x78] sm:$0xff]
    %v602 = vld [vmem:[#allocation8 + $0x80] sm:$0xff]
    %v603 = vld [vmem:[#allocation8 + $0x88] sm:$0xff]
    %v604 = vld [vmem:[#allocation8 + $0x90] sm:$0xff]
    %v605 = vld [vmem:[#allocation8 + $0x98] sm:$0xff]
    %v606 = vld [vmem:[#allocation8 + $0xa0] sm:$0xff]
    %v607 = vld [vmem:[#allocation8 + $0xa8] sm:$0xff]
    %v608 = vld [vmem:[#allocation8 + $0xb0] sm:$0xff]
    %v609 = vld [vmem:[#allocation8 + $0xb8] sm:$0xff]
    %v610 = vld [vmem:[#allocation8 + $0xc0] sm:$0xff]
    %v611 = vld [vmem:[#allocation8 + $0xc8] sm:$0xff]
    %v612 = vld [vmem:[#allocation8 + $0xd0] sm:$0xff]
    %v613 = vld [vmem:[#allocation8 + $0xd8] sm:$0xff]
    %v614 = vld [vmem:[#allocation8 + $0xe0] sm:$0xff]
    %v615 = vld [vmem:[#allocation8 + $0xe8] sm:$0xff]
    %v616 = vld [vmem:[#allocation8 + $0xf0] sm:$0xff]
    %v617 = vld [vmem:[#allocation8 + $0xf8] sm:$0xff]
    %v618 = vld [vmem:[#allocation8 + $0x100] sm:$0xff]
    %v619 = vld [vmem:[#allocation8 + $0x108] sm:$0xff]
    %v620 = vld [vmem:[#allocation8 + $0x110] sm:$0xff]
    %v621 = vld [vmem:[#allocation8 + $0x118] sm:$0xff]
    %v622 = vld [vmem:[#allocation8 + $0x120] sm:$0xff]
    %v623 = vld [vmem:[#allocation8 + $0x128] sm:$0xff]
    %v624 = vld [vmem:[#allocation8 + $0x130] sm:$0xff]
    %v625 = vld [vmem:[#allocation8 + $0x138] sm:$0xff]
    %v626 = vld [vmem:[#allocation8 + $0x140] sm:$0xff]
    %v627 = vld [vmem:[#allocation8 + $0x148] sm:$0xff]
    %v628 = vld [vmem:[#allocation8 + $0x150] sm:$0xff]
    %v629 = vld [vmem:[#allocation8 + $0x158] sm:$0xff]
    %v630 = vld [vmem:[#allocation8 + $0x160] sm:$0xff]
    %v631 = vld [vmem:[#allocation8 + $0x168] sm:$0xff]
    %v632 = vld [vmem:[#allocation8 + $0x170] sm:$0xff]
    %v633 = vld [vmem:[#allocation8 + $0x178] sm:$0xff]
    %v634 = vld [vmem:[#allocation8 + $0x180] sm:$0xff]
    %v635 = vld [vmem:[#allocation8 + $0x188] sm:$0xff]
    %v636 = vld [vmem:[#allocation8 + $0x190] sm:$0xff]
    %v637 = vld [vmem:[#allocation8 + $0x198] sm:$0xff]
    %v638 = vld [vmem:[#allocation8 + $0x1a0] sm:$0xff]
    %v639 = vld [vmem:[#allocation8 + $0x1a8] sm:$0xff]
    %v640 = vld [vmem:[#allocation8 + $0x1b0] sm:$0xff]
    %v641 = vld [vmem:[#allocation8 + $0x1b8] sm:$0xff]
    %v642 = vld [vmem:[#allocation8 + $0x1c0] sm:$0xff]
    %v643 = vld [vmem:[#allocation8 + $0x1c8] sm:$0xff]
    %v644 = vld [vmem:[#allocation8 + $0x1d0] sm:$0xff]
    %v645 = vld [vmem:[#allocation8 + $0x1d8] sm:$0xff]
    %v646 = vld [vmem:[#allocation8 + $0x1e0] sm:$0xff]
    %v647 = vld [vmem:[#allocation8 + $0x1e8] sm:$0xff]
    %v648 = vld [vmem:[#allocation8 + $0x1f0] sm:$0xff]
    %v649 = vld [vmem:[#allocation8 + $0x1f8] sm:$0xff]
    %v650 = vld [vmem:[#allocation8 + $0x200] sm:$0xff]
    %v651 = vld [vmem:[#allocation8 + $0x208] sm:$0xff]
    %v652 = vld [vmem:[#allocation8 + $0x210] sm:$0xff]
    %v653 = vld [vmem:[#allocation8 + $0x218] sm:$0xff]
    %v654 = vld [vmem:[#allocation8 + $0x220] sm:$0xff]
    %v655 = vld [vmem:[#allocation8 + $0x228] sm:$0xff]
    %v656 = vld [vmem:[#allocation8 + $0x230] sm:$0xff]
    %v657 = vld [vmem:[#allocation8 + $0x238] sm:$0xff]
    %v658 = vld [vmem:[#allocation8 + $0x240] sm:$0xff]
    %v659 = vld [vmem:[#allocation8 + $0x248] sm:$0xff]
    %v660 = vld [vmem:[#allocation8 + $0x250] sm:$0xff]
    %v661 = vld [vmem:[#allocation8 + $0x258] sm:$0xff]
    %v662 = vld [vmem:[#allocation8 + $0x260] sm:$0xff]
    %v663 = vld [vmem:[#allocation8 + $0x268] sm:$0xff]
    %v664 = vld [vmem:[#allocation8 + $0x270] sm:$0xff]
    %v665 = vld [vmem:[#allocation8 + $0x278] sm:$0xff]
    %v666 = vld [vmem:[#allocation8 + $0x280] sm:$0xff]
    %v667 = vld [vmem:[#allocation8 + $0x288] sm:$0xff]
    %v668 = vld [vmem:[#allocation8 + $0x290] sm:$0xff]
    %v669 = vld [vmem:[#allocation8 + $0x298] sm:$0xff]
    %v670 = vld [vmem:[#allocation8 + $0x2a0] sm:$0xff]
    %v671 = vld [vmem:[#allocation8 + $0x2a8] sm:$0xff]
    %v672 = vld [vmem:[#allocation8 + $0x2b0] sm:$0xff]
    %v673 = vld [vmem:[#allocation8 + $0x2b8] sm:$0xff]
    %v674 = vld [vmem:[#allocation8 + $0x2c0] sm:$0xff]
    %v675 = vld [vmem:[#allocation8 + $0x2c8] sm:$0xff]
    %v676 = vld [vmem:[#allocation8 + $0x2d0] sm:$0xff]
    %v677 = vld [vmem:[#allocation8 + $0x2d8] sm:$0xff]
    %v678 = vld [vmem:[#allocation8 + $0x2e0] sm:$0xff]
    %v679 = vld [vmem:[#allocation8 + $0x2e8] sm:$0xff]
    %v680 = vld [vmem:[#allocation8 + $0x2f0] sm:$0xff]
    %v681 = vld [vmem:[#allocation8 + $0x2f8] sm:$0xff]
    %v682 = vld [vmem:[#allocation8 + $0x300] sm:$0xff]
    %v683 = vld [vmem:[#allocation8 + $0x308] sm:$0xff]
    %v684 = vld [vmem:[#allocation8 + $0x310] sm:$0xff]
    %v685 = vld [vmem:[#allocation8 + $0x318] sm:$0xff]
    %v686 = vld [vmem:[#allocation8 + $0x320] sm:$0xff]
    %v687 = vld [vmem:[#allocation8 + $0x328] sm:$0xff]
    %v688 = vld [vmem:[#allocation8 + $0x330] sm:$0xff]
    %v689 = vld [vmem:[#allocation8 + $0x338] sm:$0xff]
    %v690 = vld [vmem:[#allocation8 + $0x340] sm:$0xff]
    %v691 = vld [vmem:[#allocation8 + $0x348] sm:$0xff]
    %v692 = vld [vmem:[#allocation8 + $0x350] sm:$0xff]
    %v693 = vld [vmem:[#allocation8 + $0x358] sm:$0xff]
    %v694 = vld [vmem:[#allocation8 + $0x360] sm:$0xff]
    %v695 = vld [vmem:[#allocation8 + $0x368] sm:$0xff]
    %v696 = vld [vmem:[#allocation8 + $0x370] sm:$0xff]
    %v697 = vld [vmem:[#allocation8 + $0x378] sm:$0xff]
    %v698 = vld [vmem:[#allocation8 + $0x380] sm:$0xff]
    %v699 = vld [vmem:[#allocation8 + $0x388] sm:$0xff]
    %v700 = vld [vmem:[#allocation8 + $0x390] sm:$0xff]
    %v701 = vld [vmem:[#allocation8 + $0x398] sm:$0xff]
    %v702 = vld [vmem:[#allocation8 + $0x3a0] sm:$0xff]
    %v703 = vld [vmem:[#allocation8 + $0x3a8] sm:$0xff]
    %v704 = vld [vmem:[#allocation8 + $0x3b0] sm:$0xff]
    %v705 = vld [vmem:[#allocation8 + $0x3b8] sm:$0xff]
    %v706 = vld [vmem:[#allocation8 + $0x3c0] sm:$0xff]
    %v707 = vld [vmem:[#allocation8 + $0x3c8] sm:$0xff]
    %v708 = vld [vmem:[#allocation8 + $0x3d0] sm:$0xff]
    %v709 = vld [vmem:[#allocation8 + $0x3d8] sm:$0xff]
    %v710 = vld [vmem:[#allocation8 + $0x3e0] sm:$0xff]
    %v711 = vld [vmem:[#allocation8 + $0x3e8] sm:$0xff]
    %v712 = vld [vmem:[#allocation8 + $0x3f0] sm:$0xff]
    %v713 = vld [vmem:[#allocation8 + $0x3f8] sm:$0xff]
    %v715 = vlaneseq
    %v716 = vshrl.u32 %v715, 7
    %v717 = vsub.s32 0, %v716
    %v718 = vrot.slane %v345, %v717
    %v719 = vlaneseq
    %v720 = vshrl.u32 %v719, 7
    %v721 = vsub.s32 1, %v720
    %v722 = vrot.slane %v345, %v721
    %v723 = vlaneseq
    %v724 = vshrl.u32 %v723, 7
    %v725 = vsub.s32 2, %v724
    %v726 = vrot.slane %v345, %v725
    %v727 = vlaneseq
    %v728 = vshrl.u32 %v727, 7
    %v729 = vsub.s32 3, %v728
    %v730 = vrot.slane %v345, %v729
    %735 = vmatprep.subr.mxu0 %v647
    %736 = vmatpush1.msra.mxu0 %v646
    %737 = vmatprep.subr.mxu0 %v643
    %738 = vmatpush1.msra.mxu0 %v642
    %739 = vmatprep.subr.mxu0 %v639
    %740 = vmatpush1.msra.mxu0 %v638
    %741 = vmatprep.subr.mxu0 %v635
    %742 = vmatpush1.msra.mxu0 %v634
    %743 = vmatprep.subr.mxu0 %v631
    %744 = vmatpush1.msra.mxu0 %v630
    %745 = vmatprep.subr.mxu0 %v627
    %746 = vmatpush1.msra.mxu0 %v626
    %747 = vmatprep.subr.mxu0 %v623
    %748 = vmatpush1.msra.mxu0 %v622
    %749 = vmatprep.subr.mxu0 %v619
    %750 = vmatpush1.msra.mxu0 %v618
    %751 = vmatprep.subr.mxu0 %v615
    %752 = vmatpush1.msra.mxu0 %v614
    %753 = vmatprep.subr.mxu0 %v611
    %754 = vmatpush1.msra.mxu0 %v610
    %755 = vmatprep.subr.mxu0 %v607
    %756 = vmatpush1.msra.mxu0 %v606
    %757 = vmatprep.subr.mxu0 %v603
    %758 = vmatpush1.msra.mxu0 %v602
    %759 = vmatprep.subr.mxu0 %v599
    %760 = vmatpush1.msra.mxu0 %v598
    %761 = vmatprep.subr.mxu0 %v595
    %762 = vmatpush1.msra.mxu0 %v594
    %763 = vmatprep.subr.mxu0 %v591
    %764 = vmatpush1.msra.mxu0 %v590
    %765 = vmatprep.subr.mxu0 %v587
    %766 = vmatpush1.msra.mxu0 %v586
    %767 = vmatprep.subr.mxu0 %v711
    %768 = vmatpush2.msra.mxu0 %v710
    %769 = vmatprep.subr.mxu0 %v707
    %770 = vmatpush2.msra.mxu0 %v706
    %771 = vmatprep.subr.mxu0 %v703
    %772 = vmatpush2.msra.mxu0 %v702
    %773 = vmatprep.subr.mxu0 %v699
    %774 = vmatpush2.msra.mxu0 %v698
    %775 = vmatprep.subr.mxu0 %v695
    %776 = vmatpush2.msra.mxu0 %v694
    %777 = vmatprep.subr.mxu0 %v691
    %778 = vmatpush2.msra.mxu0 %v690
    %779 = vmatprep.subr.mxu0 %v687
    %780 = vmatpush2.msra.mxu0 %v686
    %781 = vmatprep.subr.mxu0 %v683
    %782 = vmatpush2.msra.mxu0 %v682
    %783 = vmatprep.subr.mxu0 %v679
    %784 = vmatpush2.msra.mxu0 %v678
    %785 = vmatprep.subr.mxu0 %v675
    %786 = vmatpush2.msra.mxu0 %v674
    %787 = vmatprep.subr.mxu0 %v671
    %788 = vmatpush2.msra.mxu0 %v670
    %789 = vmatprep.subr.mxu0 %v667
    %790 = vmatpush2.msra.mxu0 %v666
    %791 = vmatprep.subr.mxu0 %v663
    %792 = vmatpush2.msra.mxu0 %v662
    %793 = vmatprep.subr.mxu0 %v659
    %794 = vmatpush2.msra.mxu0 %v658
    %795 = vmatprep.subr.mxu0 %v655
    %796 = vmatpush2.msra.mxu0 %v654
    %797 = vmatprep.subr.mxu0 %v651
    %798 = vmatpush2.msra.mxu0 %v650
    %799 = vmatprep.mubr.f32.mxu0 %v351
    %800 = vmatmul.mubr.f32.gmra.mxu0 %v585
    %v801 = vpop.f32.mrf.mxu0
    %v802 = vadd.f32 %v718, %v801
    %v803 = vpop.f32.mrf.mxu0
    %v804 = vadd.f32 %v722, %v803
    %805 = vdwg.mxu0
    %806 = vmatprep.subr.mxu0 %v649
    %807 = vmatpush1.msra.mxu0 %v648
    %808 = vmatprep.subr.mxu0 %v645
    %809 = vmatpush1.msra.mxu0 %v644
    %810 = vmatprep.subr.mxu0 %v641
    %811 = vmatpush1.msra.mxu0 %v640
    %812 = vmatprep.subr.mxu0 %v637
    %813 = vmatpush1.msra.mxu0 %v636
    %814 = vmatprep.subr.mxu0 %v633
    %815 = vmatpush1.msra.mxu0 %v632
    %816 = vmatprep.subr.mxu0 %v629
    %817 = vmatpush1.msra.mxu0 %v628
    %818 = vmatprep.subr.mxu0 %v625
    %819 = vmatpush1.msra.mxu0 %v624
    %820 = vmatprep.subr.mxu0 %v621
    %821 = vmatpush1.msra.mxu0 %v620
    %822 = vmatprep.subr.mxu0 %v617
    %823 = vmatpush1.msra.mxu0 %v616
    %824 = vmatprep.subr.mxu0 %v613
    %825 = vmatpush1.msra.mxu0 %v612
    %826 = vmatprep.subr.mxu0 %v609
    %827 = vmatpush1.msra.mxu0 %v608
    %828 = vmatprep.subr.mxu0 %v605
    %829 = vmatpush1.msra.mxu0 %v604
    %830 = vmatprep.subr.mxu0 %v601
    %831 = vmatpush1.msra.mxu0 %v600
    %832 = vmatprep.subr.mxu0 %v597
    %833 = vmatpush1.msra.mxu0 %v596
    %834 = vmatprep.subr.mxu0 %v593
    %835 = vmatpush1.msra.mxu0 %v592
    %836 = vmatprep.subr.mxu0 %v589
    %837 = vmatpush1.msra.mxu0 %v588
    %838 = vmatprep.subr.mxu0 %v713
    %839 = vmatpush2.msra.mxu0 %v712
    %840 = vmatprep.subr.mxu0 %v709
    %841 = vmatpush2.msra.mxu0 %v708
    %842 = vmatprep.subr.mxu0 %v705
    %843 = vmatpush2.msra.mxu0 %v704
    %844 = vmatprep.subr.mxu0 %v701
    %845 = vmatpush2.msra.mxu0 %v700
    %846 = vmatprep.subr.mxu0 %v697
    %847 = vmatpush2.msra.mxu0 %v696
    %848 = vmatprep.subr.mxu0 %v693
    %849 = vmatpush2.msra.mxu0 %v692
    %850 = vmatprep.subr.mxu0 %v689
    %851 = vmatpush2.msra.mxu0 %v688
    %852 = vmatprep.subr.mxu0 %v685
    %853 = vmatpush2.msra.mxu0 %v684
    %854 = vmatprep.subr.mxu0 %v681
    %855 = vmatpush2.msra.mxu0 %v680
    %856 = vmatprep.subr.mxu0 %v677
    %857 = vmatpush2.msra.mxu0 %v676
    %858 = vmatprep.subr.mxu0 %v673
    %859 = vmatpush2.msra.mxu0 %v672
    %860 = vmatprep.subr.mxu0 %v669
    %861 = vmatpush2.msra.mxu0 %v668
    %862 = vmatprep.subr.mxu0 %v665
    %863 = vmatpush2.msra.mxu0 %v664
    %864 = vmatprep.subr.mxu0 %v661
    %865 = vmatpush2.msra.mxu0 %v660
    %866 = vmatprep.subr.mxu0 %v657
    %867 = vmatpush2.msra.mxu0 %v656
    %868 = vmatprep.subr.mxu0 %v653
    %869 = vmatpush2.msra.mxu0 %v652
    %870 = vmatprep.mubr.f32.mxu0 %v351
    %871 = vmatmul.mubr.f32.gmra.mxu0 %v585
    %v872 = vpop.f32.mrf.mxu0
    %v873 = vadd.f32 %v726, %v872
    %v874 = vpop.f32.mrf.mxu0
    %v875 = vadd.f32 %v730, %v874
    %876 = vdwg.mxu0
    %v877 = vmul.f32 %v802, 0.5
    %v878 = vtanh.pop %v877
    %v879 = vmul.f32 %v878, 0.5
    %v880 = vadd.f32 %v879, 0.5
    %v881 = vmul.f32 %v804, 0.5
    %v882 = vtanh.pop %v881
    %v883 = vmul.f32 %v882, 0.5
    %v884 = vadd.f32 %v883, 0.5
    %v885 = vtanh.pop %v873
    %v886 = vmul.f32 %v875, 0.5
    %v887 = vtanh.pop %v886
    %v888 = vmul.f32 %v887, 0.5
    %v889 = vadd.f32 %v888, 0.5
    %v890 = vmul.f32 %v884, %v355
    %v891 = vmul.f32 %v880, %v885
    %v892 = vadd.f32 %v890, %v891
    %v893 = vtanh.pop %v892
    %v894 = vmul.f32 %v889, %v893
    %s895 = scalar_lea.vmem [#allocation8], 1024
    %v896 = vld [vmem:[%s895] sm:$0xff]
    %v897 = vld [vmem:[%s895 + $0x8] sm:$0xff]
    %v898 = vld [vmem:[%s895 + $0x10] sm:$0xff]
    %v899 = vld [vmem:[%s895 + $0x18] sm:$0xff]
    %v900 = vld [vmem:[%s895 + $0x20] sm:$0xff]
    %v901 = vld [vmem:[%s895 + $0x28] sm:$0xff]
    %v902 = vld [vmem:[%s895 + $0x30] sm:$0xff]
    %v903 = vld [vmem:[%s895 + $0x38] sm:$0xff]
    %v904 = vld [vmem:[%s895 + $0x40] sm:$0xff]
    %v905 = vld [vmem:[%s895 + $0x48] sm:$0xff]
    %v906 = vld [vmem:[%s895 + $0x50] sm:$0xff]
    %v907 = vld [vmem:[%s895 + $0x58] sm:$0xff]
    %v908 = vld [vmem:[%s895 + $0x60] sm:$0xff]
    %v909 = vld [vmem:[%s895 + $0x68] sm:$0xff]
    %v910 = vld [vmem:[%s895 + $0x70] sm:$0xff]
    %v911 = vld [vmem:[%s895 + $0x78] sm:$0xff]
    %v912 = vld [vmem:[%s895 + $0x80] sm:$0xff]
    %v913 = vld [vmem:[%s895 + $0x88] sm:$0xff]
    %v914 = vld [vmem:[%s895 + $0x90] sm:$0xff]
    %v915 = vld [vmem:[%s895 + $0x98] sm:$0xff]
    %v916 = vld [vmem:[%s895 + $0xa0] sm:$0xff]
    %v917 = vld [vmem:[%s895 + $0xa8] sm:$0xff]
    %v918 = vld [vmem:[%s895 + $0xb0] sm:$0xff]
    %v919 = vld [vmem:[%s895 + $0xb8] sm:$0xff]
    %v920 = vld [vmem:[%s895 + $0xc0] sm:$0xff]
    %v921 = vld [vmem:[%s895 + $0xc8] sm:$0xff]
    %v922 = vld [vmem:[%s895 + $0xd0] sm:$0xff]
    %v923 = vld [vmem:[%s895 + $0xd8] sm:$0xff]
    %v924 = vld [vmem:[%s895 + $0xe0] sm:$0xff]
    %v925 = vld [vmem:[%s895 + $0xe8] sm:$0xff]
    %v926 = vld [vmem:[%s895 + $0xf0] sm:$0xff]
    %v927 = vld [vmem:[%s895 + $0xf8] sm:$0xff]
    %v928 = vld [vmem:[%s895 + $0x100] sm:$0xff]
    %v929 = vld [vmem:[%s895 + $0x108] sm:$0xff]
    %v930 = vld [vmem:[%s895 + $0x110] sm:$0xff]
    %v931 = vld [vmem:[%s895 + $0x118] sm:$0xff]
    %v932 = vld [vmem:[%s895 + $0x120] sm:$0xff]
    %v933 = vld [vmem:[%s895 + $0x128] sm:$0xff]
    %v934 = vld [vmem:[%s895 + $0x130] sm:$0xff]
    %v935 = vld [vmem:[%s895 + $0x138] sm:$0xff]
    %v936 = vld [vmem:[%s895 + $0x140] sm:$0xff]
    %v937 = vld [vmem:[%s895 + $0x148] sm:$0xff]
    %v938 = vld [vmem:[%s895 + $0x150] sm:$0xff]
    %v939 = vld [vmem:[%s895 + $0x158] sm:$0xff]
    %v940 = vld [vmem:[%s895 + $0x160] sm:$0xff]
    %v941 = vld [vmem:[%s895 + $0x168] sm:$0xff]
    %v942 = vld [vmem:[%s895 + $0x170] sm:$0xff]
    %v943 = vld [vmem:[%s895 + $0x178] sm:$0xff]
    %v944 = vld [vmem:[%s895 + $0x180] sm:$0xff]
    %v945 = vld [vmem:[%s895 + $0x188] sm:$0xff]
    %v946 = vld [vmem:[%s895 + $0x190] sm:$0xff]
    %v947 = vld [vmem:[%s895 + $0x198] sm:$0xff]
    %v948 = vld [vmem:[%s895 + $0x1a0] sm:$0xff]
    %v949 = vld [vmem:[%s895 + $0x1a8] sm:$0xff]
    %v950 = vld [vmem:[%s895 + $0x1b0] sm:$0xff]
    %v951 = vld [vmem:[%s895 + $0x1b8] sm:$0xff]
    %v952 = vld [vmem:[%s895 + $0x1c0] sm:$0xff]
    %v953 = vld [vmem:[%s895 + $0x1c8] sm:$0xff]
    %v954 = vld [vmem:[%s895 + $0x1d0] sm:$0xff]
    %v955 = vld [vmem:[%s895 + $0x1d8] sm:$0xff]
    %v956 = vld [vmem:[%s895 + $0x1e0] sm:$0xff]
    %v957 = vld [vmem:[%s895 + $0x1e8] sm:$0xff]
    %v958 = vld [vmem:[%s895 + $0x1f0] sm:$0xff]
    %v959 = vld [vmem:[%s895 + $0x1f8] sm:$0xff]
    %v960 = vld [vmem:[%s895 + $0x200] sm:$0xff]
    %v961 = vld [vmem:[%s895 + $0x208] sm:$0xff]
    %v962 = vld [vmem:[%s895 + $0x210] sm:$0xff]
    %v963 = vld [vmem:[%s895 + $0x218] sm:$0xff]
    %v964 = vld [vmem:[%s895 + $0x220] sm:$0xff]
    %v965 = vld [vmem:[%s895 + $0x228] sm:$0xff]
    %v966 = vld [vmem:[%s895 + $0x230] sm:$0xff]
    %v967 = vld [vmem:[%s895 + $0x238] sm:$0xff]
    %v968 = vld [vmem:[%s895 + $0x240] sm:$0xff]
    %v969 = vld [vmem:[%s895 + $0x248] sm:$0xff]
    %v970 = vld [vmem:[%s895 + $0x250] sm:$0xff]
    %v971 = vld [vmem:[%s895 + $0x258] sm:$0xff]
    %v972 = vld [vmem:[%s895 + $0x260] sm:$0xff]
    %v973 = vld [vmem:[%s895 + $0x268] sm:$0xff]
    %v974 = vld [vmem:[%s895 + $0x270] sm:$0xff]
    %v975 = vld [vmem:[%s895 + $0x278] sm:$0xff]
    %v976 = vld [vmem:[%s895 + $0x280] sm:$0xff]
    %v977 = vld [vmem:[%s895 + $0x288] sm:$0xff]
    %v978 = vld [vmem:[%s895 + $0x290] sm:$0xff]
    %v979 = vld [vmem:[%s895 + $0x298] sm:$0xff]
    %v980 = vld [vmem:[%s895 + $0x2a0] sm:$0xff]
    %v981 = vld [vmem:[%s895 + $0x2a8] sm:$0xff]
    %v982 = vld [vmem:[%s895 + $0x2b0] sm:$0xff]
    %v983 = vld [vmem:[%s895 + $0x2b8] sm:$0xff]
    %v984 = vld [vmem:[%s895 + $0x2c0] sm:$0xff]
    %v985 = vld [vmem:[%s895 + $0x2c8] sm:$0xff]
    %v986 = vld [vmem:[%s895 + $0x2d0] sm:$0xff]
    %v987 = vld [vmem:[%s895 + $0x2d8] sm:$0xff]
    %v988 = vld [vmem:[%s895 + $0x2e0] sm:$0xff]
    %v989 = vld [vmem:[%s895 + $0x2e8] sm:$0xff]
    %v990 = vld [vmem:[%s895 + $0x2f0] sm:$0xff]
    %v991 = vld [vmem:[%s895 + $0x2f8] sm:$0xff]
    %v992 = vld [vmem:[%s895 + $0x300] sm:$0xff]
    %v993 = vld [vmem:[%s895 + $0x308] sm:$0xff]
    %v994 = vld [vmem:[%s895 + $0x310] sm:$0xff]
    %v995 = vld [vmem:[%s895 + $0x318] sm:$0xff]
    %v996 = vld [vmem:[%s895 + $0x320] sm:$0xff]
    %v997 = vld [vmem:[%s895 + $0x328] sm:$0xff]
    %v998 = vld [vmem:[%s895 + $0x330] sm:$0xff]
    %v999 = vld [vmem:[%s895 + $0x338] sm:$0xff]
    %v1000 = vld [vmem:[%s895 + $0x340] sm:$0xff]
    %v1001 = vld [vmem:[%s895 + $0x348] sm:$0xff]
    %v1002 = vld [vmem:[%s895 + $0x350] sm:$0xff]
    %v1003 = vld [vmem:[%s895 + $0x358] sm:$0xff]
    %v1004 = vld [vmem:[%s895 + $0x360] sm:$0xff]
    %v1005 = vld [vmem:[%s895 + $0x368] sm:$0xff]
    %v1006 = vld [vmem:[%s895 + $0x370] sm:$0xff]
    %v1007 = vld [vmem:[%s895 + $0x378] sm:$0xff]
    %v1008 = vld [vmem:[%s895 + $0x380] sm:$0xff]
    %v1009 = vld [vmem:[%s895 + $0x388] sm:$0xff]
    %v1010 = vld [vmem:[%s895 + $0x390] sm:$0xff]
    %v1011 = vld [vmem:[%s895 + $0x398] sm:$0xff]
    %v1012 = vld [vmem:[%s895 + $0x3a0] sm:$0xff]
    %v1013 = vld [vmem:[%s895 + $0x3a8] sm:$0xff]
    %v1014 = vld [vmem:[%s895 + $0x3b0] sm:$0xff]
    %v1015 = vld [vmem:[%s895 + $0x3b8] sm:$0xff]
    %v1016 = vld [vmem:[%s895 + $0x3c0] sm:$0xff]
    %v1017 = vld [vmem:[%s895 + $0x3c8] sm:$0xff]
    %v1018 = vld [vmem:[%s895 + $0x3d0] sm:$0xff]
    %v1019 = vld [vmem:[%s895 + $0x3d8] sm:$0xff]
    %v1020 = vld [vmem:[%s895 + $0x3e0] sm:$0xff]
    %v1021 = vld [vmem:[%s895 + $0x3e8] sm:$0xff]
    %v1022 = vld [vmem:[%s895 + $0x3f0] sm:$0xff]
    %v1023 = vld [vmem:[%s895 + $0x3f8] sm:$0xff]
    %v1025 = vlaneseq
    %v1026 = vshrl.u32 %v1025, 7
    %v1027 = vsub.s32 0, %v1026
    %v1028 = vrot.slane %v347, %v1027
    %v1029 = vlaneseq
    %v1030 = vshrl.u32 %v1029, 7
    %v1031 = vsub.s32 1, %v1030
    %v1032 = vrot.slane %v347, %v1031
    %v1033 = vlaneseq
    %v1034 = vshrl.u32 %v1033, 7
    %v1035 = vsub.s32 2, %v1034
    %v1036 = vrot.slane %v347, %v1035
    %v1037 = vlaneseq
    %v1038 = vshrl.u32 %v1037, 7
    %v1039 = vsub.s32 3, %v1038
    %v1040 = vrot.slane %v347, %v1039
    %1045 = vmatprep.subr.mxu0 %v957
    %1046 = vmatpush1.msra.mxu0 %v956
    %1047 = vmatprep.subr.mxu0 %v953
    %1048 = vmatpush1.msra.mxu0 %v952
    %1049 = vmatprep.subr.mxu0 %v949
    %1050 = vmatpush1.msra.mxu0 %v948
    %1051 = vmatprep.subr.mxu0 %v945
    %1052 = vmatpush1.msra.mxu0 %v944
    %1053 = vmatprep.subr.mxu0 %v941
    %1054 = vmatpush1.msra.mxu0 %v940
    %1055 = vmatprep.subr.mxu0 %v937
    %1056 = vmatpush1.msra.mxu0 %v936
    %1057 = vmatprep.subr.mxu0 %v933
    %1058 = vmatpush1.msra.mxu0 %v932
    %1059 = vmatprep.subr.mxu0 %v929
    %1060 = vmatpush1.msra.mxu0 %v928
    %1061 = vmatprep.subr.mxu0 %v925
    %1062 = vmatpush1.msra.mxu0 %v924
    %1063 = vmatprep.subr.mxu0 %v921
    %1064 = vmatpush1.msra.mxu0 %v920
    %1065 = vmatprep.subr.mxu0 %v917
    %1066 = vmatpush1.msra.mxu0 %v916
    %1067 = vmatprep.subr.mxu0 %v913
    %1068 = vmatpush1.msra.mxu0 %v912
    %1069 = vmatprep.subr.mxu0 %v909
    %1070 = vmatpush1.msra.mxu0 %v908
    %1071 = vmatprep.subr.mxu0 %v905
    %1072 = vmatpush1.msra.mxu0 %v904
    %1073 = vmatprep.subr.mxu0 %v901
    %1074 = vmatpush1.msra.mxu0 %v900
    %1075 = vmatprep.subr.mxu0 %v897
    %1076 = vmatpush1.msra.mxu0 %v896
    %1077 = vmatprep.subr.mxu0 %v1021
    %1078 = vmatpush2.msra.mxu0 %v1020
    %1079 = vmatprep.subr.mxu0 %v1017
    %1080 = vmatpush2.msra.mxu0 %v1016
    %1081 = vmatprep.subr.mxu0 %v1013
    %1082 = vmatpush2.msra.mxu0 %v1012
    %1083 = vmatprep.subr.mxu0 %v1009
    %1084 = vmatpush2.msra.mxu0 %v1008
    %1085 = vmatprep.subr.mxu0 %v1005
    %1086 = vmatpush2.msra.mxu0 %v1004
    %1087 = vmatprep.subr.mxu0 %v1001
    %1088 = vmatpush2.msra.mxu0 %v1000
    %1089 = vmatprep.subr.mxu0 %v997
    %1090 = vmatpush2.msra.mxu0 %v996
    %1091 = vmatprep.subr.mxu0 %v993
    %1092 = vmatpush2.msra.mxu0 %v992
    %1093 = vmatprep.subr.mxu0 %v989
    %1094 = vmatpush2.msra.mxu0 %v988
    %1095 = vmatprep.subr.mxu0 %v985
    %1096 = vmatpush2.msra.mxu0 %v984
    %1097 = vmatprep.subr.mxu0 %v981
    %1098 = vmatpush2.msra.mxu0 %v980
    %1099 = vmatprep.subr.mxu0 %v977
    %1100 = vmatpush2.msra.mxu0 %v976
    %1101 = vmatprep.subr.mxu0 %v973
    %1102 = vmatpush2.msra.mxu0 %v972
    %1103 = vmatprep.subr.mxu0 %v969
    %1104 = vmatpush2.msra.mxu0 %v968
    %1105 = vmatprep.subr.mxu0 %v965
    %1106 = vmatpush2.msra.mxu0 %v964
    %1107 = vmatprep.subr.mxu0 %v961
    %1108 = vmatpush2.msra.mxu0 %v960
    %1109 = vmatprep.mubr.f32.mxu0 %v352
    %1110 = vmatmul.mubr.f32.gmra.mxu0 %v894
    %v1111 = vpop.f32.mrf.mxu0
    %v1112 = vadd.f32 %v1028, %v1111
    %v1113 = vpop.f32.mrf.mxu0
    %v1114 = vadd.f32 %v1032, %v1113
    %1115 = vdwg.mxu0
    %1116 = vmatprep.subr.mxu0 %v959
    %1117 = vmatpush1.msra.mxu0 %v958
    %1118 = vmatprep.subr.mxu0 %v955
    %1119 = vmatpush1.msra.mxu0 %v954
    %1120 = vmatprep.subr.mxu0 %v951
    %1121 = vmatpush1.msra.mxu0 %v950
    %1122 = vmatprep.subr.mxu0 %v947
    %1123 = vmatpush1.msra.mxu0 %v946
    %1124 = vmatprep.subr.mxu0 %v943
    %1125 = vmatpush1.msra.mxu0 %v942
    %1126 = vmatprep.subr.mxu0 %v939
    %1127 = vmatpush1.msra.mxu0 %v938
    %1128 = vmatprep.subr.mxu0 %v935
    %1129 = vmatpush1.msra.mxu0 %v934
    %1130 = vmatprep.subr.mxu0 %v931
    %1131 = vmatpush1.msra.mxu0 %v930
    %1132 = vmatprep.subr.mxu0 %v927
    %1133 = vmatpush1.msra.mxu0 %v926
    %1134 = vmatprep.subr.mxu0 %v923
    %1135 = vmatpush1.msra.mxu0 %v922
    %1136 = vmatprep.subr.mxu0 %v919
    %1137 = vmatpush1.msra.mxu0 %v918
    %1138 = vmatprep.subr.mxu0 %v915
    %1139 = vmatpush1.msra.mxu0 %v914
    %1140 = vmatprep.subr.mxu0 %v911
    %1141 = vmatpush1.msra.mxu0 %v910
    %1142 = vmatprep.subr.mxu0 %v907
    %1143 = vmatpush1.msra.mxu0 %v906
    %1144 = vmatprep.subr.mxu0 %v903
    %1145 = vmatpush1.msra.mxu0 %v902
    %1146 = vmatprep.subr.mxu0 %v899
    %1147 = vmatpush1.msra.mxu0 %v898
    %1148 = vmatprep.subr.mxu0 %v1023
    %1149 = vmatpush2.msra.mxu0 %v1022
    %1150 = vmatprep.subr.mxu0 %v1019
    %1151 = vmatpush2.msra.mxu0 %v1018
    %1152 = vmatprep.subr.mxu0 %v1015
    %1153 = vmatpush2.msra.mxu0 %v1014
    %1154 = vmatprep.subr.mxu0 %v1011
    %1155 = vmatpush2.msra.mxu0 %v1010
    %1156 = vmatprep.subr.mxu0 %v1007
    %1157 = vmatpush2.msra.mxu0 %v1006
    %1158 = vmatprep.subr.mxu0 %v1003
    %1159 = vmatpush2.msra.mxu0 %v1002
    %1160 = vmatprep.subr.mxu0 %v999
    %1161 = vmatpush2.msra.mxu0 %v998
    %1162 = vmatprep.subr.mxu0 %v995
    %1163 = vmatpush2.msra.mxu0 %v994
    %1164 = vmatprep.subr.mxu0 %v991
    %1165 = vmatpush2.msra.mxu0 %v990
    %1166 = vmatprep.subr.mxu0 %v987
    %1167 = vmatpush2.msra.mxu0 %v986
    %1168 = vmatprep.subr.mxu0 %v983
    %1169 = vmatpush2.msra.mxu0 %v982
    %1170 = vmatprep.subr.mxu0 %v979
    %1171 = vmatpush2.msra.mxu0 %v978
    %1172 = vmatprep.subr.mxu0 %v975
    %1173 = vmatpush2.msra.mxu0 %v974
    %1174 = vmatprep.subr.mxu0 %v971
    %1175 = vmatpush2.msra.mxu0 %v970
    %1176 = vmatprep.subr.mxu0 %v967
    %1177 = vmatpush2.msra.mxu0 %v966
    %1178 = vmatprep.subr.mxu0 %v963
    %1179 = vmatpush2.msra.mxu0 %v962
    %1180 = vmatprep.mubr.f32.mxu0 %v352
    %1181 = vmatmul.mubr.f32.gmra.mxu0 %v894
    %v1182 = vpop.f32.mrf.mxu0
    %v1183 = vadd.f32 %v1036, %v1182
    %v1184 = vpop.f32.mrf.mxu0
    %v1185 = vadd.f32 %v1040, %v1184
    %1186 = vdwg.mxu0
    %v1187 = vmul.f32 %v1112, 0.5
    %v1188 = vtanh.pop %v1187
    %v1189 = vmul.f32 %v1188, 0.5
    %v1190 = vadd.f32 %v1189, 0.5
    %v1191 = vmul.f32 %v1114, 0.5
    %v1192 = vtanh.pop %v1191
    %v1193 = vmul.f32 %v1192, 0.5
    %v1194 = vadd.f32 %v1193, 0.5
    %v1195 = vtanh.pop %v1183
    %v1196 = vmul.f32 %v1185, 0.5
    %v1197 = vtanh.pop %v1196
    %v1198 = vmul.f32 %v1197, 0.5
    %v1199 = vadd.f32 %v1198, 0.5
    %v1200 = vmul.f32 %v1194, %v356
    %v1201 = vmul.f32 %v1190, %v1195
    %v1202 = vadd.f32 %v1200, %v1201
    %v1203 = vtanh.pop %v1202
    %v1204 = vmul.f32 %v1199, %v1203
    %s1205 = scalar_lea.vmem [#allocation8], 2048
    %v1206 = vld [vmem:[%s1205] sm:$0xff]
    %v1207 = vld [vmem:[%s1205 + $0x8] sm:$0xff]
    %v1208 = vld [vmem:[%s1205 + $0x10] sm:$0xff]
    %v1209 = vld [vmem:[%s1205 + $0x18] sm:$0xff]
    %v1210 = vld [vmem:[%s1205 + $0x20] sm:$0xff]
    %v1211 = vld [vmem:[%s1205 + $0x28] sm:$0xff]
    %v1212 = vld [vmem:[%s1205 + $0x30] sm:$0xff]
    %v1213 = vld [vmem:[%s1205 + $0x38] sm:$0xff]
    %v1214 = vld [vmem:[%s1205 + $0x40] sm:$0xff]
    %v1215 = vld [vmem:[%s1205 + $0x48] sm:$0xff]
    %v1216 = vld [vmem:[%s1205 + $0x50] sm:$0xff]
    %v1217 = vld [vmem:[%s1205 + $0x58] sm:$0xff]
    %v1218 = vld [vmem:[%s1205 + $0x60] sm:$0xff]
    %v1219 = vld [vmem:[%s1205 + $0x68] sm:$0xff]
    %v1220 = vld [vmem:[%s1205 + $0x70] sm:$0xff]
    %v1221 = vld [vmem:[%s1205 + $0x78] sm:$0xff]
    %v1222 = vld [vmem:[%s1205 + $0x80] sm:$0xff]
    %v1223 = vld [vmem:[%s1205 + $0x88] sm:$0xff]
    %v1224 = vld [vmem:[%s1205 + $0x90] sm:$0xff]
    %v1225 = vld [vmem:[%s1205 + $0x98] sm:$0xff]
    %v1226 = vld [vmem:[%s1205 + $0xa0] sm:$0xff]
    %v1227 = vld [vmem:[%s1205 + $0xa8] sm:$0xff]
    %v1228 = vld [vmem:[%s1205 + $0xb0] sm:$0xff]
    %v1229 = vld [vmem:[%s1205 + $0xb8] sm:$0xff]
    %v1230 = vld [vmem:[%s1205 + $0xc0] sm:$0xff]
    %v1231 = vld [vmem:[%s1205 + $0xc8] sm:$0xff]
    %v1232 = vld [vmem:[%s1205 + $0xd0] sm:$0xff]
    %v1233 = vld [vmem:[%s1205 + $0xd8] sm:$0xff]
    %v1234 = vld [vmem:[%s1205 + $0xe0] sm:$0xff]
    %v1235 = vld [vmem:[%s1205 + $0xe8] sm:$0xff]
    %v1236 = vld [vmem:[%s1205 + $0xf0] sm:$0xff]
    %v1237 = vld [vmem:[%s1205 + $0xf8] sm:$0xff]
    %v1238 = vld [vmem:[%s1205 + $0x100] sm:$0xff]
    %v1239 = vld [vmem:[%s1205 + $0x108] sm:$0xff]
    %v1240 = vld [vmem:[%s1205 + $0x110] sm:$0xff]
    %v1241 = vld [vmem:[%s1205 + $0x118] sm:$0xff]
    %v1242 = vld [vmem:[%s1205 + $0x120] sm:$0xff]
    %v1243 = vld [vmem:[%s1205 + $0x128] sm:$0xff]
    %v1244 = vld [vmem:[%s1205 + $0x130] sm:$0xff]
    %v1245 = vld [vmem:[%s1205 + $0x138] sm:$0xff]
    %v1246 = vld [vmem:[%s1205 + $0x140] sm:$0xff]
    %v1247 = vld [vmem:[%s1205 + $0x148] sm:$0xff]
    %v1248 = vld [vmem:[%s1205 + $0x150] sm:$0xff]
    %v1249 = vld [vmem:[%s1205 + $0x158] sm:$0xff]
    %v1250 = vld [vmem:[%s1205 + $0x160] sm:$0xff]
    %v1251 = vld [vmem:[%s1205 + $0x168] sm:$0xff]
    %v1252 = vld [vmem:[%s1205 + $0x170] sm:$0xff]
    %v1253 = vld [vmem:[%s1205 + $0x178] sm:$0xff]
    %v1254 = vld [vmem:[%s1205 + $0x180] sm:$0xff]
    %v1255 = vld [vmem:[%s1205 + $0x188] sm:$0xff]
    %v1256 = vld [vmem:[%s1205 + $0x190] sm:$0xff]
    %v1257 = vld [vmem:[%s1205 + $0x198] sm:$0xff]
    %v1258 = vld [vmem:[%s1205 + $0x1a0] sm:$0xff]
    %v1259 = vld [vmem:[%s1205 + $0x1a8] sm:$0xff]
    %v1260 = vld [vmem:[%s1205 + $0x1b0] sm:$0xff]
    %v1261 = vld [vmem:[%s1205 + $0x1b8] sm:$0xff]
    %v1262 = vld [vmem:[%s1205 + $0x1c0] sm:$0xff]
    %v1263 = vld [vmem:[%s1205 + $0x1c8] sm:$0xff]
    %v1264 = vld [vmem:[%s1205 + $0x1d0] sm:$0xff]
    %v1265 = vld [vmem:[%s1205 + $0x1d8] sm:$0xff]
    %v1266 = vld [vmem:[%s1205 + $0x1e0] sm:$0xff]
    %v1267 = vld [vmem:[%s1205 + $0x1e8] sm:$0xff]
    %v1268 = vld [vmem:[%s1205 + $0x1f0] sm:$0xff]
    %v1269 = vld [vmem:[%s1205 + $0x1f8] sm:$0xff]
    %v1270 = vld [vmem:[%s1205 + $0x200] sm:$0xff]
    %v1271 = vld [vmem:[%s1205 + $0x208] sm:$0xff]
    %v1272 = vld [vmem:[%s1205 + $0x210] sm:$0xff]
    %v1273 = vld [vmem:[%s1205 + $0x218] sm:$0xff]
    %v1274 = vld [vmem:[%s1205 + $0x220] sm:$0xff]
    %v1275 = vld [vmem:[%s1205 + $0x228] sm:$0xff]
    %v1276 = vld [vmem:[%s1205 + $0x230] sm:$0xff]
    %v1277 = vld [vmem:[%s1205 + $0x238] sm:$0xff]
    %v1278 = vld [vmem:[%s1205 + $0x240] sm:$0xff]
    %v1279 = vld [vmem:[%s1205 + $0x248] sm:$0xff]
    %v1280 = vld [vmem:[%s1205 + $0x250] sm:$0xff]
    %v1281 = vld [vmem:[%s1205 + $0x258] sm:$0xff]
    %v1282 = vld [vmem:[%s1205 + $0x260] sm:$0xff]
    %v1283 = vld [vmem:[%s1205 + $0x268] sm:$0xff]
    %v1284 = vld [vmem:[%s1205 + $0x270] sm:$0xff]
    %v1285 = vld [vmem:[%s1205 + $0x278] sm:$0xff]
    %v1286 = vld [vmem:[%s1205 + $0x280] sm:$0xff]
    %v1287 = vld [vmem:[%s1205 + $0x288] sm:$0xff]
    %v1288 = vld [vmem:[%s1205 + $0x290] sm:$0xff]
    %v1289 = vld [vmem:[%s1205 + $0x298] sm:$0xff]
    %v1290 = vld [vmem:[%s1205 + $0x2a0] sm:$0xff]
    %v1291 = vld [vmem:[%s1205 + $0x2a8] sm:$0xff]
    %v1292 = vld [vmem:[%s1205 + $0x2b0] sm:$0xff]
    %v1293 = vld [vmem:[%s1205 + $0x2b8] sm:$0xff]
    %v1294 = vld [vmem:[%s1205 + $0x2c0] sm:$0xff]
    %v1295 = vld [vmem:[%s1205 + $0x2c8] sm:$0xff]
    %v1296 = vld [vmem:[%s1205 + $0x2d0] sm:$0xff]
    %v1297 = vld [vmem:[%s1205 + $0x2d8] sm:$0xff]
    %v1298 = vld [vmem:[%s1205 + $0x2e0] sm:$0xff]
    %v1299 = vld [vmem:[%s1205 + $0x2e8] sm:$0xff]
    %v1300 = vld [vmem:[%s1205 + $0x2f0] sm:$0xff]
    %v1301 = vld [vmem:[%s1205 + $0x2f8] sm:$0xff]
    %v1302 = vld [vmem:[%s1205 + $0x300] sm:$0xff]
    %v1303 = vld [vmem:[%s1205 + $0x308] sm:$0xff]
    %v1304 = vld [vmem:[%s1205 + $0x310] sm:$0xff]
    %v1305 = vld [vmem:[%s1205 + $0x318] sm:$0xff]
    %v1306 = vld [vmem:[%s1205 + $0x320] sm:$0xff]
    %v1307 = vld [vmem:[%s1205 + $0x328] sm:$0xff]
    %v1308 = vld [vmem:[%s1205 + $0x330] sm:$0xff]
    %v1309 = vld [vmem:[%s1205 + $0x338] sm:$0xff]
    %v1310 = vld [vmem:[%s1205 + $0x340] sm:$0xff]
    %v1311 = vld [vmem:[%s1205 + $0x348] sm:$0xff]
    %v1312 = vld [vmem:[%s1205 + $0x350] sm:$0xff]
    %v1313 = vld [vmem:[%s1205 + $0x358] sm:$0xff]
    %v1314 = vld [vmem:[%s1205 + $0x360] sm:$0xff]
    %v1315 = vld [vmem:[%s1205 + $0x368] sm:$0xff]
    %v1316 = vld [vmem:[%s1205 + $0x370] sm:$0xff]
    %v1317 = vld [vmem:[%s1205 + $0x378] sm:$0xff]
    %v1318 = vld [vmem:[%s1205 + $0x380] sm:$0xff]
    %v1319 = vld [vmem:[%s1205 + $0x388] sm:$0xff]
    %v1320 = vld [vmem:[%s1205 + $0x390] sm:$0xff]
    %v1321 = vld [vmem:[%s1205 + $0x398] sm:$0xff]
    %v1322 = vld [vmem:[%s1205 + $0x3a0] sm:$0xff]
    %v1323 = vld [vmem:[%s1205 + $0x3a8] sm:$0xff]
    %v1324 = vld [vmem:[%s1205 + $0x3b0] sm:$0xff]
    %v1325 = vld [vmem:[%s1205 + $0x3b8] sm:$0xff]
    %v1326 = vld [vmem:[%s1205 + $0x3c0] sm:$0xff]
    %v1327 = vld [vmem:[%s1205 + $0x3c8] sm:$0xff]
    %v1328 = vld [vmem:[%s1205 + $0x3d0] sm:$0xff]
    %v1329 = vld [vmem:[%s1205 + $0x3d8] sm:$0xff]
    %v1330 = vld [vmem:[%s1205 + $0x3e0] sm:$0xff]
    %v1331 = vld [vmem:[%s1205 + $0x3e8] sm:$0xff]
    %v1332 = vld [vmem:[%s1205 + $0x3f0] sm:$0xff]
    %v1333 = vld [vmem:[%s1205 + $0x3f8] sm:$0xff]
    %v1335 = vlaneseq
    %v1336 = vshrl.u32 %v1335, 7
    %v1337 = vsub.s32 0, %v1336
    %v1338 = vrot.slane %v349, %v1337
    %v1339 = vlaneseq
    %v1340 = vshrl.u32 %v1339, 7
    %v1341 = vsub.s32 1, %v1340
    %v1342 = vrot.slane %v349, %v1341
    %v1343 = vlaneseq
    %v1344 = vshrl.u32 %v1343, 7
    %v1345 = vsub.s32 2, %v1344
    %v1346 = vrot.slane %v349, %v1345
    %v1347 = vlaneseq
    %v1348 = vshrl.u32 %v1347, 7
    %v1349 = vsub.s32 3, %v1348
    %v1350 = vrot.slane %v349, %v1349
    %1355 = vmatprep.subr.mxu0 %v1267
    %1356 = vmatpush1.msra.mxu0 %v1266
    %1357 = vmatprep.subr.mxu0 %v1263
    %1358 = vmatpush1.msra.mxu0 %v1262
    %1359 = vmatprep.subr.mxu0 %v1259
    %1360 = vmatpush1.msra.mxu0 %v1258
    %1361 = vmatprep.subr.mxu0 %v1255
    %1362 = vmatpush1.msra.mxu0 %v1254
    %1363 = vmatprep.subr.mxu0 %v1251
    %1364 = vmatpush1.msra.mxu0 %v1250
    %1365 = vmatprep.subr.mxu0 %v1247
    %1366 = vmatpush1.msra.mxu0 %v1246
    %1367 = vmatprep.subr.mxu0 %v1243
    %1368 = vmatpush1.msra.mxu0 %v1242
    %1369 = vmatprep.subr.mxu0 %v1239
    %1370 = vmatpush1.msra.mxu0 %v1238
    %1371 = vmatprep.subr.mxu0 %v1235
    %1372 = vmatpush1.msra.mxu0 %v1234
    %1373 = vmatprep.subr.mxu0 %v1231
    %1374 = vmatpush1.msra.mxu0 %v1230
    %1375 = vmatprep.subr.mxu0 %v1227
    %1376 = vmatpush1.msra.mxu0 %v1226
    %1377 = vmatprep.subr.mxu0 %v1223
    %1378 = vmatpush1.msra.mxu0 %v1222
    %1379 = vmatprep.subr.mxu0 %v1219
    %1380 = vmatpush1.msra.mxu0 %v1218
    %1381 = vmatprep.subr.mxu0 %v1215
    %1382 = vmatpush1.msra.mxu0 %v1214
    %1383 = vmatprep.subr.mxu0 %v1211
    %1384 = vmatpush1.msra.mxu0 %v1210
    %1385 = vmatprep.subr.mxu0 %v1207
    %1386 = vmatpush1.msra.mxu0 %v1206
    %1387 = vmatprep.subr.mxu0 %v1331
    %1388 = vmatpush2.msra.mxu0 %v1330
    %1389 = vmatprep.subr.mxu0 %v1327
    %1390 = vmatpush2.msra.mxu0 %v1326
    %1391 = vmatprep.subr.mxu0 %v1323
    %1392 = vmatpush2.msra.mxu0 %v1322
    %1393 = vmatprep.subr.mxu0 %v1319
    %1394 = vmatpush2.msra.mxu0 %v1318
    %1395 = vmatprep.subr.mxu0 %v1315
    %1396 = vmatpush2.msra.mxu0 %v1314
    %1397 = vmatprep.subr.mxu0 %v1311
    %1398 = vmatpush2.msra.mxu0 %v1310
    %1399 = vmatprep.subr.mxu0 %v1307
    %1400 = vmatpush2.msra.mxu0 %v1306
    %1401 = vmatprep.subr.mxu0 %v1303
    %1402 = vmatpush2.msra.mxu0 %v1302
    %1403 = vmatprep.subr.mxu0 %v1299
    %1404 = vmatpush2.msra.mxu0 %v1298
    %1405 = vmatprep.subr.mxu0 %v1295
    %1406 = vmatpush2.msra.mxu0 %v1294
    %1407 = vmatprep.subr.mxu0 %v1291
    %1408 = vmatpush2.msra.mxu0 %v1290
    %1409 = vmatprep.subr.mxu0 %v1287
    %1410 = vmatpush2.msra.mxu0 %v1286
    %1411 = vmatprep.subr.mxu0 %v1283
    %1412 = vmatpush2.msra.mxu0 %v1282
    %1413 = vmatprep.subr.mxu0 %v1279
    %1414 = vmatpush2.msra.mxu0 %v1278
    %1415 = vmatprep.subr.mxu0 %v1275
    %1416 = vmatpush2.msra.mxu0 %v1274
    %1417 = vmatprep.subr.mxu0 %v1271
    %1418 = vmatpush2.msra.mxu0 %v1270
    %1419 = vmatprep.mubr.f32.mxu0 %v353
    %1420 = vmatmul.mubr.f32.gmra.mxu0 %v1204
    %v1421 = vpop.f32.mrf.mxu0
    %v1422 = vadd.f32 %v1338, %v1421
    %v1423 = vpop.f32.mrf.mxu0
    %v1424 = vadd.f32 %v1342, %v1423
    %1425 = vdwg.mxu0
    %1426 = vmatprep.subr.mxu0 %v1269
    %1427 = vmatpush1.msra.mxu0 %v1268
    %1428 = vmatprep.subr.mxu0 %v1265
    %1429 = vmatpush1.msra.mxu0 %v1264
    %1430 = vmatprep.subr.mxu0 %v1261
    %1431 = vmatpush1.msra.mxu0 %v1260
    %1432 = vmatprep.subr.mxu0 %v1257
    %1433 = vmatpush1.msra.mxu0 %v1256
    %1434 = vmatprep.subr.mxu0 %v1253
    %1435 = vmatpush1.msra.mxu0 %v1252
    %1436 = vmatprep.subr.mxu0 %v1249
    %1437 = vmatpush1.msra.mxu0 %v1248
    %1438 = vmatprep.subr.mxu0 %v1245
    %1439 = vmatpush1.msra.mxu0 %v1244
    %1440 = vmatprep.subr.mxu0 %v1241
    %1441 = vmatpush1.msra.mxu0 %v1240
    %1442 = vmatprep.subr.mxu0 %v1237
    %1443 = vmatpush1.msra.mxu0 %v1236
    %1444 = vmatprep.subr.mxu0 %v1233
    %1445 = vmatpush1.msra.mxu0 %v1232
    %1446 = vmatprep.subr.mxu0 %v1229
    %1447 = vmatpush1.msra.mxu0 %v1228
    %1448 = vmatprep.subr.mxu0 %v1225
    %1449 = vmatpush1.msra.mxu0 %v1224
    %1450 = vmatprep.subr.mxu0 %v1221
    %1451 = vmatpush1.msra.mxu0 %v1220
    %1452 = vmatprep.subr.mxu0 %v1217
    %1453 = vmatpush1.msra.mxu0 %v1216
    %1454 = vmatprep.subr.mxu0 %v1213
    %1455 = vmatpush1.msra.mxu0 %v1212
    %1456 = vmatprep.subr.mxu0 %v1209
    %1457 = vmatpush1.msra.mxu0 %v1208
    %1458 = vmatprep.subr.mxu0 %v1333
    %1459 = vmatpush2.msra.mxu0 %v1332
    %1460 = vmatprep.subr.mxu0 %v1329
    %1461 = vmatpush2.msra.mxu0 %v1328
    %1462 = vmatprep.subr.mxu0 %v1325
    %1463 = vmatpush2.msra.mxu0 %v1324
    %1464 = vmatprep.subr.mxu0 %v1321
    %1465 = vmatpush2.msra.mxu0 %v1320
    %1466 = vmatprep.subr.mxu0 %v1317
    %1467 = vmatpush2.msra.mxu0 %v1316
    %1468 = vmatprep.subr.mxu0 %v1313
    %1469 = vmatpush2.msra.mxu0 %v1312
    %1470 = vmatprep.subr.mxu0 %v1309
    %1471 = vmatpush2.msra.mxu0 %v1308
    %1472 = vmatprep.subr.mxu0 %v1305
    %1473 = vmatpush2.msra.mxu0 %v1304
    %1474 = vmatprep.subr.mxu0 %v1301
    %1475 = vmatpush2.msra.mxu0 %v1300
    %1476 = vmatprep.subr.mxu0 %v1297
    %1477 = vmatpush2.msra.mxu0 %v1296
    %1478 = vmatprep.subr.mxu0 %v1293
    %1479 = vmatpush2.msra.mxu0 %v1292
    %1480 = vmatprep.subr.mxu0 %v1289
    %1481 = vmatpush2.msra.mxu0 %v1288
    %1482 = vmatprep.subr.mxu0 %v1285
    %1483 = vmatpush2.msra.mxu0 %v1284
    %1484 = vmatprep.subr.mxu0 %v1281
    %1485 = vmatpush2.msra.mxu0 %v1280
    %1486 = vmatprep.subr.mxu0 %v1277
    %1487 = vmatpush2.msra.mxu0 %v1276
    %1488 = vmatprep.subr.mxu0 %v1273
    %1489 = vmatpush2.msra.mxu0 %v1272
    %1490 = vmatprep.mubr.f32.mxu0 %v353
    %1491 = vmatmul.mubr.f32.gmra.mxu0 %v1204
    %v1492 = vpop.f32.mrf.mxu0
    %v1493 = vadd.f32 %v1346, %v1492
    %v1494 = vpop.f32.mrf.mxu0
    %v1495 = vadd.f32 %v1350, %v1494
    %1496 = vdwg.mxu0
    %v1497 = vmul.f32 %v1422, 0.5
    %v1498 = vtanh.pop %v1497
    %v1499 = vmul.f32 %v1498, 0.5
    %v1500 = vadd.f32 %v1499, 0.5
    %v1501 = vmul.f32 %v1424, 0.5
    %v1502 = vtanh.pop %v1501
    %v1503 = vmul.f32 %v1502, 0.5
    %v1504 = vadd.f32 %v1503, 0.5
    %v1505 = vtanh.pop %v1493
    %v1506 = vmul.f32 %v1495, 0.5
    %v1507 = vtanh.pop %v1506
    %v1508 = vmul.f32 %v1507, 0.5
    %v1509 = vadd.f32 %v1508, 0.5
    %v1510 = vmul.f32 %v1504, %v357
    %v1511 = vmul.f32 %v1500, %v1505
    %v1512 = vadd.f32 %v1510, %v1511
    %v1513 = vtanh.pop %v1512
    %v1514 = vmul.f32 %v1509, %v1513
    %1515 = vst [vmem:[#allocation2] sm:$0x1] %v1514
    %v1516 = vld [vmem:[#allocation6] sm:$0xff]
    %v1517 = vld [vmem:[#allocation6 + $0x8] sm:$0xff]
    %v1518 = vld [vmem:[#allocation6 + $0x10] sm:$0xff]
    %v1519 = vld [vmem:[#allocation6 + $0x18] sm:$0xff]
    %v1520 = vld [vmem:[#allocation6 + $0x20] sm:$0xff]
    %v1521 = vld [vmem:[#allocation6 + $0x28] sm:$0xff]
    %v1522 = vld [vmem:[#allocation6 + $0x30] sm:$0xff]
    %v1523 = vld [vmem:[#allocation6 + $0x38] sm:$0xff]
    %v1524 = vld [vmem:[#allocation6 + $0x40] sm:$0xff]
    %v1525 = vld [vmem:[#allocation6 + $0x48] sm:$0xff]
    %v1526 = vld [vmem:[#allocation6 + $0x50] sm:$0xff]
    %v1527 = vld [vmem:[#allocation6 + $0x58] sm:$0xff]
    %v1528 = vld [vmem:[#allocation6 + $0x60] sm:$0xff]
    %v1529 = vld [vmem:[#allocation6 + $0x68] sm:$0xff]
    %v1530 = vld [vmem:[#allocation6 + $0x70] sm:$0xff]
    %v1531 = vld [vmem:[#allocation6 + $0x78] sm:$0xff]
    %v1532 = vld [vmem:[#allocation6 + $0x80] sm:$0xff]
    %v1533 = vld [vmem:[#allocation6 + $0x88] sm:$0xff]
    %v1534 = vld [vmem:[#allocation6 + $0x90] sm:$0xff]
    %v1535 = vld [vmem:[#allocation6 + $0x98] sm:$0xff]
    %v1536 = vld [vmem:[#allocation6 + $0xa0] sm:$0xff]
    %v1537 = vld [vmem:[#allocation6 + $0xa8] sm:$0xff]
    %v1538 = vld [vmem:[#allocation6 + $0xb0] sm:$0xff]
    %v1539 = vld [vmem:[#allocation6 + $0xb8] sm:$0xff]
    %v1540 = vld [vmem:[#allocation6 + $0xc0] sm:$0xff]
    %v1541 = vld [vmem:[#allocation6 + $0xc8] sm:$0xff]
    %v1542 = vld [vmem:[#allocation6 + $0xd0] sm:$0xff]
    %v1543 = vld [vmem:[#allocation6 + $0xd8] sm:$0xff]
    %v1544 = vld [vmem:[#allocation6 + $0xe0] sm:$0xff]
    %v1545 = vld [vmem:[#allocation6 + $0xe8] sm:$0xff]
    %v1546 = vld [vmem:[#allocation6 + $0xf0] sm:$0xff]
    %v1547 = vld [vmem:[#allocation6 + $0xf8] sm:$0xff]
    %v1548 = vld [vmem:[#allocation6 + $0x100] sm:$0xff]
    %v1549 = vld [vmem:[#allocation6 + $0x108] sm:$0xff]
    %v1550 = vld [vmem:[#allocation6 + $0x110] sm:$0xff]
    %v1551 = vld [vmem:[#allocation6 + $0x118] sm:$0xff]
    %v1552 = vld [vmem:[#allocation6 + $0x120] sm:$0xff]
    %v1553 = vld [vmem:[#allocation6 + $0x128] sm:$0xff]
    %v1554 = vld [vmem:[#allocation6 + $0x130] sm:$0xff]
    %v1555 = vld [vmem:[#allocation6 + $0x138] sm:$0xff]
    %v1556 = vld [vmem:[#allocation6 + $0x140] sm:$0xff]
    %v1557 = vld [vmem:[#allocation6 + $0x148] sm:$0xff]
    %v1558 = vld [vmem:[#allocation6 + $0x150] sm:$0xff]
    %v1559 = vld [vmem:[#allocation6 + $0x158] sm:$0xff]
    %v1560 = vld [vmem:[#allocation6 + $0x160] sm:$0xff]
    %v1561 = vld [vmem:[#allocation6 + $0x168] sm:$0xff]
    %v1562 = vld [vmem:[#allocation6 + $0x170] sm:$0xff]
    %v1563 = vld [vmem:[#allocation6 + $0x178] sm:$0xff]
    %v1564 = vld [vmem:[#allocation6 + $0x180] sm:$0xff]
    %v1565 = vld [vmem:[#allocation6 + $0x188] sm:$0xff]
    %v1566 = vld [vmem:[#allocation6 + $0x190] sm:$0xff]
    %v1567 = vld [vmem:[#allocation6 + $0x198] sm:$0xff]
    %v1568 = vld [vmem:[#allocation6 + $0x1a0] sm:$0xff]
    %v1569 = vld [vmem:[#allocation6 + $0x1a8] sm:$0xff]
    %v1570 = vld [vmem:[#allocation6 + $0x1b0] sm:$0xff]
    %v1571 = vld [vmem:[#allocation6 + $0x1b8] sm:$0xff]
    %v1572 = vld [vmem:[#allocation6 + $0x1c0] sm:$0xff]
    %v1573 = vld [vmem:[#allocation6 + $0x1c8] sm:$0xff]
    %v1574 = vld [vmem:[#allocation6 + $0x1d0] sm:$0xff]
    %v1575 = vld [vmem:[#allocation6 + $0x1d8] sm:$0xff]
    %v1576 = vld [vmem:[#allocation6 + $0x1e0] sm:$0xff]
    %v1577 = vld [vmem:[#allocation6 + $0x1e8] sm:$0xff]
    %v1578 = vld [vmem:[#allocation6 + $0x1f0] sm:$0xff]
    %v1579 = vld [vmem:[#allocation6 + $0x1f8] sm:$0xff]
    %1580 = vmatprep.subr.mxu0 %v1577
    %1581 = vmatpush1.msra.mxu0 %v1576
    %1582 = vmatprep.subr.mxu0 %v1573
    %1583 = vmatpush1.msra.mxu0 %v1572
    %1584 = vmatprep.subr.mxu0 %v1569
    %1585 = vmatpush1.msra.mxu0 %v1568
    %1586 = vmatprep.subr.mxu0 %v1565
    %1587 = vmatpush1.msra.mxu0 %v1564
    %1588 = vmatprep.subr.mxu0 %v1561
    %1589 = vmatpush1.msra.mxu0 %v1560
    %1590 = vmatprep.subr.mxu0 %v1557
    %1591 = vmatpush1.msra.mxu0 %v1556
    %1592 = vmatprep.subr.mxu0 %v1553
    %1593 = vmatpush1.msra.mxu0 %v1552
    %1594 = vmatprep.subr.mxu0 %v1549
    %1595 = vmatpush1.msra.mxu0 %v1548
    %1596 = vmatprep.subr.mxu0 %v1545
    %1597 = vmatpush1.msra.mxu0 %v1544
    %1598 = vmatprep.subr.mxu0 %v1541
    %1599 = vmatpush1.msra.mxu0 %v1540
    %1600 = vmatprep.subr.mxu0 %v1537
    %1601 = vmatpush1.msra.mxu0 %v1536
    %1602 = vmatprep.subr.mxu0 %v1533
    %1603 = vmatpush1.msra.mxu0 %v1532
    %1604 = vmatprep.subr.mxu0 %v1529
    %1605 = vmatpush1.msra.mxu0 %v1528
    %1606 = vmatprep.subr.mxu0 %v1525
    %1607 = vmatpush1.msra.mxu0 %v1524
    %1608 = vmatprep.subr.mxu0 %v1521
    %1609 = vmatpush1.msra.mxu0 %v1520
    %1610 = vmatprep.subr.mxu0 %v1517
    %1611 = vmatpush1.msra.mxu0 %v1516
    %1612 = vmatprep.subr.mxu0 0.0
    %1613 = vmatpush2.msra.mxu0 0.0
    %1614 = vmatprep.subr.mxu0 0.0
    %1615 = vmatpush2.msra.mxu0 0.0
    %1616 = vmatprep.subr.mxu0 0.0
    %1617 = vmatpush2.msra.mxu0 0.0
    %1618 = vmatprep.subr.mxu0 0.0
    %1619 = vmatpush2.msra.mxu0 0.0
    %1620 = vmatprep.subr.mxu0 0.0
    %1621 = vmatpush2.msra.mxu0 0.0
    %1622 = vmatprep.subr.mxu0 0.0
    %1623 = vmatpush2.msra.mxu0 0.0
    %1624 = vmatprep.subr.mxu0 0.0
    %1625 = vmatpush2.msra.mxu0 0.0
    %1626 = vmatprep.subr.mxu0 0.0
    %1627 = vmatpush2.msra.mxu0 0.0
    %1628 = vmatprep.subr.mxu0 0.0
    %1629 = vmatpush2.msra.mxu0 0.0
    %1630 = vmatprep.subr.mxu0 0.0
    %1631 = vmatpush2.msra.mxu0 0.0
    %1632 = vmatprep.subr.mxu0 0.0
    %1633 = vmatpush2.msra.mxu0 0.0
    %1634 = vmatprep.subr.mxu0 0.0
    %1635 = vmatpush2.msra.mxu0 0.0
    %1636 = vmatprep.subr.mxu0 0.0
    %1637 = vmatpush2.msra.mxu0 0.0
    %1638 = vmatprep.subr.mxu0 0.0
    %1639 = vmatpush2.msra.mxu0 0.0
    %1640 = vmatprep.subr.mxu0 0.0
    %1641 = vmatpush2.msra.mxu0 0.0
    %1642 = vmatprep.subr.mxu0 0.0
    %1643 = vmatpush2.msra.mxu0 0.0
    %1644 = vmatprep.mubr.f32.mxu0 0.0
    %1645 = vmatmul.mubr.f32.gmra.mxu0 %v585
    %v1646 = vpop.f32.mrf.mxu0
    %v1647 = vadd.f32 0.0, %v1646
    %v1648 = vpop.f32.mrf.mxu0
    %v1649 = vadd.f32 0.0, %v1648
    %1650 = vdwg.mxu0
    %1651 = vmatprep.subr.mxu0 %v1579
    %1652 = vmatpush1.msra.mxu0 %v1578
    %1653 = vmatprep.subr.mxu0 %v1575
    %1654 = vmatpush1.msra.mxu0 %v1574
    %1655 = vmatprep.subr.mxu0 %v1571
    %1656 = vmatpush1.msra.mxu0 %v1570
    %1657 = vmatprep.subr.mxu0 %v1567
    %1658 = vmatpush1.msra.mxu0 %v1566
    %1659 = vmatprep.subr.mxu0 %v1563
    %1660 = vmatpush1.msra.mxu0 %v1562
    %1661 = vmatprep.subr.mxu0 %v1559
    %1662 = vmatpush1.msra.mxu0 %v1558
    %1663 = vmatprep.subr.mxu0 %v1555
    %1664 = vmatpush1.msra.mxu0 %v1554
    %1665 = vmatprep.subr.mxu0 %v1551
    %1666 = vmatpush1.msra.mxu0 %v1550
    %1667 = vmatprep.subr.mxu0 %v1547
    %1668 = vmatpush1.msra.mxu0 %v1546
    %1669 = vmatprep.subr.mxu0 %v1543
    %1670 = vmatpush1.msra.mxu0 %v1542
    %1671 = vmatprep.subr.mxu0 %v1539
    %1672 = vmatpush1.msra.mxu0 %v1538
    %1673 = vmatprep.subr.mxu0 %v1535
    %1674 = vmatpush1.msra.mxu0 %v1534
    %1675 = vmatprep.subr.mxu0 %v1531
    %1676 = vmatpush1.msra.mxu0 %v1530
    %1677 = vmatprep.subr.mxu0 %v1527
    %1678 = vmatpush1.msra.mxu0 %v1526
    %1679 = vmatprep.subr.mxu0 %v1523
    %1680 = vmatpush1.msra.mxu0 %v1522
    %1681 = vmatprep.subr.mxu0 %v1519
    %1682 = vmatpush1.msra.mxu0 %v1518
    %1683 = vmatprep.subr.mxu0 0.0
    %1684 = vmatpush2.msra.mxu0 0.0
    %1685 = vmatprep.subr.mxu0 0.0
    %1686 = vmatpush2.msra.mxu0 0.0
    %1687 = vmatprep.subr.mxu0 0.0
    %1688 = vmatpush2.msra.mxu0 0.0
    %1689 = vmatprep.subr.mxu0 0.0
    %1690 = vmatpush2.msra.mxu0 0.0
    %1691 = vmatprep.subr.mxu0 0.0
    %1692 = vmatpush2.msra.mxu0 0.0
    %1693 = vmatprep.subr.mxu0 0.0
    %1694 = vmatpush2.msra.mxu0 0.0
    %1695 = vmatprep.subr.mxu0 0.0
    %1696 = vmatpush2.msra.mxu0 0.0
    %1697 = vmatprep.subr.mxu0 0.0
    %1698 = vmatpush2.msra.mxu0 0.0
    %1699 = vmatprep.subr.mxu0 0.0
    %1700 = vmatpush2.msra.mxu0 0.0
    %1701 = vmatprep.subr.mxu0 0.0
    %1702 = vmatpush2.msra.mxu0 0.0
    %1703 = vmatprep.subr.mxu0 0.0
    %1704 = vmatpush2.msra.mxu0 0.0
    %1705 = vmatprep.subr.mxu0 0.0
    %1706 = vmatpush2.msra.mxu0 0.0
    %1707 = vmatprep.subr.mxu0 0.0
    %1708 = vmatpush2.msra.mxu0 0.0
    %1709 = vmatprep.subr.mxu0 0.0
    %1710 = vmatpush2.msra.mxu0 0.0
    %1711 = vmatprep.subr.mxu0 0.0
    %1712 = vmatpush2.msra.mxu0 0.0
    %1713 = vmatprep.subr.mxu0 0.0
    %1714 = vmatpush2.msra.mxu0 0.0
    %1715 = vmatprep.mubr.f32.mxu0 0.0
    %1716 = vmatmul.mubr.f32.gmra.mxu0 %v585
    %v1717 = vpop.f32.mrf.mxu0
    %v1718 = vadd.f32 0.0, %v1717
    %v1719 = vpop.f32.mrf.mxu0
    %v1720 = vadd.f32 0.0, %v1719
    %1721 = vdwg.mxu0
    %v1726 = vrot.slane %v1647, 7
    %v1727 = vrot.slane %v1649, 7
    %v1728 = vrot.slane %v1718, 7
    %v1729 = vrot.slane %v1720, 7
    %v1734 = vadd.f32 %v269, %v1726
    %v1735 = vadd.f32 %v271, %v1727
    %v1736 = vadd.f32 %v340, %v1728
    %v1737 = vadd.f32 %v342, %v1729
    %v1738 = vmul.f32 %v1734, 0.5
    %v1739 = vtanh.pop %v1738
    %v1740 = vmul.f32 %v1739, 0.5
    %v1741 = vadd.f32 %v1740, 0.5
    %v1742 = vmul.f32 %v1735, 0.5
    %v1743 = vtanh.pop %v1742
    %v1744 = vmul.f32 %v1743, 0.5
    %v1745 = vadd.f32 %v1744, 0.5
    %v1746 = vtanh.pop %v1736
    %v1747 = vmul.f32 %v1737, 0.5
    %v1748 = vtanh.pop %v1747
    %v1749 = vmul.f32 %v1748, 0.5
    %v1750 = vadd.f32 %v1749, 0.5
    %v1752 = vrot.slane %v583, 7
    %v1754 = vmul.f32 %v1745, %v1752
    %v1755 = vmul.f32 %v1741, %v1746
    %v1756 = vadd.f32 %v1754, %v1755
    %v1757 = vtanh.pop %v1756
    %v1758 = vmul.f32 %v1750, %v1757
    %v1760 = vrot.slane %v894, 7
    %v1761 = vld [vmem:[#allocation8] sm:$0xff]
    %v1762 = vld [vmem:[#allocation8 + $0x8] sm:$0xff]
    %v1763 = vld [vmem:[#allocation8 + $0x10] sm:$0xff]
    %v1764 = vld [vmem:[#allocation8 + $0x18] sm:$0xff]
    %v1765 = vld [vmem:[#allocation8 + $0x20] sm:$0xff]
    %v1766 = vld [vmem:[#allocation8 + $0x28] sm:$0xff]
    %v1767 = vld [vmem:[#allocation8 + $0x30] sm:$0xff]
    %v1768 = vld [vmem:[#allocation8 + $0x38] sm:$0xff]
    %v1769 = vld [vmem:[#allocation8 + $0x40] sm:$0xff]
    %v1770 = vld [vmem:[#allocation8 + $0x48] sm:$0xff]
    %v1771 = vld [vmem:[#allocation8 + $0x50] sm:$0xff]
    %v1772 = vld [vmem:[#allocation8 + $0x58] sm:$0xff]
    %v1773 = vld [vmem:[#allocation8 + $0x60] sm:$0xff]
    %v1774 = vld [vmem:[#allocation8 + $0x68] sm:$0xff]
    %v1775 = vld [vmem:[#allocation8 + $0x70] sm:$0xff]
    %v1776 = vld [vmem:[#allocation8 + $0x78] sm:$0xff]
    %v1777 = vld [vmem:[#allocation8 + $0x80] sm:$0xff]
    %v1778 = vld [vmem:[#allocation8 + $0x88] sm:$0xff]
    %v1779 = vld [vmem:[#allocation8 + $0x90] sm:$0xff]
    %v1780 = vld [vmem:[#allocation8 + $0x98] sm:$0xff]
    %v1781 = vld [vmem:[#allocation8 + $0xa0] sm:$0xff]
    %v1782 = vld [vmem:[#allocation8 + $0xa8] sm:$0xff]
    %v1783 = vld [vmem:[#allocation8 + $0xb0] sm:$0xff]
    %v1784 = vld [vmem:[#allocation8 + $0xb8] sm:$0xff]
    %v1785 = vld [vmem:[#allocation8 + $0xc0] sm:$0xff]
    %v1786 = vld [vmem:[#allocation8 + $0xc8] sm:$0xff]
    %v1787 = vld [vmem:[#allocation8 + $0xd0] sm:$0xff]
    %v1788 = vld [vmem:[#allocation8 + $0xd8] sm:$0xff]
    %v1789 = vld [vmem:[#allocation8 + $0xe0] sm:$0xff]
    %v1790 = vld [vmem:[#allocation8 + $0xe8] sm:$0xff]
    %v1791 = vld [vmem:[#allocation8 + $0xf0] sm:$0xff]
    %v1792 = vld [vmem:[#allocation8 + $0xf8] sm:$0xff]
    %v1793 = vld [vmem:[#allocation8 + $0x100] sm:$0xff]
    %v1794 = vld [vmem:[#allocation8 + $0x108] sm:$0xff]
    %v1795 = vld [vmem:[#allocation8 + $0x110] sm:$0xff]
    %v1796 = vld [vmem:[#allocation8 + $0x118] sm:$0xff]
    %v1797 = vld [vmem:[#allocation8 + $0x120] sm:$0xff]
    %v1798 = vld [vmem:[#allocation8 + $0x128] sm:$0xff]
    %v1799 = vld [vmem:[#allocation8 + $0x130] sm:$0xff]
    %v1800 = vld [vmem:[#allocation8 + $0x138] sm:$0xff]
    %v1801 = vld [vmem:[#allocation8 + $0x140] sm:$0xff]
    %v1802 = vld [vmem:[#allocation8 + $0x148] sm:$0xff]
    %v1803 = vld [vmem:[#allocation8 + $0x150] sm:$0xff]
    %v1804 = vld [vmem:[#allocation8 + $0x158] sm:$0xff]
    %v1805 = vld [vmem:[#allocation8 + $0x160] sm:$0xff]
    %v1806 = vld [vmem:[#allocation8 + $0x168] sm:$0xff]
    %v1807 = vld [vmem:[#allocation8 + $0x170] sm:$0xff]
    %v1808 = vld [vmem:[#allocation8 + $0x178] sm:$0xff]
    %v1809 = vld [vmem:[#allocation8 + $0x180] sm:$0xff]
    %v1810 = vld [vmem:[#allocation8 + $0x188] sm:$0xff]
    %v1811 = vld [vmem:[#allocation8 + $0x190] sm:$0xff]
    %v1812 = vld [vmem:[#allocation8 + $0x198] sm:$0xff]
    %v1813 = vld [vmem:[#allocation8 + $0x1a0] sm:$0xff]
    %v1814 = vld [vmem:[#allocation8 + $0x1a8] sm:$0xff]
    %v1815 = vld [vmem:[#allocation8 + $0x1b0] sm:$0xff]
    %v1816 = vld [vmem:[#allocation8 + $0x1b8] sm:$0xff]
    %v1817 = vld [vmem:[#allocation8 + $0x1c0] sm:$0xff]
    %v1818 = vld [vmem:[#allocation8 + $0x1c8] sm:$0xff]
    %v1819 = vld [vmem:[#allocation8 + $0x1d0] sm:$0xff]
    %v1820 = vld [vmem:[#allocation8 + $0x1d8] sm:$0xff]
    %v1821 = vld [vmem:[#allocation8 + $0x1e0] sm:$0xff]
    %v1822 = vld [vmem:[#allocation8 + $0x1e8] sm:$0xff]
    %v1823 = vld [vmem:[#allocation8 + $0x1f0] sm:$0xff]
    %v1824 = vld [vmem:[#allocation8 + $0x1f8] sm:$0xff]
    %v1825 = vld [vmem:[#allocation8 + $0x200] sm:$0xff]
    %v1826 = vld [vmem:[#allocation8 + $0x208] sm:$0xff]
    %v1827 = vld [vmem:[#allocation8 + $0x210] sm:$0xff]
    %v1828 = vld [vmem:[#allocation8 + $0x218] sm:$0xff]
    %v1829 = vld [vmem:[#allocation8 + $0x220] sm:$0xff]
    %v1830 = vld [vmem:[#allocation8 + $0x228] sm:$0xff]
    %v1831 = vld [vmem:[#allocation8 + $0x230] sm:$0xff]
    %v1832 = vld [vmem:[#allocation8 + $0x238] sm:$0xff]
    %v1833 = vld [vmem:[#allocation8 + $0x240] sm:$0xff]
    %v1834 = vld [vmem:[#allocation8 + $0x248] sm:$0xff]
    %v1835 = vld [vmem:[#allocation8 + $0x250] sm:$0xff]
    %v1836 = vld [vmem:[#allocation8 + $0x258] sm:$0xff]
    %v1837 = vld [vmem:[#allocation8 + $0x260] sm:$0xff]
    %v1838 = vld [vmem:[#allocation8 + $0x268] sm:$0xff]
    %v1839 = vld [vmem:[#allocation8 + $0x270] sm:$0xff]
    %v1840 = vld [vmem:[#allocation8 + $0x278] sm:$0xff]
    %v1841 = vld [vmem:[#allocation8 + $0x280] sm:$0xff]
    %v1842 = vld [vmem:[#allocation8 + $0x288] sm:$0xff]
    %v1843 = vld [vmem:[#allocation8 + $0x290] sm:$0xff]
    %v1844 = vld [vmem:[#allocation8 + $0x298] sm:$0xff]
    %v1845 = vld [vmem:[#allocation8 + $0x2a0] sm:$0xff]
    %v1846 = vld [vmem:[#allocation8 + $0x2a8] sm:$0xff]
    %v1847 = vld [vmem:[#allocation8 + $0x2b0] sm:$0xff]
    %v1848 = vld [vmem:[#allocation8 + $0x2b8] sm:$0xff]
    %v1849 = vld [vmem:[#allocation8 + $0x2c0] sm:$0xff]
    %v1850 = vld [vmem:[#allocation8 + $0x2c8] sm:$0xff]
    %v1851 = vld [vmem:[#allocation8 + $0x2d0] sm:$0xff]
    %v1852 = vld [vmem:[#allocation8 + $0x2d8] sm:$0xff]
    %v1853 = vld [vmem:[#allocation8 + $0x2e0] sm:$0xff]
    %v1854 = vld [vmem:[#allocation8 + $0x2e8] sm:$0xff]
    %v1855 = vld [vmem:[#allocation8 + $0x2f0] sm:$0xff]
    %v1856 = vld [vmem:[#allocation8 + $0x2f8] sm:$0xff]
    %v1857 = vld [vmem:[#allocation8 + $0x300] sm:$0xff]
    %v1858 = vld [vmem:[#allocation8 + $0x308] sm:$0xff]
    %v1859 = vld [vmem:[#allocation8 + $0x310] sm:$0xff]
    %v1860 = vld [vmem:[#allocation8 + $0x318] sm:$0xff]
    %v1861 = vld [vmem:[#allocation8 + $0x320] sm:$0xff]
    %v1862 = vld [vmem:[#allocation8 + $0x328] sm:$0xff]
    %v1863 = vld [vmem:[#allocation8 + $0x330] sm:$0xff]
    %v1864 = vld [vmem:[#allocation8 + $0x338] sm:$0xff]
    %v1865 = vld [vmem:[#allocation8 + $0x340] sm:$0xff]
    %v1866 = vld [vmem:[#allocation8 + $0x348] sm:$0xff]
    %v1867 = vld [vmem:[#allocation8 + $0x350] sm:$0xff]
    %v1868 = vld [vmem:[#allocation8 + $0x358] sm:$0xff]
    %v1869 = vld [vmem:[#allocation8 + $0x360] sm:$0xff]
    %v1870 = vld [vmem:[#allocation8 + $0x368] sm:$0xff]
    %v1871 = vld [vmem:[#allocation8 + $0x370] sm:$0xff]
    %v1872 = vld [vmem:[#allocation8 + $0x378] sm:$0xff]
    %v1873 = vld [vmem:[#allocation8 + $0x380] sm:$0xff]
    %v1874 = vld [vmem:[#allocation8 + $0x388] sm:$0xff]
    %v1875 = vld [vmem:[#allocation8 + $0x390] sm:$0xff]
    %v1876 = vld [vmem:[#allocation8 + $0x398] sm:$0xff]
    %v1877 = vld [vmem:[#allocation8 + $0x3a0] sm:$0xff]
    %v1878 = vld [vmem:[#allocation8 + $0x3a8] sm:$0xff]
    %v1879 = vld [vmem:[#allocation8 + $0x3b0] sm:$0xff]
    %v1880 = vld [vmem:[#allocation8 + $0x3b8] sm:$0xff]
    %v1881 = vld [vmem:[#allocation8 + $0x3c0] sm:$0xff]
    %v1882 = vld [vmem:[#allocation8 + $0x3c8] sm:$0xff]
    %v1883 = vld [vmem:[#allocation8 + $0x3d0] sm:$0xff]
    %v1884 = vld [vmem:[#allocation8 + $0x3d8] sm:$0xff]
    %v1885 = vld [vmem:[#allocation8 + $0x3e0] sm:$0xff]
    %v1886 = vld [vmem:[#allocation8 + $0x3e8] sm:$0xff]
    %v1887 = vld [vmem:[#allocation8 + $0x3f0] sm:$0xff]
    %v1888 = vld [vmem:[#allocation8 + $0x3f8] sm:$0xff]
    %v1890 = vrot.slane %v1758, 1
    %v1891 = vrot.slane %v1760, 1
    %1894 = vmatprep.subr.mxu0 %v1822
    %1895 = vmatpush1.msra.mxu0 %v1821
    %1896 = vmatprep.subr.mxu0 %v1818
    %1897 = vmatpush1.msra.mxu0 %v1817
    %1898 = vmatprep.subr.mxu0 %v1814
    %1899 = vmatpush1.msra.mxu0 %v1813
    %1900 = vmatprep.subr.mxu0 %v1810
    %1901 = vmatpush1.msra.mxu0 %v1809
    %1902 = vmatprep.subr.mxu0 %v1806
    %1903 = vmatpush1.msra.mxu0 %v1805
    %1904 = vmatprep.subr.mxu0 %v1802
    %1905 = vmatpush1.msra.mxu0 %v1801
    %1906 = vmatprep.subr.mxu0 %v1798
    %1907 = vmatpush1.msra.mxu0 %v1797
    %1908 = vmatprep.subr.mxu0 %v1794
    %1909 = vmatpush1.msra.mxu0 %v1793
    %1910 = vmatprep.subr.mxu0 %v1790
    %1911 = vmatpush1.msra.mxu0 %v1789
    %1912 = vmatprep.subr.mxu0 %v1786
    %1913 = vmatpush1.msra.mxu0 %v1785
    %1914 = vmatprep.subr.mxu0 %v1782
    %1915 = vmatpush1.msra.mxu0 %v1781
    %1916 = vmatprep.subr.mxu0 %v1778
    %1917 = vmatpush1.msra.mxu0 %v1777
    %1918 = vmatprep.subr.mxu0 %v1774
    %1919 = vmatpush1.msra.mxu0 %v1773
    %1920 = vmatprep.subr.mxu0 %v1770
    %1921 = vmatpush1.msra.mxu0 %v1769
    %1922 = vmatprep.subr.mxu0 %v1766
    %1923 = vmatpush1.msra.mxu0 %v1765
    %1924 = vmatprep.subr.mxu0 %v1762
    %1925 = vmatpush1.msra.mxu0 %v1761
    %1926 = vmatprep.subr.mxu0 %v1886
    %1927 = vmatpush2.msra.mxu0 %v1885
    %1928 = vmatprep.subr.mxu0 %v1882
    %1929 = vmatpush2.msra.mxu0 %v1881
    %1930 = vmatprep.subr.mxu0 %v1878
    %1931 = vmatpush2.msra.mxu0 %v1877
    %1932 = vmatprep.subr.mxu0 %v1874
    %1933 = vmatpush2.msra.mxu0 %v1873
    %1934 = vmatprep.subr.mxu0 %v1870
    %1935 = vmatpush2.msra.mxu0 %v1869
    %1936 = vmatprep.subr.mxu0 %v1866
    %1937 = vmatpush2.msra.mxu0 %v1865
    %1938 = vmatprep.subr.mxu0 %v1862
    %1939 = vmatpush2.msra.mxu0 %v1861
    %1940 = vmatprep.subr.mxu0 %v1858
    %1941 = vmatpush2.msra.mxu0 %v1857
    %1942 = vmatprep.subr.mxu0 %v1854
    %1943 = vmatpush2.msra.mxu0 %v1853
    %1944 = vmatprep.subr.mxu0 %v1850
    %1945 = vmatpush2.msra.mxu0 %v1849
    %1946 = vmatprep.subr.mxu0 %v1846
    %1947 = vmatpush2.msra.mxu0 %v1845
    %1948 = vmatprep.subr.mxu0 %v1842
    %1949 = vmatpush2.msra.mxu0 %v1841
    %1950 = vmatprep.subr.mxu0 %v1838
    %1951 = vmatpush2.msra.mxu0 %v1837
    %1952 = vmatprep.subr.mxu0 %v1834
    %1953 = vmatpush2.msra.mxu0 %v1833
    %1954 = vmatprep.subr.mxu0 %v1830
    %1955 = vmatpush2.msra.mxu0 %v1829
    %1956 = vmatprep.subr.mxu0 %v1826
    %1957 = vmatpush2.msra.mxu0 %v1825
    %1958 = vmatprep.mubr.f32.mxu0 %v1891
    %1959 = vmatmul.mubr.f32.gmra.mxu0 %v1890
    %v1960 = vpop.f32.mrf.mxu0
    %v1961 = vadd.f32 %v718, %v1960
    %v1962 = vpop.f32.mrf.mxu0
    %v1963 = vadd.f32 %v722, %v1962
    %1964 = vdwg.mxu0
    %1965 = vmatprep.subr.mxu0 %v1824
    %1966 = vmatpush1.msra.mxu0 %v1823
    %1967 = vmatprep.subr.mxu0 %v1820
    %1968 = vmatpush1.msra.mxu0 %v1819
    %1969 = vmatprep.subr.mxu0 %v1816
    %1970 = vmatpush1.msra.mxu0 %v1815
    %1971 = vmatprep.subr.mxu0 %v1812
    %1972 = vmatpush1.msra.mxu0 %v1811
    %1973 = vmatprep.subr.mxu0 %v1808
    %1974 = vmatpush1.msra.mxu0 %v1807
    %1975 = vmatprep.subr.mxu0 %v1804
    %1976 = vmatpush1.msra.mxu0 %v1803
    %1977 = vmatprep.subr.mxu0 %v1800
    %1978 = vmatpush1.msra.mxu0 %v1799
    %1979 = vmatprep.subr.mxu0 %v1796
    %1980 = vmatpush1.msra.mxu0 %v1795
    %1981 = vmatprep.subr.mxu0 %v1792
    %1982 = vmatpush1.msra.mxu0 %v1791
    %1983 = vmatprep.subr.mxu0 %v1788
    %1984 = vmatpush1.msra.mxu0 %v1787
    %1985 = vmatprep.subr.mxu0 %v1784
    %1986 = vmatpush1.msra.mxu0 %v1783
    %1987 = vmatprep.subr.mxu0 %v1780
    %1988 = vmatpush1.msra.mxu0 %v1779
    %1989 = vmatprep.subr.mxu0 %v1776
    %1990 = vmatpush1.msra.mxu0 %v1775
    %1991 = vmatprep.subr.mxu0 %v1772
    %1992 = vmatpush1.msra.mxu0 %v1771
    %1993 = vmatprep.subr.mxu0 %v1768
    %1994 = vmatpush1.msra.mxu0 %v1767
    %1995 = vmatprep.subr.mxu0 %v1764
    %1996 = vmatpush1.msra.mxu0 %v1763
    %1997 = vmatprep.subr.mxu0 %v1888
    %1998 = vmatpush2.msra.mxu0 %v1887
    %1999 = vmatprep.subr.mxu0 %v1884
    %2000 = vmatpush2.msra.mxu0 %v1883
    %2001 = vmatprep.subr.mxu0 %v1880
    %2002 = vmatpush2.msra.mxu0 %v1879
    %2003 = vmatprep.subr.mxu0 %v1876
    %2004 = vmatpush2.msra.mxu0 %v1875
    %2005 = vmatprep.subr.mxu0 %v1872
    %2006 = vmatpush2.msra.mxu0 %v1871
    %2007 = vmatprep.subr.mxu0 %v1868
    %2008 = vmatpush2.msra.mxu0 %v1867
    %2009 = vmatprep.subr.mxu0 %v1864
    %2010 = vmatpush2.msra.mxu0 %v1863
    %2011 = vmatprep.subr.mxu0 %v1860
    %2012 = vmatpush2.msra.mxu0 %v1859
    %2013 = vmatprep.subr.mxu0 %v1856
    %2014 = vmatpush2.msra.mxu0 %v1855
    %2015 = vmatprep.subr.mxu0 %v1852
    %2016 = vmatpush2.msra.mxu0 %v1851
    %2017 = vmatprep.subr.mxu0 %v1848
    %2018 = vmatpush2.msra.mxu0 %v1847
    %2019 = vmatprep.subr.mxu0 %v1844
    %2020 = vmatpush2.msra.mxu0 %v1843
    %2021 = vmatprep.subr.mxu0 %v1840
    %2022 = vmatpush2.msra.mxu0 %v1839
    %2023 = vmatprep.subr.mxu0 %v1836
    %2024 = vmatpush2.msra.mxu0 %v1835
    %2025 = vmatprep.subr.mxu0 %v1832
    %2026 = vmatpush2.msra.mxu0 %v1831
    %2027 = vmatprep.subr.mxu0 %v1828
    %2028 = vmatpush2.msra.mxu0 %v1827
    %2029 = vmatprep.mubr.f32.mxu0 %v1891
    %2030 = vmatmul.mubr.f32.gmra.mxu0 %v1890
    %v2031 = vpop.f32.mrf.mxu0
    %v2032 = vadd.f32 %v726, %v2031
    %v2033 = vpop.f32.mrf.mxu0
    %v2034 = vadd.f32 %v730, %v2033
    %2035 = vdwg.mxu0
    %v2036 = vmul.f32 %v1961, 0.5
    %v2037 = vtanh.pop %v2036
    %v2038 = vmul.f32 %v2037, 0.5
    %v2039 = vadd.f32 %v2038, 0.5
    %v2040 = vmul.f32 %v1963, 0.5
    %v2041 = vtanh.pop %v2040
    %v2042 = vmul.f32 %v2041, 0.5
    %v2043 = vadd.f32 %v2042, 0.5
    %v2044 = vtanh.pop %v2032
    %v2045 = vmul.f32 %v2034, 0.5
    %v2046 = vtanh.pop %v2045
    %v2047 = vmul.f32 %v2046, 0.5
    %v2048 = vadd.f32 %v2047, 0.5
    %v2049 = vmul.f32 %v2043, %v892
    %v2050 = vmul.f32 %v2039, %v2044
    %v2051 = vadd.f32 %v2049, %v2050
    %v2052 = vtanh.pop %v2051
    %v2053 = vmul.f32 %v2048, %v2052
    %v2054 = vld [vmem:[%s895] sm:$0xff]
    %v2055 = vld [vmem:[%s895 + $0x8] sm:$0xff]
    %v2056 = vld [vmem:[%s895 + $0x10] sm:$0xff]
    %v2057 = vld [vmem:[%s895 + $0x18] sm:$0xff]
    %v2058 = vld [vmem:[%s895 + $0x20] sm:$0xff]
    %v2059 = vld [vmem:[%s895 + $0x28] sm:$0xff]
    %v2060 = vld [vmem:[%s895 + $0x30] sm:$0xff]
    %v2061 = vld [vmem:[%s895 + $0x38] sm:$0xff]
    %v2062 = vld [vmem:[%s895 + $0x40] sm:$0xff]
    %v2063 = vld [vmem:[%s895 + $0x48] sm:$0xff]
    %v2064 = vld [vmem:[%s895 + $0x50] sm:$0xff]
    %v2065 = vld [vmem:[%s895 + $0x58] sm:$0xff]
    %v2066 = vld [vmem:[%s895 + $0x60] sm:$0xff]
    %v2067 = vld [vmem:[%s895 + $0x68] sm:$0xff]
    %v2068 = vld [vmem:[%s895 + $0x70] sm:$0xff]
    %v2069 = vld [vmem:[%s895 + $0x78] sm:$0xff]
    %v2070 = vld [vmem:[%s895 + $0x80] sm:$0xff]
    %v2071 = vld [vmem:[%s895 + $0x88] sm:$0xff]
    %v2072 = vld [vmem:[%s895 + $0x90] sm:$0xff]
    %v2073 = vld [vmem:[%s895 + $0x98] sm:$0xff]
    %v2074 = vld [vmem:[%s895 + $0xa0] sm:$0xff]
    %v2075 = vld [vmem:[%s895 + $0xa8] sm:$0xff]
    %v2076 = vld [vmem:[%s895 + $0xb0] sm:$0xff]
    %v2077 = vld [vmem:[%s895 + $0xb8] sm:$0xff]
    %v2078 = vld [vmem:[%s895 + $0xc0] sm:$0xff]
    %v2079 = vld [vmem:[%s895 + $0xc8] sm:$0xff]
    %v2080 = vld [vmem:[%s895 + $0xd0] sm:$0xff]
    %v2081 = vld [vmem:[%s895 + $0xd8] sm:$0xff]
    %v2082 = vld [vmem:[%s895 + $0xe0] sm:$0xff]
    %v2083 = vld [vmem:[%s895 + $0xe8] sm:$0xff]
    %v2084 = vld [vmem:[%s895 + $0xf0] sm:$0xff]
    %v2085 = vld [vmem:[%s895 + $0xf8] sm:$0xff]
    %v2086 = vld [vmem:[%s895 + $0x100] sm:$0xff]
    %v2087 = vld [vmem:[%s895 + $0x108] sm:$0xff]
    %v2088 = vld [vmem:[%s895 + $0x110] sm:$0xff]
    %v2089 = vld [vmem:[%s895 + $0x118] sm:$0xff]
    %v2090 = vld [vmem:[%s895 + $0x120] sm:$0xff]
    %v2091 = vld [vmem:[%s895 + $0x128] sm:$0xff]
    %v2092 = vld [vmem:[%s895 + $0x130] sm:$0xff]
    %v2093 = vld [vmem:[%s895 + $0x138] sm:$0xff]
    %v2094 = vld [vmem:[%s895 + $0x140] sm:$0xff]
    %v2095 = vld [vmem:[%s895 + $0x148] sm:$0xff]
    %v2096 = vld [vmem:[%s895 + $0x150] sm:$0xff]
    %v2097 = vld [vmem:[%s895 + $0x158] sm:$0xff]
    %v2098 = vld [vmem:[%s895 + $0x160] sm:$0xff]
    %v2099 = vld [vmem:[%s895 + $0x168] sm:$0xff]
    %v2100 = vld [vmem:[%s895 + $0x170] sm:$0xff]
    %v2101 = vld [vmem:[%s895 + $0x178] sm:$0xff]
    %v2102 = vld [vmem:[%s895 + $0x180] sm:$0xff]
    %v2103 = vld [vmem:[%s895 + $0x188] sm:$0xff]
    %v2104 = vld [vmem:[%s895 + $0x190] sm:$0xff]
    %v2105 = vld [vmem:[%s895 + $0x198] sm:$0xff]
    %v2106 = vld [vmem:[%s895 + $0x1a0] sm:$0xff]
    %v2107 = vld [vmem:[%s895 + $0x1a8] sm:$0xff]
    %v2108 = vld [vmem:[%s895 + $0x1b0] sm:$0xff]
    %v2109 = vld [vmem:[%s895 + $0x1b8] sm:$0xff]
    %v2110 = vld [vmem:[%s895 + $0x1c0] sm:$0xff]
    %v2111 = vld [vmem:[%s895 + $0x1c8] sm:$0xff]
    %v2112 = vld [vmem:[%s895 + $0x1d0] sm:$0xff]
    %v2113 = vld [vmem:[%s895 + $0x1d8] sm:$0xff]
    %v2114 = vld [vmem:[%s895 + $0x1e0] sm:$0xff]
    %v2115 = vld [vmem:[%s895 + $0x1e8] sm:$0xff]
    %v2116 = vld [vmem:[%s895 + $0x1f0] sm:$0xff]
    %v2117 = vld [vmem:[%s895 + $0x1f8] sm:$0xff]
    %v2118 = vld [vmem:[%s895 + $0x200] sm:$0xff]
    %v2119 = vld [vmem:[%s895 + $0x208] sm:$0xff]
    %v2120 = vld [vmem:[%s895 + $0x210] sm:$0xff]
    %v2121 = vld [vmem:[%s895 + $0x218] sm:$0xff]
    %v2122 = vld [vmem:[%s895 + $0x220] sm:$0xff]
    %v2123 = vld [vmem:[%s895 + $0x228] sm:$0xff]
    %v2124 = vld [vmem:[%s895 + $0x230] sm:$0xff]
    %v2125 = vld [vmem:[%s895 + $0x238] sm:$0xff]
    %v2126 = vld [vmem:[%s895 + $0x240] sm:$0xff]
    %v2127 = vld [vmem:[%s895 + $0x248] sm:$0xff]
    %v2128 = vld [vmem:[%s895 + $0x250] sm:$0xff]
    %v2129 = vld [vmem:[%s895 + $0x258] sm:$0xff]
    %v2130 = vld [vmem:[%s895 + $0x260] sm:$0xff]
    %v2131 = vld [vmem:[%s895 + $0x268] sm:$0xff]
    %v2132 = vld [vmem:[%s895 + $0x270] sm:$0xff]
    %v2133 = vld [vmem:[%s895 + $0x278] sm:$0xff]
    %v2134 = vld [vmem:[%s895 + $0x280] sm:$0xff]
    %v2135 = vld [vmem:[%s895 + $0x288] sm:$0xff]
    %v2136 = vld [vmem:[%s895 + $0x290] sm:$0xff]
    %v2137 = vld [vmem:[%s895 + $0x298] sm:$0xff]
    %v2138 = vld [vmem:[%s895 + $0x2a0] sm:$0xff]
    %v2139 = vld [vmem:[%s895 + $0x2a8] sm:$0xff]
    %v2140 = vld [vmem:[%s895 + $0x2b0] sm:$0xff]
    %v2141 = vld [vmem:[%s895 + $0x2b8] sm:$0xff]
    %v2142 = vld [vmem:[%s895 + $0x2c0] sm:$0xff]
    %v2143 = vld [vmem:[%s895 + $0x2c8] sm:$0xff]
    %v2144 = vld [vmem:[%s895 + $0x2d0] sm:$0xff]
    %v2145 = vld [vmem:[%s895 + $0x2d8] sm:$0xff]
    %v2146 = vld [vmem:[%s895 + $0x2e0] sm:$0xff]
    %v2147 = vld [vmem:[%s895 + $0x2e8] sm:$0xff]
    %v2148 = vld [vmem:[%s895 + $0x2f0] sm:$0xff]
    %v2149 = vld [vmem:[%s895 + $0x2f8] sm:$0xff]
    %v2150 = vld [vmem:[%s895 + $0x300] sm:$0xff]
    %v2151 = vld [vmem:[%s895 + $0x308] sm:$0xff]
    %v2152 = vld [vmem:[%s895 + $0x310] sm:$0xff]
    %v2153 = vld [vmem:[%s895 + $0x318] sm:$0xff]
    %v2154 = vld [vmem:[%s895 + $0x320] sm:$0xff]
    %v2155 = vld [vmem:[%s895 + $0x328] sm:$0xff]
    %v2156 = vld [vmem:[%s895 + $0x330] sm:$0xff]
    %v2157 = vld [vmem:[%s895 + $0x338] sm:$0xff]
    %v2158 = vld [vmem:[%s895 + $0x340] sm:$0xff]
    %v2159 = vld [vmem:[%s895 + $0x348] sm:$0xff]
    %v2160 = vld [vmem:[%s895 + $0x350] sm:$0xff]
    %v2161 = vld [vmem:[%s895 + $0x358] sm:$0xff]
    %v2162 = vld [vmem:[%s895 + $0x360] sm:$0xff]
    %v2163 = vld [vmem:[%s895 + $0x368] sm:$0xff]
    %v2164 = vld [vmem:[%s895 + $0x370] sm:$0xff]
    %v2165 = vld [vmem:[%s895 + $0x378] sm:$0xff]
    %v2166 = vld [vmem:[%s895 + $0x380] sm:$0xff]
    %v2167 = vld [vmem:[%s895 + $0x388] sm:$0xff]
    %v2168 = vld [vmem:[%s895 + $0x390] sm:$0xff]
    %v2169 = vld [vmem:[%s895 + $0x398] sm:$0xff]
    %v2170 = vld [vmem:[%s895 + $0x3a0] sm:$0xff]
    %v2171 = vld [vmem:[%s895 + $0x3a8] sm:$0xff]
    %v2172 = vld [vmem:[%s895 + $0x3b0] sm:$0xff]
    %v2173 = vld [vmem:[%s895 + $0x3b8] sm:$0xff]
    %v2174 = vld [vmem:[%s895 + $0x3c0] sm:$0xff]
    %v2175 = vld [vmem:[%s895 + $0x3c8] sm:$0xff]
    %v2176 = vld [vmem:[%s895 + $0x3d0] sm:$0xff]
    %v2177 = vld [vmem:[%s895 + $0x3d8] sm:$0xff]
    %v2178 = vld [vmem:[%s895 + $0x3e0] sm:$0xff]
    %v2179 = vld [vmem:[%s895 + $0x3e8] sm:$0xff]
    %v2180 = vld [vmem:[%s895 + $0x3f0] sm:$0xff]
    %v2181 = vld [vmem:[%s895 + $0x3f8] sm:$0xff]
    %2182 = vmatprep.subr.mxu0 %v2115
    %2183 = vmatpush1.msra.mxu0 %v2114
    %2184 = vmatprep.subr.mxu0 %v2111
    %2185 = vmatpush1.msra.mxu0 %v2110
    %2186 = vmatprep.subr.mxu0 %v2107
    %2187 = vmatpush1.msra.mxu0 %v2106
    %2188 = vmatprep.subr.mxu0 %v2103
    %2189 = vmatpush1.msra.mxu0 %v2102
    %2190 = vmatprep.subr.mxu0 %v2099
    %2191 = vmatpush1.msra.mxu0 %v2098
    %2192 = vmatprep.subr.mxu0 %v2095
    %2193 = vmatpush1.msra.mxu0 %v2094
    %2194 = vmatprep.subr.mxu0 %v2091
    %2195 = vmatpush1.msra.mxu0 %v2090
    %2196 = vmatprep.subr.mxu0 %v2087
    %2197 = vmatpush1.msra.mxu0 %v2086
    %2198 = vmatprep.subr.mxu0 %v2083
    %2199 = vmatpush1.msra.mxu0 %v2082
    %2200 = vmatprep.subr.mxu0 %v2079
    %2201 = vmatpush1.msra.mxu0 %v2078
    %2202 = vmatprep.subr.mxu0 %v2075
    %2203 = vmatpush1.msra.mxu0 %v2074
    %2204 = vmatprep.subr.mxu0 %v2071
    %2205 = vmatpush1.msra.mxu0 %v2070
    %2206 = vmatprep.subr.mxu0 %v2067
    %2207 = vmatpush1.msra.mxu0 %v2066
    %2208 = vmatprep.subr.mxu0 %v2063
    %2209 = vmatpush1.msra.mxu0 %v2062
    %2210 = vmatprep.subr.mxu0 %v2059
    %2211 = vmatpush1.msra.mxu0 %v2058
    %2212 = vmatprep.subr.mxu0 %v2055
    %2213 = vmatpush1.msra.mxu0 %v2054
    %2214 = vmatprep.subr.mxu0 %v2179
    %2215 = vmatpush2.msra.mxu0 %v2178
    %2216 = vmatprep.subr.mxu0 %v2175
    %2217 = vmatpush2.msra.mxu0 %v2174
    %2218 = vmatprep.subr.mxu0 %v2171
    %2219 = vmatpush2.msra.mxu0 %v2170
    %2220 = vmatprep.subr.mxu0 %v2167
    %2221 = vmatpush2.msra.mxu0 %v2166
    %2222 = vmatprep.subr.mxu0 %v2163
    %2223 = vmatpush2.msra.mxu0 %v2162
    %2224 = vmatprep.subr.mxu0 %v2159
    %2225 = vmatpush2.msra.mxu0 %v2158
    %2226 = vmatprep.subr.mxu0 %v2155
    %2227 = vmatpush2.msra.mxu0 %v2154
    %2228 = vmatprep.subr.mxu0 %v2151
    %2229 = vmatpush2.msra.mxu0 %v2150
    %2230 = vmatprep.subr.mxu0 %v2147
    %2231 = vmatpush2.msra.mxu0 %v2146
    %2232 = vmatprep.subr.mxu0 %v2143
    %2233 = vmatpush2.msra.mxu0 %v2142
    %2234 = vmatprep.subr.mxu0 %v2139
    %2235 = vmatpush2.msra.mxu0 %v2138
    %2236 = vmatprep.subr.mxu0 %v2135
    %2237 = vmatpush2.msra.mxu0 %v2134
    %2238 = vmatprep.subr.mxu0 %v2131
    %2239 = vmatpush2.msra.mxu0 %v2130
    %2240 = vmatprep.subr.mxu0 %v2127
    %2241 = vmatpush2.msra.mxu0 %v2126
    %2242 = vmatprep.subr.mxu0 %v2123
    %2243 = vmatpush2.msra.mxu0 %v2122
    %2244 = vmatprep.subr.mxu0 %v2119
    %2245 = vmatpush2.msra.mxu0 %v2118
    %2246 = vmatprep.mubr.f32.mxu0 %v1204
    %2247 = vmatmul.mubr.f32.gmra.mxu0 %v2053
    %v2248 = vpop.f32.mrf.mxu0
    %v2249 = vadd.f32 %v1028, %v2248
    %v2250 = vpop.f32.mrf.mxu0
    %v2251 = vadd.f32 %v1032, %v2250
    %2252 = vdwg.mxu0
    %2253 = vmatprep.subr.mxu0 %v2117
    %2254 = vmatpush1.msra.mxu0 %v2116
    %2255 = vmatprep.subr.mxu0 %v2113
    %2256 = vmatpush1.msra.mxu0 %v2112
    %2257 = vmatprep.subr.mxu0 %v2109
    %2258 = vmatpush1.msra.mxu0 %v2108
    %2259 = vmatprep.subr.mxu0 %v2105
    %2260 = vmatpush1.msra.mxu0 %v2104
    %2261 = vmatprep.subr.mxu0 %v2101
    %2262 = vmatpush1.msra.mxu0 %v2100
    %2263 = vmatprep.subr.mxu0 %v2097
    %2264 = vmatpush1.msra.mxu0 %v2096
    %2265 = vmatprep.subr.mxu0 %v2093
    %2266 = vmatpush1.msra.mxu0 %v2092
    %2267 = vmatprep.subr.mxu0 %v2089
    %2268 = vmatpush1.msra.mxu0 %v2088
    %2269 = vmatprep.subr.mxu0 %v2085
    %2270 = vmatpush1.msra.mxu0 %v2084
    %2271 = vmatprep.subr.mxu0 %v2081
    %2272 = vmatpush1.msra.mxu0 %v2080
    %2273 = vmatprep.subr.mxu0 %v2077
    %2274 = vmatpush1.msra.mxu0 %v2076
    %2275 = vmatprep.subr.mxu0 %v2073
    %2276 = vmatpush1.msra.mxu0 %v2072
    %2277 = vmatprep.subr.mxu0 %v2069
    %2278 = vmatpush1.msra.mxu0 %v2068
    %2279 = vmatprep.subr.mxu0 %v2065
    %2280 = vmatpush1.msra.mxu0 %v2064
    %2281 = vmatprep.subr.mxu0 %v2061
    %2282 = vmatpush1.msra.mxu0 %v2060
    %2283 = vmatprep.subr.mxu0 %v2057
    %2284 = vmatpush1.msra.mxu0 %v2056
    %2285 = vmatprep.subr.mxu0 %v2181
    %2286 = vmatpush2.msra.mxu0 %v2180
    %2287 = vmatprep.subr.mxu0 %v2177
    %2288 = vmatpush2.msra.mxu0 %v2176
    %2289 = vmatprep.subr.mxu0 %v2173
    %2290 = vmatpush2.msra.mxu0 %v2172
    %2291 = vmatprep.subr.mxu0 %v2169
    %2292 = vmatpush2.msra.mxu0 %v2168
    %2293 = vmatprep.subr.mxu0 %v2165
    %2294 = vmatpush2.msra.mxu0 %v2164
    %2295 = vmatprep.subr.mxu0 %v2161
    %2296 = vmatpush2.msra.mxu0 %v2160
    %2297 = vmatprep.subr.mxu0 %v2157
    %2298 = vmatpush2.msra.mxu0 %v2156
    %2299 = vmatprep.subr.mxu0 %v2153
    %2300 = vmatpush2.msra.mxu0 %v2152
    %2301 = vmatprep.subr.mxu0 %v2149
    %2302 = vmatpush2.msra.mxu0 %v2148
    %2303 = vmatprep.subr.mxu0 %v2145
    %2304 = vmatpush2.msra.mxu0 %v2144
    %2305 = vmatprep.subr.mxu0 %v2141
    %2306 = vmatpush2.msra.mxu0 %v2140
    %2307 = vmatprep.subr.mxu0 %v2137
    %2308 = vmatpush2.msra.mxu0 %v2136
    %2309 = vmatprep.subr.mxu0 %v2133
    %2310 = vmatpush2.msra.mxu0 %v2132
    %2311 = vmatprep.subr.mxu0 %v2129
    %2312 = vmatpush2.msra.mxu0 %v2128
    %2313 = vmatprep.subr.mxu0 %v2125
    %2314 = vmatpush2.msra.mxu0 %v2124
    %2315 = vmatprep.subr.mxu0 %v2121
    %2316 = vmatpush2.msra.mxu0 %v2120
    %2317 = vmatprep.mubr.f32.mxu0 %v1204
    %2318 = vmatmul.mubr.f32.gmra.mxu0 %v2053
    %v2319 = vpop.f32.mrf.mxu0
    %v2320 = vadd.f32 %v1036, %v2319
    %v2321 = vpop.f32.mrf.mxu0
    %v2322 = vadd.f32 %v1040, %v2321
    %2323 = vdwg.mxu0
    %v2324 = vmul.f32 %v2249, 0.5
    %v2325 = vtanh.pop %v2324
    %v2326 = vmul.f32 %v2325, 0.5
    %v2327 = vadd.f32 %v2326, 0.5
    %v2328 = vmul.f32 %v2251, 0.5
    %v2329 = vtanh.pop %v2328
    %v2330 = vmul.f32 %v2329, 0.5
    %v2331 = vadd.f32 %v2330, 0.5
    %v2332 = vtanh.pop %v2320
    %v2333 = vmul.f32 %v2322, 0.5
    %v2334 = vtanh.pop %v2333
    %v2335 = vmul.f32 %v2334, 0.5
    %v2336 = vadd.f32 %v2335, 0.5
    %v2337 = vmul.f32 %v2331, %v1202
    %v2338 = vmul.f32 %v2327, %v2332
    %v2339 = vadd.f32 %v2337, %v2338
    %v2340 = vtanh.pop %v2339
    %v2341 = vmul.f32 %v2336, %v2340
    %v2342 = vld [vmem:[%s1205] sm:$0xff]
    %v2343 = vld [vmem:[%s1205 + $0x8] sm:$0xff]
    %v2344 = vld [vmem:[%s1205 + $0x10] sm:$0xff]
    %v2345 = vld [vmem:[%s1205 + $0x18] sm:$0xff]
    %v2346 = vld [vmem:[%s1205 + $0x20] sm:$0xff]
    %v2347 = vld [vmem:[%s1205 + $0x28] sm:$0xff]
    %v2348 = vld [vmem:[%s1205 + $0x30] sm:$0xff]
    %v2349 = vld [vmem:[%s1205 + $0x38] sm:$0xff]
    %v2350 = vld [vmem:[%s1205 + $0x40] sm:$0xff]
    %v2351 = vld [vmem:[%s1205 + $0x48] sm:$0xff]
    %v2352 = vld [vmem:[%s1205 + $0x50] sm:$0xff]
    %v2353 = vld [vmem:[%s1205 + $0x58] sm:$0xff]
    %v2354 = vld [vmem:[%s1205 + $0x60] sm:$0xff]
    %v2355 = vld [vmem:[%s1205 + $0x68] sm:$0xff]
    %v2356 = vld [vmem:[%s1205 + $0x70] sm:$0xff]
    %v2357 = vld [vmem:[%s1205 + $0x78] sm:$0xff]
    %v2358 = vld [vmem:[%s1205 + $0x80] sm:$0xff]
    %v2359 = vld [vmem:[%s1205 + $0x88] sm:$0xff]
    %v2360 = vld [vmem:[%s1205 + $0x90] sm:$0xff]
    %v2361 = vld [vmem:[%s1205 + $0x98] sm:$0xff]
    %v2362 = vld [vmem:[%s1205 + $0xa0] sm:$0xff]
    %v2363 = vld [vmem:[%s1205 + $0xa8] sm:$0xff]
    %v2364 = vld [vmem:[%s1205 + $0xb0] sm:$0xff]
    %v2365 = vld [vmem:[%s1205 + $0xb8] sm:$0xff]
    %v2366 = vld [vmem:[%s1205 + $0xc0] sm:$0xff]
    %v2367 = vld [vmem:[%s1205 + $0xc8] sm:$0xff]
    %v2368 = vld [vmem:[%s1205 + $0xd0] sm:$0xff]
    %v2369 = vld [vmem:[%s1205 + $0xd8] sm:$0xff]
    %v2370 = vld [vmem:[%s1205 + $0xe0] sm:$0xff]
    %v2371 = vld [vmem:[%s1205 + $0xe8] sm:$0xff]
    %v2372 = vld [vmem:[%s1205 + $0xf0] sm:$0xff]
    %v2373 = vld [vmem:[%s1205 + $0xf8] sm:$0xff]
    %v2374 = vld [vmem:[%s1205 + $0x100] sm:$0xff]
    %v2375 = vld [vmem:[%s1205 + $0x108] sm:$0xff]
    %v2376 = vld [vmem:[%s1205 + $0x110] sm:$0xff]
    %v2377 = vld [vmem:[%s1205 + $0x118] sm:$0xff]
    %v2378 = vld [vmem:[%s1205 + $0x120] sm:$0xff]
    %v2379 = vld [vmem:[%s1205 + $0x128] sm:$0xff]
    %v2380 = vld [vmem:[%s1205 + $0x130] sm:$0xff]
    %v2381 = vld [vmem:[%s1205 + $0x138] sm:$0xff]
    %v2382 = vld [vmem:[%s1205 + $0x140] sm:$0xff]
    %v2383 = vld [vmem:[%s1205 + $0x148] sm:$0xff]
    %v2384 = vld [vmem:[%s1205 + $0x150] sm:$0xff]
    %v2385 = vld [vmem:[%s1205 + $0x158] sm:$0xff]
    %v2386 = vld [vmem:[%s1205 + $0x160] sm:$0xff]
    %v2387 = vld [vmem:[%s1205 + $0x168] sm:$0xff]
    %v2388 = vld [vmem:[%s1205 + $0x170] sm:$0xff]
    %v2389 = vld [vmem:[%s1205 + $0x178] sm:$0xff]
    %v2390 = vld [vmem:[%s1205 + $0x180] sm:$0xff]
    %v2391 = vld [vmem:[%s1205 + $0x188] sm:$0xff]
    %v2392 = vld [vmem:[%s1205 + $0x190] sm:$0xff]
    %v2393 = vld [vmem:[%s1205 + $0x198] sm:$0xff]
    %v2394 = vld [vmem:[%s1205 + $0x1a0] sm:$0xff]
    %v2395 = vld [vmem:[%s1205 + $0x1a8] sm:$0xff]
    %v2396 = vld [vmem:[%s1205 + $0x1b0] sm:$0xff]
    %v2397 = vld [vmem:[%s1205 + $0x1b8] sm:$0xff]
    %v2398 = vld [vmem:[%s1205 + $0x1c0] sm:$0xff]
    %v2399 = vld [vmem:[%s1205 + $0x1c8] sm:$0xff]
    %v2400 = vld [vmem:[%s1205 + $0x1d0] sm:$0xff]
    %v2401 = vld [vmem:[%s1205 + $0x1d8] sm:$0xff]
    %v2402 = vld [vmem:[%s1205 + $0x1e0] sm:$0xff]
    %v2403 = vld [vmem:[%s1205 + $0x1e8] sm:$0xff]
    %v2404 = vld [vmem:[%s1205 + $0x1f0] sm:$0xff]
    %v2405 = vld [vmem:[%s1205 + $0x1f8] sm:$0xff]
    %v2406 = vld [vmem:[%s1205 + $0x200] sm:$0xff]
    %v2407 = vld [vmem:[%s1205 + $0x208] sm:$0xff]
    %v2408 = vld [vmem:[%s1205 + $0x210] sm:$0xff]
    %v2409 = vld [vmem:[%s1205 + $0x218] sm:$0xff]
    %v2410 = vld [vmem:[%s1205 + $0x220] sm:$0xff]
    %v2411 = vld [vmem:[%s1205 + $0x228] sm:$0xff]
    %v2412 = vld [vmem:[%s1205 + $0x230] sm:$0xff]
    %v2413 = vld [vmem:[%s1205 + $0x238] sm:$0xff]
    %v2414 = vld [vmem:[%s1205 + $0x240] sm:$0xff]
    %v2415 = vld [vmem:[%s1205 + $0x248] sm:$0xff]
    %v2416 = vld [vmem:[%s1205 + $0x250] sm:$0xff]
    %v2417 = vld [vmem:[%s1205 + $0x258] sm:$0xff]
    %v2418 = vld [vmem:[%s1205 + $0x260] sm:$0xff]
    %v2419 = vld [vmem:[%s1205 + $0x268] sm:$0xff]
    %v2420 = vld [vmem:[%s1205 + $0x270] sm:$0xff]
    %v2421 = vld [vmem:[%s1205 + $0x278] sm:$0xff]
    %v2422 = vld [vmem:[%s1205 + $0x280] sm:$0xff]
    %v2423 = vld [vmem:[%s1205 + $0x288] sm:$0xff]
    %v2424 = vld [vmem:[%s1205 + $0x290] sm:$0xff]
    %v2425 = vld [vmem:[%s1205 + $0x298] sm:$0xff]
    %v2426 = vld [vmem:[%s1205 + $0x2a0] sm:$0xff]
    %v2427 = vld [vmem:[%s1205 + $0x2a8] sm:$0xff]
    %v2428 = vld [vmem:[%s1205 + $0x2b0] sm:$0xff]
    %v2429 = vld [vmem:[%s1205 + $0x2b8] sm:$0xff]
    %v2430 = vld [vmem:[%s1205 + $0x2c0] sm:$0xff]
    %v2431 = vld [vmem:[%s1205 + $0x2c8] sm:$0xff]
    %v2432 = vld [vmem:[%s1205 + $0x2d0] sm:$0xff]
    %v2433 = vld [vmem:[%s1205 + $0x2d8] sm:$0xff]
    %v2434 = vld [vmem:[%s1205 + $0x2e0] sm:$0xff]
    %v2435 = vld [vmem:[%s1205 + $0x2e8] sm:$0xff]
    %v2436 = vld [vmem:[%s1205 + $0x2f0] sm:$0xff]
    %v2437 = vld [vmem:[%s1205 + $0x2f8] sm:$0xff]
    %v2438 = vld [vmem:[%s1205 + $0x300] sm:$0xff]
    %v2439 = vld [vmem:[%s1205 + $0x308] sm:$0xff]
    %v2440 = vld [vmem:[%s1205 + $0x310] sm:$0xff]
    %v2441 = vld [vmem:[%s1205 + $0x318] sm:$0xff]
    %v2442 = vld [vmem:[%s1205 + $0x320] sm:$0xff]
    %v2443 = vld [vmem:[%s1205 + $0x328] sm:$0xff]
    %v2444 = vld [vmem:[%s1205 + $0x330] sm:$0xff]
    %v2445 = vld [vmem:[%s1205 + $0x338] sm:$0xff]
    %v2446 = vld [vmem:[%s1205 + $0x340] sm:$0xff]
    %v2447 = vld [vmem:[%s1205 + $0x348] sm:$0xff]
    %v2448 = vld [vmem:[%s1205 + $0x350] sm:$0xff]
    %v2449 = vld [vmem:[%s1205 + $0x358] sm:$0xff]
    %v2450 = vld [vmem:[%s1205 + $0x360] sm:$0xff]
    %v2451 = vld [vmem:[%s1205 + $0x368] sm:$0xff]
    %v2452 = vld [vmem:[%s1205 + $0x370] sm:$0xff]
    %v2453 = vld [vmem:[%s1205 + $0x378] sm:$0xff]
    %v2454 = vld [vmem:[%s1205 + $0x380] sm:$0xff]
    %v2455 = vld [vmem:[%s1205 + $0x388] sm:$0xff]
    %v2456 = vld [vmem:[%s1205 + $0x390] sm:$0xff]
    %v2457 = vld [vmem:[%s1205 + $0x398] sm:$0xff]
    %v2458 = vld [vmem:[%s1205 + $0x3a0] sm:$0xff]
    %v2459 = vld [vmem:[%s1205 + $0x3a8] sm:$0xff]
    %v2460 = vld [vmem:[%s1205 + $0x3b0] sm:$0xff]
    %v2461 = vld [vmem:[%s1205 + $0x3b8] sm:$0xff]
    %v2462 = vld [vmem:[%s1205 + $0x3c0] sm:$0xff]
    %v2463 = vld [vmem:[%s1205 + $0x3c8] sm:$0xff]
    %v2464 = vld [vmem:[%s1205 + $0x3d0] sm:$0xff]
    %v2465 = vld [vmem:[%s1205 + $0x3d8] sm:$0xff]
    %v2466 = vld [vmem:[%s1205 + $0x3e0] sm:$0xff]
    %v2467 = vld [vmem:[%s1205 + $0x3e8] sm:$0xff]
    %v2468 = vld [vmem:[%s1205 + $0x3f0] sm:$0xff]
    %v2469 = vld [vmem:[%s1205 + $0x3f8] sm:$0xff]
    %2470 = vmatprep.subr.mxu0 %v2403
    %2471 = vmatpush1.msra.mxu0 %v2402
    %2472 = vmatprep.subr.mxu0 %v2399
    %2473 = vmatpush1.msra.mxu0 %v2398
    %2474 = vmatprep.subr.mxu0 %v2395
    %2475 = vmatpush1.msra.mxu0 %v2394
    %2476 = vmatprep.subr.mxu0 %v2391
    %2477 = vmatpush1.msra.mxu0 %v2390
    %2478 = vmatprep.subr.mxu0 %v2387
    %2479 = vmatpush1.msra.mxu0 %v2386
    %2480 = vmatprep.subr.mxu0 %v2383
    %2481 = vmatpush1.msra.mxu0 %v2382
    %2482 = vmatprep.subr.mxu0 %v2379
    %2483 = vmatpush1.msra.mxu0 %v2378
    %2484 = vmatprep.subr.mxu0 %v2375
    %2485 = vmatpush1.msra.mxu0 %v2374
    %2486 = vmatprep.subr.mxu0 %v2371
    %2487 = vmatpush1.msra.mxu0 %v2370
    %2488 = vmatprep.subr.mxu0 %v2367
    %2489 = vmatpush1.msra.mxu0 %v2366
    %2490 = vmatprep.subr.mxu0 %v2363
    %2491 = vmatpush1.msra.mxu0 %v2362
    %2492 = vmatprep.subr.mxu0 %v2359
    %2493 = vmatpush1.msra.mxu0 %v2358
    %2494 = vmatprep.subr.mxu0 %v2355
    %2495 = vmatpush1.msra.mxu0 %v2354
    %2496 = vmatprep.subr.mxu0 %v2351
    %2497 = vmatpush1.msra.mxu0 %v2350
    %2498 = vmatprep.subr.mxu0 %v2347
    %2499 = vmatpush1.msra.mxu0 %v2346
    %2500 = vmatprep.subr.mxu0 %v2343
    %2501 = vmatpush1.msra.mxu0 %v2342
    %2502 = vmatprep.subr.mxu0 %v2467
    %2503 = vmatpush2.msra.mxu0 %v2466
    %2504 = vmatprep.subr.mxu0 %v2463
    %2505 = vmatpush2.msra.mxu0 %v2462
    %2506 = vmatprep.subr.mxu0 %v2459
    %2507 = vmatpush2.msra.mxu0 %v2458
    %2508 = vmatprep.subr.mxu0 %v2455
    %2509 = vmatpush2.msra.mxu0 %v2454
    %2510 = vmatprep.subr.mxu0 %v2451
    %2511 = vmatpush2.msra.mxu0 %v2450
    %2512 = vmatprep.subr.mxu0 %v2447
    %2513 = vmatpush2.msra.mxu0 %v2446
    %2514 = vmatprep.subr.mxu0 %v2443
    %2515 = vmatpush2.msra.mxu0 %v2442
    %2516 = vmatprep.subr.mxu0 %v2439
    %2517 = vmatpush2.msra.mxu0 %v2438
    %2518 = vmatprep.subr.mxu0 %v2435
    %2519 = vmatpush2.msra.mxu0 %v2434
    %2520 = vmatprep.subr.mxu0 %v2431
    %2521 = vmatpush2.msra.mxu0 %v2430
    %2522 = vmatprep.subr.mxu0 %v2427
    %2523 = vmatpush2.msra.mxu0 %v2426
    %2524 = vmatprep.subr.mxu0 %v2423
    %2525 = vmatpush2.msra.mxu0 %v2422
    %2526 = vmatprep.subr.mxu0 %v2419
    %2527 = vmatpush2.msra.mxu0 %v2418
    %2528 = vmatprep.subr.mxu0 %v2415
    %2529 = vmatpush2.msra.mxu0 %v2414
    %2530 = vmatprep.subr.mxu0 %v2411
    %2531 = vmatpush2.msra.mxu0 %v2410
    %2532 = vmatprep.subr.mxu0 %v2407
    %2533 = vmatpush2.msra.mxu0 %v2406
    %2534 = vmatprep.mubr.f32.mxu0 %v1514
    %2535 = vmatmul.mubr.f32.gmra.mxu0 %v2341
    %v2536 = vpop.f32.mrf.mxu0
    %v2537 = vadd.f32 %v1338, %v2536
    %v2538 = vpop.f32.mrf.mxu0
    %v2539 = vadd.f32 %v1342, %v2538
    %2540 = vdwg.mxu0
    %2541 = vmatprep.subr.mxu0 %v2405
    %2542 = vmatpush1.msra.mxu0 %v2404
    %2543 = vmatprep.subr.mxu0 %v2401
    %2544 = vmatpush1.msra.mxu0 %v2400
    %2545 = vmatprep.subr.mxu0 %v2397
    %2546 = vmatpush1.msra.mxu0 %v2396
    %2547 = vmatprep.subr.mxu0 %v2393
    %2548 = vmatpush1.msra.mxu0 %v2392
    %2549 = vmatprep.subr.mxu0 %v2389
    %2550 = vmatpush1.msra.mxu0 %v2388
    %2551 = vmatprep.subr.mxu0 %v2385
    %2552 = vmatpush1.msra.mxu0 %v2384
    %2553 = vmatprep.subr.mxu0 %v2381
    %2554 = vmatpush1.msra.mxu0 %v2380
    %2555 = vmatprep.subr.mxu0 %v2377
    %2556 = vmatpush1.msra.mxu0 %v2376
    %2557 = vmatprep.subr.mxu0 %v2373
    %2558 = vmatpush1.msra.mxu0 %v2372
    %2559 = vmatprep.subr.mxu0 %v2369
    %2560 = vmatpush1.msra.mxu0 %v2368
    %2561 = vmatprep.subr.mxu0 %v2365
    %2562 = vmatpush1.msra.mxu0 %v2364
    %2563 = vmatprep.subr.mxu0 %v2361
    %2564 = vmatpush1.msra.mxu0 %v2360
    %2565 = vmatprep.subr.mxu0 %v2357
    %2566 = vmatpush1.msra.mxu0 %v2356
    %2567 = vmatprep.subr.mxu0 %v2353
    %2568 = vmatpush1.msra.mxu0 %v2352
    %2569 = vmatprep.subr.mxu0 %v2349
    %2570 = vmatpush1.msra.mxu0 %v2348
    %2571 = vmatprep.subr.mxu0 %v2345
    %2572 = vmatpush1.msra.mxu0 %v2344
    %2573 = vmatprep.subr.mxu0 %v2469
    %2574 = vmatpush2.msra.mxu0 %v2468
    %2575 = vmatprep.subr.mxu0 %v2465
    %2576 = vmatpush2.msra.mxu0 %v2464
    %2577 = vmatprep.subr.mxu0 %v2461
    %2578 = vmatpush2.msra.mxu0 %v2460
    %2579 = vmatprep.subr.mxu0 %v2457
    %2580 = vmatpush2.msra.mxu0 %v2456
    %2581 = vmatprep.subr.mxu0 %v2453
    %2582 = vmatpush2.msra.mxu0 %v2452
    %2583 = vmatprep.subr.mxu0 %v2449
    %2584 = vmatpush2.msra.mxu0 %v2448
    %2585 = vmatprep.subr.mxu0 %v2445
    %2586 = vmatpush2.msra.mxu0 %v2444
    %2587 = vmatprep.subr.mxu0 %v2441
    %2588 = vmatpush2.msra.mxu0 %v2440
    %2589 = vmatprep.subr.mxu0 %v2437
    %2590 = vmatpush2.msra.mxu0 %v2436
    %2591 = vmatprep.subr.mxu0 %v2433
    %2592 = vmatpush2.msra.mxu0 %v2432
    %2593 = vmatprep.subr.mxu0 %v2429
    %2594 = vmatpush2.msra.mxu0 %v2428
    %2595 = vmatprep.subr.mxu0 %v2425
    %2596 = vmatpush2.msra.mxu0 %v2424
    %2597 = vmatprep.subr.mxu0 %v2421
    %2598 = vmatpush2.msra.mxu0 %v2420
    %2599 = vmatprep.subr.mxu0 %v2417
    %2600 = vmatpush2.msra.mxu0 %v2416
    %2601 = vmatprep.subr.mxu0 %v2413
    %2602 = vmatpush2.msra.mxu0 %v2412
    %2603 = vmatprep.subr.mxu0 %v2409
    %2604 = vmatpush2.msra.mxu0 %v2408
    %2605 = vmatprep.mubr.f32.mxu0 %v1514
    %2606 = vmatmul.mubr.f32.gmra.mxu0 %v2341
    %v2607 = vpop.f32.mrf.mxu0
    %v2608 = vadd.f32 %v1346, %v2607
    %v2609 = vpop.f32.mrf.mxu0
    %v2610 = vadd.f32 %v1350, %v2609
    %2611 = vdwg.mxu0
    %v2612 = vmul.f32 %v2537, 0.5
    %v2613 = vtanh.pop %v2612
    %v2614 = vmul.f32 %v2613, 0.5
    %v2615 = vadd.f32 %v2614, 0.5
    %v2616 = vmul.f32 %v2539, 0.5
    %v2617 = vtanh.pop %v2616
    %v2618 = vmul.f32 %v2617, 0.5
    %v2619 = vadd.f32 %v2618, 0.5
    %v2620 = vtanh.pop %v2608
    %v2621 = vmul.f32 %v2610, 0.5
    %v2622 = vtanh.pop %v2621
    %v2623 = vmul.f32 %v2622, 0.5
    %v2624 = vadd.f32 %v2623, 0.5
    %v2625 = vmul.f32 %v2619, %v1512
    %v2626 = vmul.f32 %v2615, %v2620
    %v2627 = vadd.f32 %v2625, %v2626
    %v2628 = vtanh.pop %v2627
    %v2629 = vmul.f32 %v2624, %v2628
    %2630 = vst [vmem:[#allocation2 + $0x1] sm:$0x1] %v2629
    %v2631 = vld [vmem:[#allocation2] sm:$0x3]
    %v2632 = vld [vmem:[#allocation11] sm:$0xff]
    %v2633 = vld [vmem:[#allocation11 + $0x8] sm:$0xff]
    %v2634 = vld [vmem:[#allocation11 + $0x10] sm:$0xff]
    %v2635 = vld [vmem:[#allocation11 + $0x18] sm:$0xff]
    %v2636 = vld [vmem:[#allocation11 + $0x20] sm:$0xff]
    %v2637 = vld [vmem:[#allocation11 + $0x28] sm:$0xff]
    %v2638 = vld [vmem:[#allocation11 + $0x30] sm:$0xff]
    %v2639 = vld [vmem:[#allocation11 + $0x38] sm:$0xff]
    %v2640 = vld [vmem:[#allocation11 + $0x40] sm:$0xff]
    %v2641 = vld [vmem:[#allocation11 + $0x48] sm:$0xff]
    %v2642 = vld [vmem:[#allocation11 + $0x50] sm:$0xff]
    %v2643 = vld [vmem:[#allocation11 + $0x58] sm:$0xff]
    %v2644 = vld [vmem:[#allocation11 + $0x60] sm:$0xff]
    %v2645 = vld [vmem:[#allocation11 + $0x68] sm:$0xff]
    %v2646 = vld [vmem:[#allocation11 + $0x70] sm:$0xff]
    %v2647 = vld [vmem:[#allocation11 + $0x78] sm:$0xff]
    %v2648 = vld [vmem:[#allocation11 + $0x80] sm:$0xff]
    %v2649 = vld [vmem:[#allocation11 + $0x88] sm:$0xff]
    %v2650 = vld [vmem:[#allocation11 + $0x90] sm:$0xff]
    %v2651 = vld [vmem:[#allocation11 + $0x98] sm:$0xff]
    %v2652 = vld [vmem:[#allocation11 + $0xa0] sm:$0xff]
    %v2653 = vld [vmem:[#allocation11 + $0xa8] sm:$0xff]
    %v2654 = vld [vmem:[#allocation11 + $0xb0] sm:$0xff]
    %v2655 = vld [vmem:[#allocation11 + $0xb8] sm:$0xff]
    %v2656 = vld [vmem:[#allocation11 + $0xc0] sm:$0xff]
    %v2657 = vld [vmem:[#allocation11 + $0xc8] sm:$0xff]
    %v2658 = vld [vmem:[#allocation11 + $0xd0] sm:$0xff]
    %v2659 = vld [vmem:[#allocation11 + $0xd8] sm:$0xff]
    %v2660 = vld [vmem:[#allocation11 + $0xe0] sm:$0xff]
    %v2661 = vld [vmem:[#allocation11 + $0xe8] sm:$0xff]
    %v2662 = vld [vmem:[#allocation11 + $0xf0] sm:$0xff]
    %v2663 = vld [vmem:[#allocation11 + $0xf8] sm:$0xff]
    %v2664 = vld [vmem:[#allocation11 + $0x100] sm:$0xff]
    %v2665 = vld [vmem:[#allocation11 + $0x108] sm:$0xff]
    %v2666 = vld [vmem:[#allocation11 + $0x110] sm:$0xff]
    %v2667 = vld [vmem:[#allocation11 + $0x118] sm:$0xff]
    %v2668 = vld [vmem:[#allocation11 + $0x120] sm:$0xff]
    %v2669 = vld [vmem:[#allocation11 + $0x128] sm:$0xff]
    %v2670 = vld [vmem:[#allocation11 + $0x130] sm:$0xff]
    %v2671 = vld [vmem:[#allocation11 + $0x138] sm:$0xff]
    %v2672 = vld [vmem:[#allocation11 + $0x140] sm:$0xff]
    %v2673 = vld [vmem:[#allocation11 + $0x148] sm:$0xff]
    %v2674 = vld [vmem:[#allocation11 + $0x150] sm:$0xff]
    %v2675 = vld [vmem:[#allocation11 + $0x158] sm:$0xff]
    %v2676 = vld [vmem:[#allocation11 + $0x160] sm:$0xff]
    %v2677 = vld [vmem:[#allocation11 + $0x168] sm:$0xff]
    %v2678 = vld [vmem:[#allocation11 + $0x170] sm:$0xff]
    %v2679 = vld [vmem:[#allocation11 + $0x178] sm:$0xff]
    %v2680 = vld [vmem:[#allocation12] sm:$0x7]
    %v2682 = vlaneseq
    %v2683 = vshrl.u32 %v2682, 7
    %v2684 = vsub.s32 0, %v2683
    %v2685 = vrot.slane %v2680, %v2684
    %v2686 = vlaneseq
    %v2687 = vshrl.u32 %v2686, 7
    %v2688 = vsub.s32 1, %v2687
    %v2689 = vrot.slane %v2680, %v2688
    %v2690 = vlaneseq
    %v2691 = vshrl.u32 %v2690, 7
    %v2692 = vsub.s32 2, %v2691
    %v2693 = vrot.slane %v2680, %v2692
    %2697 = vmatprep.subr.mxu0 %v2678
    %2698 = vmatpush1.msra.mxu0 %v2677
    %2699 = vmatprep.subr.mxu0 %v2675
    %2700 = vmatpush1.msra.mxu0 %v2674
    %2701 = vmatprep.subr.mxu0 %v2672
    %2702 = vmatpush1.msra.mxu0 %v2671
    %2703 = vmatprep.subr.mxu0 %v2669
    %2704 = vmatpush1.msra.mxu0 %v2668
    %2705 = vmatprep.subr.mxu0 %v2666
    %2706 = vmatpush1.msra.mxu0 %v2665
    %2707 = vmatprep.subr.mxu0 %v2663
    %2708 = vmatpush1.msra.mxu0 %v2662
    %2709 = vmatprep.subr.mxu0 %v2660
    %2710 = vmatpush1.msra.mxu0 %v2659
    %2711 = vmatprep.subr.mxu0 %v2657
    %2712 = vmatpush1.msra.mxu0 %v2656
    %2713 = vmatprep.subr.mxu0 %v2654
    %2714 = vmatpush1.msra.mxu0 %v2653
    %2715 = vmatprep.subr.mxu0 %v2651
    %2716 = vmatpush1.msra.mxu0 %v2650
    %2717 = vmatprep.subr.mxu0 %v2648
    %2718 = vmatpush1.msra.mxu0 %v2647
    %2719 = vmatprep.subr.mxu0 %v2645
    %2720 = vmatpush1.msra.mxu0 %v2644
    %2721 = vmatprep.subr.mxu0 %v2642
    %2722 = vmatpush1.msra.mxu0 %v2641
    %2723 = vmatprep.subr.mxu0 %v2639
    %2724 = vmatpush1.msra.mxu0 %v2638
    %2725 = vmatprep.subr.mxu0 %v2636
    %2726 = vmatpush1.msra.mxu0 %v2635
    %2727 = vmatprep.subr.mxu0 %v2633
    %2728 = vmatpush1.msra.mxu0 %v2632
    %2729 = vmatprep.subr.mxu0 0.0
    %2730 = vmatpush2.msra.mxu0 0.0
    %2731 = vmatprep.subr.mxu0 0.0
    %2732 = vmatpush2.msra.mxu0 0.0
    %2733 = vmatprep.subr.mxu0 0.0
    %2734 = vmatpush2.msra.mxu0 0.0
    %2735 = vmatprep.subr.mxu0 0.0
    %2736 = vmatpush2.msra.mxu0 0.0
    %2737 = vmatprep.subr.mxu0 0.0
    %2738 = vmatpush2.msra.mxu0 0.0
    %2739 = vmatprep.subr.mxu0 0.0
    %2740 = vmatpush2.msra.mxu0 0.0
    %2741 = vmatprep.subr.mxu0 0.0
    %2742 = vmatpush2.msra.mxu0 0.0
    %2743 = vmatprep.subr.mxu0 0.0
    %2744 = vmatpush2.msra.mxu0 0.0
    %2745 = vmatprep.subr.mxu0 0.0
    %2746 = vmatpush2.msra.mxu0 0.0
    %2747 = vmatprep.subr.mxu0 0.0
    %2748 = vmatpush2.msra.mxu0 0.0
    %2749 = vmatprep.subr.mxu0 0.0
    %2750 = vmatpush2.msra.mxu0 0.0
    %2751 = vmatprep.subr.mxu0 0.0
    %2752 = vmatpush2.msra.mxu0 0.0
    %2753 = vmatprep.subr.mxu0 0.0
    %2754 = vmatpush2.msra.mxu0 0.0
    %2755 = vmatprep.subr.mxu0 0.0
    %2756 = vmatpush2.msra.mxu0 0.0
    %2757 = vmatprep.subr.mxu0 0.0
    %2758 = vmatpush2.msra.mxu0 0.0
    %2759 = vmatprep.subr.mxu0 0.0
    %2760 = vmatpush2.msra.mxu0 0.0
    %2761 = vmatprep.mubr.f32.mxu0 0.0
    %2762 = vmatmul.mubr.f32.gmra.mxu0 %v2631
    %v2763 = vpop.f32.mrf.mxu0
    %v2764 = vadd.f32 %v2685, %v2763
    %v2765 = vpop.f32.mrf.mxu0
    %v2766 = vadd.f32 %v2689, %v2765
    %2767 = vdwg.mxu0
    %2768 = vmatprep.subr.mxu0 0.0
    %2769 = vmatpush1.msra.mxu0 %v2679
    %2770 = vmatprep.subr.mxu0 0.0
    %2771 = vmatpush1.msra.mxu0 %v2676
    %2772 = vmatprep.subr.mxu0 0.0
    %2773 = vmatpush1.msra.mxu0 %v2673
    %2774 = vmatprep.subr.mxu0 0.0
    %2775 = vmatpush1.msra.mxu0 %v2670
    %2776 = vmatprep.subr.mxu0 0.0
    %2777 = vmatpush1.msra.mxu0 %v2667
    %2778 = vmatprep.subr.mxu0 0.0
    %2779 = vmatpush1.msra.mxu0 %v2664
    %2780 = vmatprep.subr.mxu0 0.0
    %2781 = vmatpush1.msra.mxu0 %v2661
    %2782 = vmatprep.subr.mxu0 0.0
    %2783 = vmatpush1.msra.mxu0 %v2658
    %2784 = vmatprep.subr.mxu0 0.0
    %2785 = vmatpush1.msra.mxu0 %v2655
    %2786 = vmatprep.subr.mxu0 0.0
    %2787 = vmatpush1.msra.mxu0 %v2652
    %2788 = vmatprep.subr.mxu0 0.0
    %2789 = vmatpush1.msra.mxu0 %v2649
    %2790 = vmatprep.subr.mxu0 0.0
    %2791 = vmatpush1.msra.mxu0 %v2646
    %2792 = vmatprep.subr.mxu0 0.0
    %2793 = vmatpush1.msra.mxu0 %v2643
    %2794 = vmatprep.subr.mxu0 0.0
    %2795 = vmatpush1.msra.mxu0 %v2640
    %2796 = vmatprep.subr.mxu0 0.0
    %2797 = vmatpush1.msra.mxu0 %v2637
    %2798 = vmatprep.subr.mxu0 0.0
    %2799 = vmatpush1.msra.mxu0 %v2634
    %2800 = vmatprep.subr.mxu0 0.0
    %2801 = vmatpush2.msra.mxu0 0.0
    %2802 = vmatprep.subr.mxu0 0.0
    %2803 = vmatpush2.msra.mxu0 0.0
    %2804 = vmatprep.subr.mxu0 0.0
    %2805 = vmatpush2.msra.mxu0 0.0
    %2806 = vmatprep.subr.mxu0 0.0
    %2807 = vmatpush2.msra.mxu0 0.0
    %2808 = vmatprep.subr.mxu0 0.0
    %2809 = vmatpush2.msra.mxu0 0.0
    %2810 = vmatprep.subr.mxu0 0.0
    %2811 = vmatpush2.msra.mxu0 0.0
    %2812 = vmatprep.subr.mxu0 0.0
    %2813 = vmatpush2.msra.mxu0 0.0
    %2814 = vmatprep.subr.mxu0 0.0
    %2815 = vmatpush2.msra.mxu0 0.0
    %2816 = vmatprep.subr.mxu0 0.0
    %2817 = vmatpush2.msra.mxu0 0.0
    %2818 = vmatprep.subr.mxu0 0.0
    %2819 = vmatpush2.msra.mxu0 0.0
    %2820 = vmatprep.subr.mxu0 0.0
    %2821 = vmatpush2.msra.mxu0 0.0
    %2822 = vmatprep.subr.mxu0 0.0
    %2823 = vmatpush2.msra.mxu0 0.0
    %2824 = vmatprep.subr.mxu0 0.0
    %2825 = vmatpush2.msra.mxu0 0.0
    %2826 = vmatprep.subr.mxu0 0.0
    %2827 = vmatpush2.msra.mxu0 0.0
    %2828 = vmatprep.subr.mxu0 0.0
    %2829 = vmatpush2.msra.mxu0 0.0
    %2830 = vmatprep.subr.mxu0 0.0
    %2831 = vmatpush2.msra.mxu0 0.0
    %2832 = vmatprep.mubr.f32.mxu0 0.0
    %2833 = vmatmul.mubr.f32.gmra.mxu0 %v2631
    %v2834 = vpop.f32.mrf.mxu0
    %v2835 = vadd.f32 %v2693, %v2834
    %v2836 = vpop.f32.mrf.mxu0
    %2837 = vdwg.mxu0
    %vm2838 = vcmask 1041408
    %v2839 = vsel %vm2838, %v2764, -inf
    %2840 = vmax.xlane.f32.xlu0 %v2839
    %v2841 = vpop.xlane.xlu0 %2840
    %v2842 = vsub.f32 %v2764, %v2841
    %v2843 = vmul.f32 %v2842, 1.442695
    %v2844 = vpow.pop %v2843
    %v2845 = vsel %vm2838, %v2844, 0.0
    %2846 = vadd.xlane.f32.xlu0 %v2845
    %v2847 = vpop.xlane.xlu0 %2846
    %v2848 = vrcp.pop %v2847
    %v2849 = vmul.f32 %v2844, %v2848
    %2850 = vst [vmem:[%s9] sm:$0x3] %v2849
    %2851 = vst [vmem:[%s9 + $0x2] sm:$0x3] %v2766
    %v2852 = vmax.f32 %v2835, 0.0
    %v2853 = vand.u32 2147483647, %v2835
    %v2854 = vsub.f32 0.0, %v2853
    %v2855 = vmul.f32 %v2854, 1.442695
    %v2856 = vpow.pop %v2855
    %v2857 = vadd.f32 %v2856, 1.0
    %v2858 = vlog2.pop %v2857
    %v2859 = vmul.f32 %v2858, 0.6931472
    %v2860 = vmul.f32 -0.5, %v2856
    %v2861 = vadd.f32 %v2860, 1.0
    %v2862 = vmul.f32 %v2861, %v2856
    %v2863 = vand.u32 2147483647, %v2856
    %vm2864 = vcmp.lt.f32.partialorder %v2863, 0.0004427343
    %v2865 = vsel %vm2864, %v2862, %v2859
    %v2866 = vadd.f32 %v2852, %v2865
    %2867 = vst [vmem:[%s9 + $0x4] sm:$0x3] %v2866
    %2868 = vst [vmem:[#allocation14 - $0x1] sm:$0x2] %v1758
    %2869 = vst [vmem:[#allocation15 - $0x1] sm:$0x2] %v1756
    %2870 = vst [vmem:[#allocation14 + $0x1] sm:$0x1] %v2053
    %2871 = vst [vmem:[#allocation15 + $0x1] sm:$0x1] %v2051
    %2872 = vst [vmem:[#allocation14 + $0x2] sm:$0x1] %v2341
    %2873 = vst [vmem:[#allocation15 + $0x2] sm:$0x1] %v2339
    %2874 = vst [vmem:[#allocation14 + $0x3] sm:$0x1] %v2629
    %2875 = vst [vmem:[#allocation15 + $0x3] sm:$0x1] %v2627
    // Predicated region
    $region62: #{lstm_mdn_forward.1} parent=1 // pred_check
      _
    $region63: #{lstm_mdn_forward.1} parent=1 // pred_check_branch
      %2877 = sbr.rel (0) target = $region65
    $region64: #{lstm_mdn_forward.1} parent=1 // pred_region
      _
    $region65: #{lstm_mdn_forward.1} parent=1 // pred_fallthru
      _
    // Predicated region
    $region66: #{lstm_mdn_forward.1} parent=1 // pred_check
      _
    $region67: #{lstm_mdn_forward.1} parent=1 // pred_check_branch
      %2879 = sbr.rel (0) target = $region69
    $region68: #{lstm_mdn_forward.1} parent=1 // pred_region
      %s2881 = ssub.s32 64, 64
      %2882 = vsyncadd [#allocation5], %s2881
      %s2884 = sshll.u32 [#allocation14], 4
      %s2885 = int_to_ptr.vmem [resolvable:$true] %s2884
      %2887 = dma.vmem_to_hbm [thread:$0]  %s2885, 64, %s10, [#allocation5]
    $region69: #{lstm_mdn_forward.1} parent=1 // pred_fallthru
      _
    // Predicated region
    $region70: #{lstm_mdn_forward.1} parent=1 // pred_check
      _
    $region71: #{lstm_mdn_forward.1} parent=1 // pred_check_branch
      %2889 = sbr.rel (0) target = $region73
    $region72: #{lstm_mdn_forward.1} parent=1 // pred_region
      %s2891 = ssub.s32 64, 64
      %2892 = vsyncadd [#allocation16], %s2891
      %s2894 = sshll.u32 [#allocation15], 4
      %s2895 = int_to_ptr.vmem [resolvable:$true] %s2894
      %2897 = dma.vmem_to_hbm [thread:$0]  %s2895, 64, %s11, [#allocation16]
    $region73: #{lstm_mdn_forward.1} parent=1 // pred_fallthru
      _
    // Predicated region
    $region74: #{lstm_mdn_forward.1} parent=1 // pred_check
      _
    $region75: #{lstm_mdn_forward.1} parent=1 // pred_check_branch
      %2899 = sbr.rel (0) target = $region77
    $region76: #{lstm_mdn_forward.1} parent=1 // pred_region
      _
    $region77: #{lstm_mdn_forward.1} parent=1 // pred_fallthru
      _
    // Predicated region
    $region78: #{lstm_mdn_forward.1} parent=1 // pred_check
      _
    $region79: #{lstm_mdn_forward.1} parent=1 // pred_check_branch
      %2901 = sbr.rel (0) target = $region81
    $region80: #{lstm_mdn_forward.1} parent=1 // pred_region
      %2902 = dma.done [#allocation5], 64
    $region81: #{lstm_mdn_forward.1} parent=1 // pred_fallthru
      _
    // Predicated region
    $region82: #{lstm_mdn_forward.1} parent=1 // pred_check
      _
    $region83: #{lstm_mdn_forward.1} parent=1 // pred_check_branch
      %2904 = sbr.rel (0) target = $region85
    $region84: #{lstm_mdn_forward.1} parent=1 // pred_region
      %2905 = dma.done [#allocation16], 64
    $region85: #{lstm_mdn_forward.1} parent=1 // pred_fallthru
      _
    %2906 = vsyncpa [#allocation4], 1
    %2907 = vsyncpa [#allocation7], 1
    %2908 = vsyncpa [#allocation10], 1
    %2909 = vsyncpa [#allocation13], 1
    %2910 = vsyncpa [#allocation5], 1
    %2911 = vsyncpa [#allocation16], 1

</llo_original>
